<compile_context>
chip_gen: v7x
topology: tpu7x:2x2x1
jax: 0.10.0
libtpu: 0.0.40
codegen_flags: <defaults>
</compile_context>

<pallas_src>
import math
import jax
import jax.numpy as jnp
from jax import lax
from jax.experimental import pallas as pl
from jax.experimental.pallas import tpu as pltpu

# ---- small synthetic CLIP-text config ---------------------------------------
B, S, D, H, L, E = 2, 8, 32, 4, 2, 32      # batch, seq, width, heads, layers, proj dim
HD = D // H                                 # head dim
MLP = 4 * D                                 # CLIP MLP hidden
EP = 128                                    # lane-padded projection width
EPS = 1e-5
NEG = -1e30                                 # causal-mask fill (CLIP uses -inf)


def _layer_norm(x, w, b):
    mu = jnp.mean(x, axis=-1, keepdims=True)
    var = jnp.mean((x - mu) ** 2, axis=-1, keepdims=True)
    return (x - mu) * lax.rsqrt(var + EPS) * w + b


def text_encoder_kernel(eot_ref,                    # scalar prefetch (SMEM): (B,) int32
                        prompts_ref, pos_ref, mask_ref,
                        ln1w_ref, ln1b_ref, inw_ref, inb_ref,
                        outw_ref, outb_ref,
                        ln2w_ref, ln2b_ref, fc1w_ref, fc1b_ref,
                        fc2w_ref, fc2b_ref,
                        lnfw_ref, lnfb_ref, proj_ref,
                        out_ref,
                        x_ref):                     # VMEM scratch: (S, D) f32
    f32 = jnp.float32
    bf16 = jnp.bfloat16
    b = pl.program_id(0)
    l = pl.program_id(1)

    # ---- initialize running activation at the first layer -------------------
    @pl.when(l == 0)
    def _():
        x_ref[...] = prompts_ref[0] + pos_ref[...]                    # (S, D) f32

    x = x_ref[...]                                                    # (S, D) f32

    # ---- multi-head self-attention (pre-LN residual block) ------------------
    y = _layer_norm(x, ln1w_ref[0, 0], ln1b_ref[0, 0])
    yb = y.astype(bf16)
    # Weights arrive already bf16; q scale (1/sqrt(HD)) is folded into inw/inb[:,0].
    q = jnp.dot(yb, inw_ref[0, 0], preferred_element_type=f32) + inb_ref[0, 0]
    k = jnp.dot(yb, inw_ref[0, 1], preferred_element_type=f32) + inb_ref[0, 1]
    v = jnp.dot(yb, inw_ref[0, 2], preferred_element_type=f32) + inb_ref[0, 2]

    qh = q.reshape(S, H, HD).astype(bf16)
    kh = k.reshape(S, H, HD).astype(bf16)
    vh = v.reshape(S, H, HD).astype(bf16)

    # Heads as a batch dimension; no explicit (1,0,2) transposes.
    s = jnp.einsum('qhd,khd->hqk', qh, kh,
                   preferred_element_type=f32) + mask_ref[...][None]  # (H, S, S)
    s = s - jnp.max(s, axis=-1, keepdims=True)
    p = jnp.exp(s)
    p = p / jnp.sum(p, axis=-1, keepdims=True)       # exact softmax (CLIP fidelity)

    ctx = jnp.einsum('hqk,khd->qhd', p.astype(bf16), vh,
                     preferred_element_type=f32)                      # (S, H, HD)
    attn = jnp.dot(ctx.reshape(S, D).astype(bf16), outw_ref[0],
                   preferred_element_type=f32) + outb_ref[0, 0]
    x = x + attn

    # ---- MLP block (QuickGELU) ----------------------------------------------
    y = _layer_norm(x, ln2w_ref[0, 0], ln2b_ref[0, 0])
    h1 = jnp.dot(y.astype(bf16), fc1w_ref[0],
                 preferred_element_type=f32) + fc1b_ref[0, 0]         # (S, MLP)
    # f32 gate (v5e has no bf16 EUP); see TODO(synk) above for v6e/v7x bf16 path.
    h1 = h1 * jax.nn.sigmoid(1.702 * h1)
    h2 = jnp.dot(h1.astype(bf16), fc2w_ref[0],
                 preferred_element_type=f32) + fc2b_ref[0, 0]
    x = x + h2

    x_ref[...] = x

    # ---- ln_final, EOT-token gather, text projection at the last layer ------
    @pl.when(l == pl.num_programs(1) - 1)
    def _():
        xf = _layer_norm(x, lnfw_ref[...], lnfb_ref[...])             # (S, D) f32
        col = lax.broadcasted_iota(jnp.int32, (1, S), 1)
        onehot = (col == eot_ref[b]).astype(f32)                      # (1, S)
        sel = jnp.dot(onehot, xf, preferred_element_type=f32)         # (1, D)
        res = jnp.dot(sel.astype(bf16), proj_ref[...],
                      preferred_element_type=f32)                     # (1, EP)
        out_ref[...] = jnp.broadcast_to(res[:, None, :], (1, 8, EP))  # lane-dense


def text_encoder(prompts, tokenized_prompts, params):
    (pos, ln1w, ln1b, inw, inb, outw, outb, ln2w, ln2b,
     fc1w, fc1b, fc2w, fc2b, lnfw, lnfb, proj) = params

    f32, bf16 = jnp.float32, jnp.bfloat16

    # EOT index computed in XLA; fed to the kernel through SMEM scalar prefetch.
    eot = jnp.argmax(tokenized_prompts, axis=-1).astype(jnp.int32)    # (B,)

    # Fold 1/sqrt(HD) into the q in-proj weights/bias (removes a per-layer VPU mul).
    scale = 1.0 / math.sqrt(HD)
    inw_s = inw.at[:, 0].multiply(scale)
    inb_s = inb.at[:, 0].multiply(scale)

    # Matmul weights to bf16 (half the weight DMA / VMEM); LN params, biases f32.
    inw_b = inw_s.astype(bf16)
    outw_b = outw.astype(bf16)
    fc1w_b = fc1w.astype(bf16)
    fc2w_b = fc2w.astype(bf16)
    proj_b = jnp.pad(proj, ((0, 0), (0, EP - E))).astype(bf16)        # (D, EP) lane-dense

    # Per-layer-streamable layouts: (L, 1, D) / (L, 1, MLP) so block last-2 dims
    # equal the full array dims.
    ln1w_r, ln1b_r = ln1w[:, None, :], ln1b[:, None, :]
    ln2w_r, ln2b_r = ln2w[:, None, :], ln2b[:, None, :]
    outb_r = outb[:, None, :]
    fc1b_r = fc1b[:, None, :]
    fc2b_r = fc2b[:, None, :]

    # Causal mask built once, outside the kernel.
    causal = jnp.where(jnp.arange(S)[None, :] <= jnp.arange(S)[:, None],
                       0.0, NEG).astype(f32)                          # (S, S)

    per_layer = lambda b, l, eot: (l, 0, 0)
    const2 = lambda b, l, eot: (0, 0)

    grid_spec = pltpu.PrefetchScalarGridSpec(
        num_scalar_prefetch=1,
        grid=(B, L),                         # batch parallel, layers streamed
        in_specs=[
            pl.BlockSpec((1, S, D), lambda b, l, eot: (b, 0, 0)),      # prompts
            pl.BlockSpec((S, D), const2),                              # pos
            pl.BlockSpec((S, S), const2),                              # causal mask
            pl.BlockSpec((1, 1, D), per_layer),                        # ln1w
            pl.BlockSpec((1, 1, D), per_layer),                        # ln1b
            pl.BlockSpec((1, 3, D, D), lambda b, l, eot: (l, 0, 0, 0)),  # inw (bf16)
            pl.BlockSpec((1, 3, D), per_layer),                        # inb
            pl.BlockSpec((1, D, D), per_layer),                        # outw (bf16)
            pl.BlockSpec((1, 1, D), per_layer),                        # outb
            pl.BlockSpec((1, 1, D), per_layer),                        # ln2w
            pl.BlockSpec((1, 1, D), per_layer),                        # ln2b
            pl.BlockSpec((1, D, MLP), per_layer),                      # fc1w (bf16)
            pl.BlockSpec((1, 1, MLP), per_layer),                      # fc1b
            pl.BlockSpec((1, MLP, D), per_layer),                      # fc2w (bf16)
            pl.BlockSpec((1, 1, D), per_layer),                        # fc2b
            pl.BlockSpec((1, D), const2),                              # lnfw
            pl.BlockSpec((1, D), const2),                              # lnfb
            pl.BlockSpec((D, EP), const2),                             # proj (bf16)
        ],
        out_specs=pl.BlockSpec((1, 8, EP), lambda b, l, eot: (b, 0, 0)),
        scratch_shapes=[pltpu.VMEM((S, D), jnp.float32)],              # running x
    )

    out = pl.pallas_call(
        text_encoder_kernel,
        out_shape=jax.ShapeDtypeStruct((B, 8, EP), jnp.float32),
        grid_spec=grid_spec,
        compiler_params=pltpu.CompilerParams(
            dimension_semantics=("parallel", "arbitrary"),
            vmem_limit_bytes=32 * 1024 * 1024),
    )(eot, prompts, pos, causal,
      ln1w_r, ln1b_r, inw_b, inb_s, outw_b, outb_r,
      ln2w_r, ln2b_r, fc1w_b, fc1b_r, fc2w_b, fc2b_r,
      lnfw, lnfb, proj_b)
    return out[:, 0, :E]


# ---- deterministic synthetic parameters (weights pre-transposed: x @ W) -----
def init_params(key):
    ks = jax.random.split(key, 10)
    s = 0.02
    pos = jax.random.normal(ks[0], (S, D), jnp.float32) * s
    ln1w = jnp.ones((L, D), jnp.float32)
    ln1b = jnp.zeros((L, D), jnp.float32)
    inw = jax.random.normal(ks[1], (L, 3, D, D), jnp.float32) * s     # (q,k,v) contiguous
    inb = jax.random.normal(ks[2], (L, 3, D), jnp.float32) * s
    outw = jax.random.normal(ks[3], (L, D, D), jnp.float32) * s
    outb = jax.random.normal(ks[4], (L, D), jnp.float32) * s
    ln2w = jnp.ones((L, D), jnp.float32)
    ln2b = jnp.zeros((L, D), jnp.float32)
    fc1w = jax.random.normal(ks[5], (L, D, MLP), jnp.float32) * s
    fc1b = jax.random.normal(ks[6], (L, MLP), jnp.float32) * s
    fc2w = jax.random.normal(ks[7], (L, MLP, D), jnp.float32) * s
    fc2b = jax.random.normal(ks[8], (L, D), jnp.float32) * s
    lnfw = jnp.ones((1, D), jnp.float32)
    lnfb = jnp.zeros((1, D), jnp.float32)
    proj = jax.random.normal(ks[9], (D, E), jnp.float32) * s
    return (pos, ln1w, ln1b, inw, inb, outw, outb, ln2w, ln2b,
            fc1w, fc1b, fc2w, fc2b, lnfw, lnfb, proj)


# ---- pure-JAX f32 reference (same math) for a correctness check -------------
def reference(prompts, tokenized, params):
    (pos, ln1w, ln1b, inw, inb, outw, outb, ln2w, ln2b,
     fc1w, fc1b, fc2w, fc2b, lnfw, lnfb, proj) = params

    def ln(x, w, b):
        mu = x.mean(-1, keepdims=True)
        var = ((x - mu) ** 2).mean(-1, keepdims=True)
        return (x - mu) / jnp.sqrt(var + EPS) * w + b

    x = prompts + pos
    mask = jnp.where(jnp.arange(S)[None, :] <= jnp.arange(S)[:, None], 0.0, NEG)
    scale = 1.0 / math.sqrt(HD)
    for l in range(L):
        y = ln(x, ln1w[l], ln1b[l])
        q = y @ inw[l, 0] + inb[l, 0]
        k = y @ inw[l, 1] + inb[l, 1]
        v = y @ inw[l, 2] + inb[l, 2]
        q = q.reshape(B, S, H, HD).transpose(0, 2, 1, 3) * scale
        k = k.reshape(B, S, H, HD).transpose(0, 2, 1, 3)
        v = v.reshape(B, S, H, HD).transpose(0, 2, 1, 3)
        sc = jnp.einsum('bhqd,bhkd->bhqk', q, k) + mask
        p = jax.nn.softmax(sc, axis=-1)
        a = jnp.einsum('bhqk,bhkd->bhqd', p, v).transpose(0, 2, 1, 3).reshape(B, S, D)
        x = x + a @ outw[l] + outb[l]
        y = ln(x, ln2w[l], ln2b[l])
        h1 = y @ fc1w[l] + fc1b[l]
        h1 = h1 * jax.nn.sigmoid(1.702 * h1)
        x = x + h1 @ fc2w[l] + fc2b[l]
    xf = ln(x, lnfw[0], lnfb[0])
    idx = jnp.argmax(tokenized, axis=-1)
    return xf[jnp.arange(B), idx] @ proj


if __name__ == "__main__":
    key = jax.random.PRNGKey(0)
    kp, kt, kw = jax.random.split(key, 3)
    params = init_params(kw)

    prompts = jax.random.normal(kp, (B, S, D), jnp.float32)          # learned prompt embeddings
    tokenized = jax.random.randint(kt, (B, S), 1, 100, jnp.int32)    # token ids
    eot_pos = jnp.array([5, 3], dtype=jnp.int32)                     # EOT token = max id
    tokenized = tokenized.at[jnp.arange(B), eot_pos].set(999)

    out = text_encoder(prompts, tokenized, params)
    out = jax.block_until_ready(out)

    ref = reference(prompts, tokenized, params)
    assert out.shape == (B, E)
    # bf16 MXU matmuls (f32 accumulation) vs f32 reference -> slightly looser tolerance.
    assert jnp.allclose(out, ref, atol=2e-2, rtol=2e-2), \
        f"max_abs_err={float(jnp.max(jnp.abs(out - ref)))}"
    print("KERNEL_OK")
</pallas_src>

<mosaic_0001>
module attributes {stable_mosaic.version = 11 : i64} {
  func.func @text_encoder_kernel(%arg0: i32, %arg1: i32, %arg2: memref<2xi32, #tpu.memory_space<smem>>, %arg3: memref<1x8x32xf32, #tpu.memory_space<vmem>>, %arg4: memref<8x32xf32, #tpu.memory_space<vmem>>, %arg5: memref<8x8xf32, #tpu.memory_space<vmem>>, %arg6: memref<1x1x32xf32, #tpu.memory_space<vmem>>, %arg7: memref<1x1x32xf32, #tpu.memory_space<vmem>>, %arg8: memref<1x3x32x32xbf16, #tpu.memory_space<vmem>>, %arg9: memref<1x3x32xf32, #tpu.memory_space<vmem>>, %arg10: memref<1x32x32xbf16, #tpu.memory_space<vmem>>, %arg11: memref<1x1x32xf32, #tpu.memory_space<vmem>>, %arg12: memref<1x1x32xf32, #tpu.memory_space<vmem>>, %arg13: memref<1x1x32xf32, #tpu.memory_space<vmem>>, %arg14: memref<1x32x128xbf16, #tpu.memory_space<vmem>>, %arg15: memref<1x1x128xf32, #tpu.memory_space<vmem>>, %arg16: memref<1x128x32xbf16, #tpu.memory_space<vmem>>, %arg17: memref<1x1x32xf32, #tpu.memory_space<vmem>>, %arg18: memref<1x32xf32, #tpu.memory_space<vmem>>, %arg19: memref<1x32xf32, #tpu.memory_space<vmem>>, %arg20: memref<32x128xbf16, #tpu.memory_space<vmem>>, %arg21: memref<1x8x128xf32, #tpu.memory_space<vmem>>, %arg22: memref<8x32xf32, #tpu.memory_space<vmem>>) attributes {dimension_semantics = [#tpu.dimension_semantics<parallel>, #tpu.dimension_semantics<arbitrary>], iteration_bounds = array<i64: 2, 2>, scalar_prefetch = 1 : i64, scratch_operands = 1 : i64, tpu.core_type = #tpu.core_type<tc>, window_params = [{transform_indices = @transform_0, window_bounds = array<i64: 1, 8, 32>}, {pipeline_mode = #tpu.pipeline_mode<synchronous>, transform_indices = @transform_1, window_bounds = array<i64: 8, 32>}, {pipeline_mode = #tpu.pipeline_mode<synchronous>, transform_indices = @transform_2, window_bounds = array<i64: 8, 8>}, {transform_indices = @transform_3, window_bounds = array<i64: 1, 1, 32>}, {transform_indices = @transform_4, window_bounds = array<i64: 1, 1, 32>}, {transform_indices = @transform_5, window_bounds = array<i64: 1, 3, 32, 32>}, {transform_indices = @transform_6, window_bounds = array<i64: 1, 3, 32>}, {transform_indices = @transform_7, window_bounds = array<i64: 1, 32, 32>}, {transform_indices = @transform_8, window_bounds = array<i64: 1, 1, 32>}, {transform_indices = @transform_9, window_bounds = array<i64: 1, 1, 32>}, {transform_indices = @transform_10, window_bounds = array<i64: 1, 1, 32>}, {transform_indices = @transform_11, window_bounds = array<i64: 1, 32, 128>}, {transform_indices = @transform_12, window_bounds = array<i64: 1, 1, 128>}, {transform_indices = @transform_13, window_bounds = array<i64: 1, 128, 32>}, {transform_indices = @transform_14, window_bounds = array<i64: 1, 1, 32>}, {pipeline_mode = #tpu.pipeline_mode<synchronous>, transform_indices = @transform_15, window_bounds = array<i64: 1, 32>}, {pipeline_mode = #tpu.pipeline_mode<synchronous>, transform_indices = @transform_16, window_bounds = array<i64: 1, 32>}, {pipeline_mode = #tpu.pipeline_mode<synchronous>, transform_indices = @transform_17, window_bounds = array<i64: 32, 128>}, {transform_indices = @transform_18, window_bounds = array<i64: 1, 8, 128>}]} {
    %c0_i32 = arith.constant 0 : i32
    %0 = arith.cmpi eq, %arg1, %c0_i32 : i32
    %1 = arith.extui %0 : i1 to i32
    %c0_i32_0 = arith.constant 0 : i32
    %2 = arith.cmpi ne, %1, %c0_i32_0 : i32
    scf.if %2 {
      %c0_77 = arith.constant 0 : index
      %c0_78 = arith.constant 0 : index
      %c0_79 = arith.constant 0 : index
      %150 = vector.load %arg3[%c0_77, %c0_78, %c0_79] : memref<1x8x32xf32, #tpu.memory_space<vmem>>, vector<1x8x32xf32>
      %151 = vector.shape_cast %150 : vector<1x8x32xf32> to vector<8x32xf32>
      %c0_80 = arith.constant 0 : index
      %c0_81 = arith.constant 0 : index
      %152 = vector.load %arg4[%c0_80, %c0_81] : memref<8x32xf32, #tpu.memory_space<vmem>>, vector<8x32xf32>
      %153 = arith.addf %151, %152 : vector<8x32xf32>
      %c0_82 = arith.constant 0 : index
      %c0_83 = arith.constant 0 : index
      %154 = vector.load %arg22[%c0_82, %c0_83] : memref<8x32xf32, #tpu.memory_space<vmem>>, vector<8x32xf32>
      tpu.vector_store %arg22[%c0_82, %c0_83], %153 {strides = array<i32>} : memref<8x32xf32, #tpu.memory_space<vmem>>, vector<8x32xf32>,
    } else {
    }
    %c0 = arith.constant 0 : index
    %c0_1 = arith.constant 0 : index
    %3 = vector.load %arg22[%c0, %c0_1] : memref<8x32xf32, #tpu.memory_space<vmem>>, vector<8x32xf32>
    %c0_2 = arith.constant 0 : index
    %c0_3 = arith.constant 0 : index
    %c0_4 = arith.constant 0 : index
    %4 = vector.load %arg6[%c0_2, %c0_3, %c0_4] : memref<1x1x32xf32, #tpu.memory_space<vmem>>, vector<1x1x32xf32>
    %5 = vector.shape_cast %4 : vector<1x1x32xf32> to vector<32xf32>
    %c0_5 = arith.constant 0 : index
    %c0_6 = arith.constant 0 : index
    %c0_7 = arith.constant 0 : index
    %6 = vector.load %arg7[%c0_5, %c0_6, %c0_7] : memref<1x1x32xf32, #tpu.memory_space<vmem>>, vector<1x1x32xf32>
    %7 = vector.shape_cast %6 : vector<1x1x32xf32> to vector<32xf32>
    %cst = arith.constant dense<0.000000e+00> : vector<8xf32>
    %8 = vector.multi_reduction <add>, %3, %cst [1] : vector<8x32xf32> to vector<8xf32>
    %9 = vector.shape_cast %8 : vector<8xf32> to vector<8x1xf32>
    %cst_8 = arith.constant 3.200000e+01 : f32
    %10 = vector.broadcast %cst_8 : f32 to vector<8x1xf32>
    %11 = arith.divf %9, %10 : vector<8x1xf32>
    %12 = vector.broadcast %11 : vector<8x1xf32> to vector<8x32xf32>
    %13 = arith.subf %3, %12 : vector<8x32xf32>
    %14 = arith.mulf %13, %13 : vector<8x32xf32>
    %cst_9 = arith.constant dense<0.000000e+00> : vector<8xf32>
    %15 = vector.multi_reduction <add>, %14, %cst_9 [1] : vector<8x32xf32> to vector<8xf32>
    %16 = vector.shape_cast %15 : vector<8xf32> to vector<8x1xf32>
    %cst_10 = arith.constant 3.200000e+01 : f32
    %17 = vector.broadcast %cst_10 : f32 to vector<8x1xf32>
    %18 = arith.divf %16, %17 : vector<8x1xf32>
    %19 = vector.broadcast %11 : vector<8x1xf32> to vector<8x32xf32>
    %20 = arith.subf %3, %19 : vector<8x32xf32>
    %cst_11 = arith.constant 9.99999974E-6 : f32
    %21 = vector.broadcast %cst_11 : f32 to vector<8x1xf32>
    %22 = arith.addf %18, %21 : vector<8x1xf32>
    %23 = math.rsqrt %22 : vector<8x1xf32>
    %24 = vector.broadcast %23 : vector<8x1xf32> to vector<8x32xf32>
    %25 = arith.mulf %20, %24 : vector<8x32xf32>
    %26 = vector.shape_cast %5 : vector<32xf32> to vector<1x32xf32>
    %27 = vector.broadcast %26 : vector<1x32xf32> to vector<8x32xf32>
    %28 = arith.mulf %25, %27 : vector<8x32xf32>
    %29 = vector.shape_cast %7 : vector<32xf32> to vector<1x32xf32>
    %30 = vector.broadcast %29 : vector<1x32xf32> to vector<8x32xf32>
    %31 = arith.addf %28, %30 : vector<8x32xf32>
    %32 = arith.truncf %31 : vector<8x32xf32> to vector<8x32xbf16>
    %c0_12 = arith.constant 0 : index
    %c0_13 = arith.constant 0 : index
    %c0_14 = arith.constant 0 : index
    %c0_15 = arith.constant 0 : index
    %33 = vector.load %arg8[%c0_12, %c0_13, %c0_14, %c0_15] : memref<1x3x32x32xbf16, #tpu.memory_space<vmem>>, vector<1x1x32x32xbf16>
    %34 = vector.shape_cast %33 : vector<1x1x32x32xbf16> to vector<32x32xbf16>
    %cst_16 = arith.constant dense<0.000000e+00> : vector<8x32xf32>
    %35 = tpu.matmul %32, %34, %cst_16 {dimension_numbers = #tpu.dot_dimension_numbers<[1], [0], [0], [1], [0, 0, 1, 1], [], []>} : vector<8x32xbf16>, vector<32x32xbf16>, vector<8x32xf32> -> vector<8x32xf32>
    %c0_17 = arith.constant 0 : index
    %c0_18 = arith.constant 0 : index
    %c0_19 = arith.constant 0 : index
    %36 = vector.load %arg9[%c0_17, %c0_18, %c0_19] : memref<1x3x32xf32, #tpu.memory_space<vmem>>, vector<1x1x32xf32>
    %37 = vector.shape_cast %36 : vector<1x1x32xf32> to vector<32xf32>
    %38 = vector.shape_cast %37 : vector<32xf32> to vector<1x32xf32>
    %39 = vector.broadcast %38 : vector<1x32xf32> to vector<8x32xf32>
    %40 = arith.addf %35, %39 : vector<8x32xf32>
    %c0_20 = arith.constant 0 : index
    %c1 = arith.constant 1 : index
    %c0_21 = arith.constant 0 : index
    %c0_22 = arith.constant 0 : index
    %41 = vector.load %arg8[%c0_20, %c1, %c0_21, %c0_22] : memref<1x3x32x32xbf16, #tpu.memory_space<vmem>>, vector<1x1x32x32xbf16>
    %42 = vector.shape_cast %41 : vector<1x1x32x32xbf16> to vector<32x32xbf16>
    %cst_23 = arith.constant dense<0.000000e+00> : vector<8x32xf32>
    %43 = tpu.matmul %32, %42, %cst_23 {dimension_numbers = #tpu.dot_dimension_numbers<[1], [0], [0], [1], [0, 0, 1, 1], [], []>} : vector<8x32xbf16>, vector<32x32xbf16>, vector<8x32xf32> -> vector<8x32xf32>
    %c0_24 = arith.constant 0 : index
    %c1_25 = arith.constant 1 : index
    %c0_26 = arith.constant 0 : index
    %44 = vector.load %arg9[%c0_24, %c1_25, %c0_26] : memref<1x3x32xf32, #tpu.memory_space<vmem>>, vector<1x1x32xf32>
    %45 = vector.shape_cast %44 : vector<1x1x32xf32> to vector<32xf32>
    %46 = vector.shape_cast %45 : vector<32xf32> to vector<1x32xf32>
    %47 = vector.broadcast %46 : vector<1x32xf32> to vector<8x32xf32>
    %48 = arith.addf %43, %47 : vector<8x32xf32>
    %c0_27 = arith.constant 0 : index
    %c2 = arith.constant 2 : index
    %c0_28 = arith.constant 0 : index
    %c0_29 = arith.constant 0 : index
    %49 = vector.load %arg8[%c0_27, %c2, %c0_28, %c0_29] : memref<1x3x32x32xbf16, #tpu.memory_space<vmem>>, vector<1x1x32x32xbf16>
    %50 = vector.shape_cast %49 : vector<1x1x32x32xbf16> to vector<32x32xbf16>
    %cst_30 = arith.constant dense<0.000000e+00> : vector<8x32xf32>
    %51 = tpu.matmul %32, %50, %cst_30 {dimension_numbers = #tpu.dot_dimension_numbers<[1], [0], [0], [1], [0, 0, 1, 1], [], []>} : vector<8x32xbf16>, vector<32x32xbf16>, vector<8x32xf32> -> vector<8x32xf32>
    %c0_31 = arith.constant 0 : index
    %c2_32 = arith.constant 2 : index
    %c0_33 = arith.constant 0 : index
    %52 = vector.load %arg9[%c0_31, %c2_32, %c0_33] : memref<1x3x32xf32, #tpu.memory_space<vmem>>, vector<1x1x32xf32>
    %53 = vector.shape_cast %52 : vector<1x1x32xf32> to vector<32xf32>
    %54 = vector.shape_cast %53 : vector<32xf32> to vector<1x32xf32>
    %55 = vector.broadcast %54 : vector<1x32xf32> to vector<8x32xf32>
    %56 = arith.addf %51, %55 : vector<8x32xf32>
    %57 = vector.shape_cast %40 : vector<8x32xf32> to vector<8x4x8xf32>
    %58 = arith.truncf %57 : vector<8x4x8xf32> to vector<8x4x8xbf16>
    %59 = vector.shape_cast %48 : vector<8x32xf32> to vector<8x4x8xf32>
    %60 = arith.truncf %59 : vector<8x4x8xf32> to vector<8x4x8xbf16>
    %61 = vector.shape_cast %56 : vector<8x32xf32> to vector<8x4x8xf32>
    %62 = arith.truncf %61 : vector<8x4x8xf32> to vector<8x4x8xbf16>
    "tpu.trace_start"() <{level = 10 : i32, message = "qhd,khd->hqk"}> : () -> ()
    %cst_34 = arith.constant dense<0.000000e+00> : vector<4x8x8xf32>
    %63 = tpu.matmul %58, %60, %cst_34 {dimension_numbers = #tpu.dot_dimension_numbers<[2], [2], [0], [0], [0, 1, 0, 0, 1, 0], [1], [1]>} : vector<8x4x8xbf16>, vector<8x4x8xbf16>, vector<4x8x8xf32> -> vector<4x8x8xf32>
    "tpu.trace_stop"() : () -> ()
    %c0_35 = arith.constant 0 : index
    %c0_36 = arith.constant 0 : index
    %64 = vector.load %arg5[%c0_35, %c0_36] : memref<8x8xf32, #tpu.memory_space<vmem>>, vector<8x8xf32>
    %65 = vector.shape_cast %64 : vector<8x8xf32> to vector<1x8x8xf32>
    %66 = vector.broadcast %65 : vector<1x8x8xf32> to vector<4x8x8xf32>
    %67 = arith.addf %63, %66 : vector<4x8x8xf32>
    %cst_37 = arith.constant dense<0xFF800000> : vector<4x8xf32>
    %68 = vector.multi_reduction <maximumf>, %67, %cst_37 [2] : vector<4x8x8xf32> to vector<4x8xf32>
    %69 = vector.shape_cast %68 : vector<4x8xf32> to vector<4x8x1xf32>
    %70 = vector.broadcast %69 : vector<4x8x1xf32> to vector<4x8x8xf32>
    %71 = arith.subf %67, %70 : vector<4x8x8xf32>
    %72 = math.exp %71 : vector<4x8x8xf32>
    %cst_38 = arith.constant dense<0.000000e+00> : vector<4x8xf32>
    %73 = vector.multi_reduction <add>, %72, %cst_38 [2] : vector<4x8x8xf32> to vector<4x8xf32>
    %74 = vector.shape_cast %73 : vector<4x8xf32> to vector<4x8x1xf32>
    %75 = vector.broadcast %74 : vector<4x8x1xf32> to vector<4x8x8xf32>
    %76 = arith.divf %72, %75 : vector<4x8x8xf32>
    %77 = arith.truncf %76 : vector<4x8x8xf32> to vector<4x8x8xbf16>
    "tpu.trace_start"() <{level = 10 : i32, message = "hqk,khd->qhd"}> : () -> ()
    %cst_39 = arith.constant dense<0.000000e+00> : vector<4x8x8xf32>
    %78 = tpu.matmul %62, %77, %cst_39 {dimension_numbers = #tpu.dot_dimension_numbers<[0], [2], [2], [1], [0, 1, 0, 2, 1, 1], [1], [0]>} : vector<8x4x8xbf16>, vector<4x8x8xbf16>, vector<4x8x8xf32> -> vector<4x8x8xf32>
    %79 = tpu.transpose %78, [2, 0, 1] : vector<4x8x8xf32> -> vector<8x4x8xf32>
    "tpu.trace_stop"() : () -> ()
    %80 = vector.shape_cast %79 : vector<8x4x8xf32> to vector<8x32xf32>
    %81 = arith.truncf %80 : vector<8x32xf32> to vector<8x32xbf16>
    %c0_40 = arith.constant 0 : index
    %c0_41 = arith.constant 0 : index
    %c0_42 = arith.constant 0 : index
    %82 = vector.load %arg10[%c0_40, %c0_41, %c0_42] : memref<1x32x32xbf16, #tpu.memory_space<vmem>>, vector<1x32x32xbf16>
    %83 = vector.shape_cast %82 : vector<1x32x32xbf16> to vector<32x32xbf16>
    %cst_43 = arith.constant dense<0.000000e+00> : vector<8x32xf32>
    %84 = tpu.matmul %81, %83, %cst_43 {dimension_numbers = #tpu.dot_dimension_numbers<[1], [0], [0], [1], [0, 0, 1, 1], [], []>} : vector<8x32xbf16>, vector<32x32xbf16>, vector<8x32xf32> -> vector<8x32xf32>
    %c0_44 = arith.constant 0 : index
    %c0_45 = arith.constant 0 : index
    %c0_46 = arith.constant 0 : index
    %85 = vector.load %arg11[%c0_44, %c0_45, %c0_46] : memref<1x1x32xf32, #tpu.memory_space<vmem>>, vector<1x1x32xf32>
    %86 = vector.shape_cast %85 : vector<1x1x32xf32> to vector<32xf32>
    %87 = vector.shape_cast %86 : vector<32xf32> to vector<1x32xf32>
    %88 = vector.broadcast %87 : vector<1x32xf32> to vector<8x32xf32>
    %89 = arith.addf %84, %88 : vector<8x32xf32>
    %90 = arith.addf %3, %89 : vector<8x32xf32>
    %c0_47 = arith.constant 0 : index
    %c0_48 = arith.constant 0 : index
    %c0_49 = arith.constant 0 : index
    %91 = vector.load %arg12[%c0_47, %c0_48, %c0_49] : memref<1x1x32xf32, #tpu.memory_space<vmem>>, vector<1x1x32xf32>
    %92 = vector.shape_cast %91 : vector<1x1x32xf32> to vector<32xf32>
    %c0_50 = arith.constant 0 : index
    %c0_51 = arith.constant 0 : index
    %c0_52 = arith.constant 0 : index
    %93 = vector.load %arg13[%c0_50, %c0_51, %c0_52] : memref<1x1x32xf32, #tpu.memory_space<vmem>>, vector<1x1x32xf32>
    %94 = vector.shape_cast %93 : vector<1x1x32xf32> to vector<32xf32>
    %cst_53 = arith.constant dense<0.000000e+00> : vector<8xf32>
    %95 = vector.multi_reduction <add>, %90, %cst_53 [1] : vector<8x32xf32> to vector<8xf32>
    %96 = vector.shape_cast %95 : vector<8xf32> to vector<8x1xf32>
    %cst_54 = arith.constant 3.200000e+01 : f32
    %97 = vector.broadcast %cst_54 : f32 to vector<8x1xf32>
    %98 = arith.divf %96, %97 : vector<8x1xf32>
    %99 = vector.broadcast %98 : vector<8x1xf32> to vector<8x32xf32>
    %100 = arith.subf %90, %99 : vector<8x32xf32>
    %101 = arith.mulf %100, %100 : vector<8x32xf32>
    %cst_55 = arith.constant dense<0.000000e+00> : vector<8xf32>
    %102 = vector.multi_reduction <add>, %101, %cst_55 [1] : vector<8x32xf32> to vector<8xf32>
    %103 = vector.shape_cast %102 : vector<8xf32> to vector<8x1xf32>
    %cst_56 = arith.constant 3.200000e+01 : f32
    %104 = vector.broadcast %cst_56 : f32 to vector<8x1xf32>
    %105 = arith.divf %103, %104 : vector<8x1xf32>
    %106 = vector.broadcast %98 : vector<8x1xf32> to vector<8x32xf32>
    %107 = arith.subf %90, %106 : vector<8x32xf32>
    %cst_57 = arith.constant 9.99999974E-6 : f32
    %108 = vector.broadcast %cst_57 : f32 to vector<8x1xf32>
    %109 = arith.addf %105, %108 : vector<8x1xf32>
    %110 = math.rsqrt %109 : vector<8x1xf32>
    %111 = vector.broadcast %110 : vector<8x1xf32> to vector<8x32xf32>
    %112 = arith.mulf %107, %111 : vector<8x32xf32>
    %113 = vector.shape_cast %92 : vector<32xf32> to vector<1x32xf32>
    %114 = vector.broadcast %113 : vector<1x32xf32> to vector<8x32xf32>
    %115 = arith.mulf %112, %114 : vector<8x32xf32>
    %116 = vector.shape_cast %94 : vector<32xf32> to vector<1x32xf32>
    %117 = vector.broadcast %116 : vector<1x32xf32> to vector<8x32xf32>
    %118 = arith.addf %115, %117 : vector<8x32xf32>
    %119 = arith.truncf %118 : vector<8x32xf32> to vector<8x32xbf16>
    %c0_58 = arith.constant 0 : index
    %c0_59 = arith.constant 0 : index
    %c0_60 = arith.constant 0 : index
    %120 = vector.load %arg14[%c0_58, %c0_59, %c0_60] : memref<1x32x128xbf16, #tpu.memory_space<vmem>>, vector<1x32x128xbf16>
    %121 = vector.shape_cast %120 : vector<1x32x128xbf16> to vector<32x128xbf16>
    %cst_61 = arith.constant dense<0.000000e+00> : vector<8x128xf32>
    %122 = tpu.matmul %119, %121, %cst_61 {dimension_numbers = #tpu.dot_dimension_numbers<[1], [0], [0], [1], [0, 0, 1, 1], [], []>} : vector<8x32xbf16>, vector<32x128xbf16>, vector<8x128xf32> -> vector<8x128xf32>
    %c0_62 = arith.constant 0 : index
    %c0_63 = arith.constant 0 : index
    %c0_64 = arith.constant 0 : index
    %123 = vector.load %arg15[%c0_62, %c0_63, %c0_64] : memref<1x1x128xf32, #tpu.memory_space<vmem>>, vector<1x1x128xf32>
    %124 = vector.shape_cast %123 : vector<1x1x128xf32> to vector<128xf32>
    %125 = vector.shape_cast %124 : vector<128xf32> to vector<1x128xf32>
    %126 = vector.broadcast %125 : vector<1x128xf32> to vector<8x128xf32>
    %127 = arith.addf %122, %126 : vector<8x128xf32>
    %cst_65 = arith.constant 1.702000e+00 : f32
    %128 = vector.broadcast %cst_65 : f32 to vector<8x128xf32>
    %129 = arith.mulf %128, %127 : vector<8x128xf32>
    %130 = arith.negf %129 : vector<8x128xf32>
    %131 = math.exp %130 : vector<8x128xf32>
    %cst_66 = arith.constant 1.000000e+00 : f32
    %132 = vector.broadcast %cst_66 : f32 to vector<8x128xf32>
    %133 = arith.addf %132, %131 : vector<8x128xf32>
    %134 = arith.divf %132, %133 : vector<8x128xf32>
    %135 = arith.mulf %127, %134 : vector<8x128xf32>
    %136 = arith.truncf %135 : vector<8x128xf32> to vector<8x128xbf16>
    %c0_67 = arith.constant 0 : index
    %c0_68 = arith.constant 0 : index
    %c0_69 = arith.constant 0 : index
    %137 = vector.load %arg16[%c0_67, %c0_68, %c0_69] : memref<1x128x32xbf16, #tpu.memory_space<vmem>>, vector<1x128x32xbf16>
    %138 = vector.shape_cast %137 : vector<1x128x32xbf16> to vector<128x32xbf16>
    %cst_70 = arith.constant dense<0.000000e+00> : vector<8x32xf32>
    %139 = tpu.matmul %136, %138, %cst_70 {dimension_numbers = #tpu.dot_dimension_numbers<[1], [0], [0], [1], [0, 0, 1, 1], [], []>} : vector<8x128xbf16>, vector<128x32xbf16>, vector<8x32xf32> -> vector<8x32xf32>
    %c0_71 = arith.constant 0 : index
    %c0_72 = arith.constant 0 : index
    %c0_73 = arith.constant 0 : index
    %140 = vector.load %arg17[%c0_71, %c0_72, %c0_73] : memref<1x1x32xf32, #tpu.memory_space<vmem>>, vector<1x1x32xf32>
    %141 = vector.shape_cast %140 : vector<1x1x32xf32> to vector<32xf32>
    %142 = vector.shape_cast %141 : vector<32xf32> to vector<1x32xf32>
    %143 = vector.broadcast %142 : vector<1x32xf32> to vector<8x32xf32>
    %144 = arith.addf %139, %143 : vector<8x32xf32>
    %145 = arith.addf %90, %144 : vector<8x32xf32>
    %c0_74 = arith.constant 0 : index
    %c0_75 = arith.constant 0 : index
    %146 = vector.load %arg22[%c0_74, %c0_75] : memref<8x32xf32, #tpu.memory_space<vmem>>, vector<8x32xf32>
    tpu.vector_store %arg22[%c0_74, %c0_75], %145 {strides = array<i32>} : memref<8x32xf32, #tpu.memory_space<vmem>>, vector<8x32xf32>,
    %c1_i32 = arith.constant 1 : i32
    %147 = arith.cmpi eq, %arg1, %c1_i32 : i32
    %148 = arith.extui %147 : i1 to i32
    %c0_i32_76 = arith.constant 0 : i32
    %149 = arith.cmpi ne, %148, %c0_i32_76 : i32
    scf.if %149 {
      %c0_77 = arith.constant 0 : index
      %c0_78 = arith.constant 0 : index
      %150 = vector.load %arg18[%c0_77, %c0_78] : memref<1x32xf32, #tpu.memory_space<vmem>>, vector<1x32xf32>
      %c0_79 = arith.constant 0 : index
      %c0_80 = arith.constant 0 : index
      %151 = vector.load %arg19[%c0_79, %c0_80] : memref<1x32xf32, #tpu.memory_space<vmem>>, vector<1x32xf32>
      %cst_81 = arith.constant dense<0.000000e+00> : vector<8xf32>
      %152 = vector.multi_reduction <add>, %145, %cst_81 [1] : vector<8x32xf32> to vector<8xf32>
      %153 = vector.shape_cast %152 : vector<8xf32> to vector<8x1xf32>
      %cst_82 = arith.constant 3.200000e+01 : f32
      %154 = vector.broadcast %cst_82 : f32 to vector<8x1xf32>
      %155 = arith.divf %153, %154 : vector<8x1xf32>
      %156 = vector.broadcast %155 : vector<8x1xf32> to vector<8x32xf32>
      %157 = arith.subf %145, %156 : vector<8x32xf32>
      %158 = arith.mulf %157, %157 : vector<8x32xf32>
      %cst_83 = arith.constant dense<0.000000e+00> : vector<8xf32>
      %159 = vector.multi_reduction <add>, %158, %cst_83 [1] : vector<8x32xf32> to vector<8xf32>
      %160 = vector.shape_cast %159 : vector<8xf32> to vector<8x1xf32>
      %cst_84 = arith.constant 3.200000e+01 : f32
      %161 = vector.broadcast %cst_84 : f32 to vector<8x1xf32>
      %162 = arith.divf %160, %161 : vector<8x1xf32>
      %163 = vector.broadcast %155 : vector<8x1xf32> to vector<8x32xf32>
      %164 = arith.subf %145, %163 : vector<8x32xf32>
      %cst_85 = arith.constant 9.99999974E-6 : f32
      %165 = vector.broadcast %cst_85 : f32 to vector<8x1xf32>
      %166 = arith.addf %162, %165 : vector<8x1xf32>
      %167 = math.rsqrt %166 : vector<8x1xf32>
      %168 = vector.broadcast %167 : vector<8x1xf32> to vector<8x32xf32>
      %169 = arith.mulf %164, %168 : vector<8x32xf32>
      %170 = vector.broadcast %150 : vector<1x32xf32> to vector<8x32xf32>
      %171 = arith.mulf %169, %170 : vector<8x32xf32>
      %172 = vector.broadcast %151 : vector<1x32xf32> to vector<8x32xf32>
      %173 = arith.addf %171, %172 : vector<8x32xf32>
      %174 = tpu.iota {dimensions = array<i32: 1>} : vector<1x8xi32>
      %175 = arith.index_cast %arg0 : i32 to index
      %176 = memref.load %arg2[%175] : memref<2xi32, #tpu.memory_space<smem>>
      %177 = vector.broadcast %176 : i32 to vector<1x8xi32>
      %178 = arith.cmpi eq, %174, %177 : vector<1x8xi32>
      %179 = arith.extui %178 : vector<1x8xi1> to vector<1x8xi32>
      %180 = arith.sitofp %179 : vector<1x8xi32> to vector<1x8xf32>
      %cst_86 = arith.constant dense<0.000000e+00> : vector<1x32xf32>
      %181 = tpu.matmul %180, %173, %cst_86 {dimension_numbers = #tpu.dot_dimension_numbers<[1], [0], [0], [1], [0, 0, 1, 1], [], []>} : vector<1x8xf32>, vector<8x32xf32>, vector<1x32xf32> -> vector<1x32xf32>
      %182 = arith.truncf %181 : vector<1x32xf32> to vector<1x32xbf16>
      %c0_87 = arith.constant 0 : index
      %c0_88 = arith.constant 0 : index
      %183 = vector.load %arg20[%c0_87, %c0_88] : memref<32x128xbf16, #tpu.memory_space<vmem>>, vector<32x128xbf16>
      %cst_89 = arith.constant dense<0.000000e+00> : vector<1x128xf32>
      %184 = tpu.matmul %182, %183, %cst_89 {dimension_numbers = #tpu.dot_dimension_numbers<[1], [0], [0], [1], [0, 0, 1, 1], [], []>} : vector<1x32xbf16>, vector<32x128xbf16>, vector<1x128xf32> -> vector<1x128xf32>
      %185 = vector.shape_cast %184 : vector<1x128xf32> to vector<1x1x128xf32>
      %186 = vector.shape_cast %185 : vector<1x1x128xf32> to vector<1x1x128xf32>
      %187 = vector.broadcast %186 : vector<1x1x128xf32> to vector<1x8x128xf32>
      %c0_90 = arith.constant 0 : index
      %c0_91 = arith.constant 0 : index
      %c0_92 = arith.constant 0 : index
      %188 = vector.load %arg21[%c0_90, %c0_91, %c0_92] : memref<1x8x128xf32, #tpu.memory_space<vmem>>, vector<1x8x128xf32>
      tpu.vector_store %arg21[%c0_90, %c0_91, %c0_92], %187 {strides = array<i32>} : memref<1x8x128xf32, #tpu.memory_space<vmem>>, vector<1x8x128xf32>,
    } else {
    }
    return
  }
  func.func @transform_0(%arg0: i32, %arg1: i32, %arg2: memref<2xi32, #tpu.memory_space<smem>>) -> (i32, i32, i32) {
    %c0_i32 = arith.constant 0 : i32
    %c0_i32_0 = arith.constant 0 : i32
    %c0_i32_1 = arith.constant 0 : i32
    return %arg0, %c0_i32, %c0_i32_0 : i32, i32, i32
  }
  func.func @transform_1(%arg0: i32, %arg1: i32, %arg2: memref<2xi32, #tpu.memory_space<smem>>) -> (i32, i32) {
    %c0_i32 = arith.constant 0 : i32
    %c0_i32_0 = arith.constant 0 : i32
    %c0_i32_1 = arith.constant 0 : i32
    return %c0_i32, %c0_i32_0 : i32, i32
  }
  func.func @transform_2(%arg0: i32, %arg1: i32, %arg2: memref<2xi32, #tpu.memory_space<smem>>) -> (i32, i32) {
    %c0_i32 = arith.constant 0 : i32
    %c0_i32_0 = arith.constant 0 : i32
    %c0_i32_1 = arith.constant 0 : i32
    return %c0_i32, %c0_i32_0 : i32, i32
  }
  func.func @transform_3(%arg0: i32, %arg1: i32, %arg2: memref<2xi32, #tpu.memory_space<smem>>) -> (i32, i32, i32) {
    %c0_i32 = arith.constant 0 : i32
    %c0_i32_0 = arith.constant 0 : i32
    %c0_i32_1 = arith.constant 0 : i32
    return %arg1, %c0_i32, %c0_i32_0 : i32, i32, i32
  }
  func.func @transform_4(%arg0: i32, %arg1: i32, %arg2: memref<2xi32, #tpu.memory_space<smem>>) -> (i32, i32, i32) {
    %c0_i32 = arith.constant 0 : i32
    %c0_i32_0 = arith.constant 0 : i32
    %c0_i32_1 = arith.constant 0 : i32
    return %arg1, %c0_i32, %c0_i32_0 : i32, i32, i32
  }
  func.func @transform_5(%arg0: i32, %arg1: i32, %arg2: memref<2xi32, #tpu.memory_space<smem>>) -> (i32, i32, i32, i32) {
    %c0_i32 = arith.constant 0 : i32
    %c0_i32_0 = arith.constant 0 : i32
    %c0_i32_1 = arith.constant 0 : i32
    %c0_i32_2 = arith.constant 0 : i32
    return %arg1, %c0_i32, %c0_i32_0, %c0_i32_1 : i32, i32, i32, i32
  }
  func.func @transform_6(%arg0: i32, %arg1: i32, %arg2: memref<2xi32, #tpu.memory_space<smem>>) -> (i32, i32, i32) {
    %c0_i32 = arith.constant 0 : i32
    %c0_i32_0 = arith.constant 0 : i32
    %c0_i32_1 = arith.constant 0 : i32
    return %arg1, %c0_i32, %c0_i32_0 : i32, i32, i32
  }
  func.func @transform_7(%arg0: i32, %arg1: i32, %arg2: memref<2xi32, #tpu.memory_space<smem>>) -> (i32, i32, i32) {
    %c0_i32 = arith.constant 0 : i32
    %c0_i32_0 = arith.constant 0 : i32
    %c0_i32_1 = arith.constant 0 : i32
    return %arg1, %c0_i32, %c0_i32_0 : i32, i32, i32
  }
  func.func @transform_8(%arg0: i32, %arg1: i32, %arg2: memref<2xi32, #tpu.memory_space<smem>>) -> (i32, i32, i32) {
    %c0_i32 = arith.constant 0 : i32
    %c0_i32_0 = arith.constant 0 : i32
    %c0_i32_1 = arith.constant 0 : i32
    return %arg1, %c0_i32, %c0_i32_0 : i32, i32, i32
  }
  func.func @transform_9(%arg0: i32, %arg1: i32, %arg2: memref<2xi32, #tpu.memory_space<smem>>) -> (i32, i32, i32) {
    %c0_i32 = arith.constant 0 : i32
    %c0_i32_0 = arith.constant 0 : i32
    %c0_i32_1 = arith.constant 0 : i32
    return %arg1, %c0_i32, %c0_i32_0 : i32, i32, i32
  }
  func.func @transform_10(%arg0: i32, %arg1: i32, %arg2: memref<2xi32, #tpu.memory_space<smem>>) -> (i32, i32, i32) {
    %c0_i32 = arith.constant 0 : i32
    %c0_i32_0 = arith.constant 0 : i32
    %c0_i32_1 = arith.constant 0 : i32
    return %arg1, %c0_i32, %c0_i32_0 : i32, i32, i32
  }
  func.func @transform_11(%arg0: i32, %arg1: i32, %arg2: memref<2xi32, #tpu.memory_space<smem>>) -> (i32, i32, i32) {
    %c0_i32 = arith.constant 0 : i32
    %c0_i32_0 = arith.constant 0 : i32
    %c0_i32_1 = arith.constant 0 : i32
    return %arg1, %c0_i32, %c0_i32_0 : i32, i32, i32
  }
  func.func @transform_12(%arg0: i32, %arg1: i32, %arg2: memref<2xi32, #tpu.memory_space<smem>>) -> (i32, i32, i32) {
    %c0_i32 = arith.constant 0 : i32
    %c0_i32_0 = arith.constant 0 : i32
    %c0_i32_1 = arith.constant 0 : i32
    return %arg1, %c0_i32, %c0_i32_0 : i32, i32, i32
  }
  func.func @transform_13(%arg0: i32, %arg1: i32, %arg2: memref<2xi32, #tpu.memory_space<smem>>) -> (i32, i32, i32) {
    %c0_i32 = arith.constant 0 : i32
    %c0_i32_0 = arith.constant 0 : i32
    %c0_i32_1 = arith.constant 0 : i32
    return %arg1, %c0_i32, %c0_i32_0 : i32, i32, i32
  }
  func.func @transform_14(%arg0: i32, %arg1: i32, %arg2: memref<2xi32, #tpu.memory_space<smem>>) -> (i32, i32, i32) {
    %c0_i32 = arith.constant 0 : i32
    %c0_i32_0 = arith.constant 0 : i32
    %c0_i32_1 = arith.constant 0 : i32
    return %arg1, %c0_i32, %c0_i32_0 : i32, i32, i32
  }
  func.func @transform_15(%arg0: i32, %arg1: i32, %arg2: memref<2xi32, #tpu.memory_space<smem>>) -> (i32, i32) {
    %c0_i32 = arith.constant 0 : i32
    %c0_i32_0 = arith.constant 0 : i32
    %c0_i32_1 = arith.constant 0 : i32
    return %c0_i32, %c0_i32_0 : i32, i32
  }
  func.func @transform_16(%arg0: i32, %arg1: i32, %arg2: memref<2xi32, #tpu.memory_space<smem>>) -> (i32, i32) {
    %c0_i32 = arith.constant 0 : i32
    %c0_i32_0 = arith.constant 0 : i32
    %c0_i32_1 = arith.constant 0 : i32
    return %c0_i32, %c0_i32_0 : i32, i32
  }
  func.func @transform_17(%arg0: i32, %arg1: i32, %arg2: memref<2xi32, #tpu.memory_space<smem>>) -> (i32, i32) {
    %c0_i32 = arith.constant 0 : i32
    %c0_i32_0 = arith.constant 0 : i32
    %c0_i32_1 = arith.constant 0 : i32
    return %c0_i32, %c0_i32_0 : i32, i32
  }
  func.func @transform_18(%arg0: i32, %arg1: i32, %arg2: memref<2xi32, #tpu.memory_space<smem>>) -> (i32, i32, i32) {
    %c0_i32 = arith.constant 0 : i32
    %c0_i32_0 = arith.constant 0 : i32
    %c0_i32_1 = arith.constant 0 : i32
    return %arg0, %c0_i32, %c0_i32_0 : i32, i32, i32
  }
}

</mosaic_0001>

<llo_original>
// kernel: tpu_custom_call.1
$region0: #{tpu_custom_call.1}
  #allocation0 [shape = 'u32[]', space=smem, size = 0x4, offset = 0x4, fixed_abs, tag = 'smem constant byte address 0x4 - core index']
  #allocation1 [shape = 'u32[144,128]{1,0:T(1,128)}', space=vmem, size = 0x12000, scoped, tag = 'internal scratch']
  #allocation2 [shape = 'f32[8,32]{1,0:T(8,128)}', space=vmem, size = 0x1000, scoped, tag = 'scratch operand']
  #allocation3 [shape = 's32[1]{0}', space=sflag, size = 0x4, scoped, tag = 'scoped memory for tpu_custom_call.1']
  #allocation4 [shape = 'u8[512]{0}', space=smem, size = 0x200, scoped, tag = 'prefetched SMEM operand 0']
  %s0 = inlined_call_operand.vmem [shape: s32[2], index: 0, kind: input, shape index: {}]
  %s1 = inlined_call_operand.vmem [shape: f32[2,8,32], index: 1, kind: input, shape index: {}]
  %s2 = inlined_call_operand.hbm [shape: f32[8,32], index: 2, kind: input, shape index: {}]
  %s3 = inlined_call_operand.hbm [shape: f32[8,8], index: 3, kind: input, shape index: {}]
  %s4 = inlined_call_operand.vmem [shape: f32[2,1,32], index: 4, kind: input, shape index: {}]
  %s5 = inlined_call_operand.hbm [shape: f32[2,1,32], index: 5, kind: input, shape index: {}]
  %s6 = inlined_call_operand.vmem [shape: bf16[2,3,32,32], index: 6, kind: input, shape index: {}]
  %s7 = inlined_call_operand.vmem [shape: f32[2,3,32], index: 7, kind: input, shape index: {}]
  %s8 = inlined_call_operand.vmem [shape: bf16[2,32,32], index: 8, kind: input, shape index: {}]
  %s9 = inlined_call_operand.hbm [shape: f32[2,1,32], index: 9, kind: input, shape index: {}]
  %s10 = inlined_call_operand.hbm [shape: f32[2,1,32], index: 10, kind: input, shape index: {}]
  %s11 = inlined_call_operand.hbm [shape: f32[2,1,32], index: 11, kind: input, shape index: {}]
  %s12 = inlined_call_operand.vmem [shape: bf16[2,32,128], index: 12, kind: input, shape index: {}]
  %s13 = inlined_call_operand.hbm [shape: f32[2,1,128], index: 13, kind: input, shape index: {}]
  %s14 = inlined_call_operand.vmem [shape: bf16[2,128,32], index: 14, kind: input, shape index: {}]
  %s15 = inlined_call_operand.vmem [shape: f32[2,1,32], index: 15, kind: input, shape index: {}]
  %s16 = inlined_call_operand.vmem [shape: f32[1,32], index: 16, kind: input, shape index: {}]
  %s17 = inlined_call_operand.vmem [shape: f32[1,32], index: 17, kind: input, shape index: {}]
  %s18 = inlined_call_operand.vmem [shape: bf16[32,128], index: 18, kind: input, shape index: {}]
  %s19 = inlined_call_operand.hbm [shape: f32[2,8,128], index: 19, kind: output, shape index: {}]
  %s20 = sld [smem:[#allocation0]]
  $region141: #{tpu_custom_call.1} parent=0
    _
  %s22 = ssub.s32 1, %s20
  %s23 = scalar_select 0, %s22, %s20
  %s24 = sshll.u32 %s0, 4
  %s25 = int_to_ptr.vmem [resolvable:$true] %s24
  %27 = dma.vmem_to_smem %s25, 16, [#allocation4], [#allocation3]
  %28 = dma.done [#allocation3], 16
  %29 = sfence
  $region1: #{tpu_custom_call.1} parent=0
    #allocation5 [shape = 'u8[4096]{0}', space=vmem, size = 0x1000, scoped, tag = 'input window, operand 2, single buffered']
    #allocation6 [shape = 's32[2]{0}', space=sflag, size = 0x8, scoped, tag = 'scoped memory for tpu_custom_call.1']
    #allocation7 [shape = 's32[2]{0}', space=sflag, size = 0x8, scoped, tag = 'scoped memory for tpu_custom_call.1']
    #allocation8 [shape = 'u8[4096]{0}', space=vmem, size = 0x1000, scoped, tag = 'input window, operand 3, single buffered']
    #allocation9 [shape = 's32[1]{0}', space=sflag, size = 0x4, scoped, tag = 'scoped memory for tpu_custom_call.1']
    #allocation10 [shape = 'u8[1024]{0}', space=vmem, size = 0x400, scoped, tag = 'input window, operand 5']
    #allocation11 [shape = 'u8[1024]{0}', space=vmem, size = 0x400, scoped, tag = 'input window, operand 9']
    #allocation12 [shape = 'u8[1024]{0}', space=vmem, size = 0x400, scoped, tag = 'input window, operand 10']
    #allocation13 [shape = 'u8[1024]{0}', space=vmem, size = 0x400, scoped, tag = 'input window, operand 11']
    #allocation14 [shape = 'u8[1024]{0}', space=vmem, size = 0x400, scoped, tag = 'input window, operand 13']
    #allocation15 [shape = 'u8[8192]{0}', space=vmem, size = 0x2000, scoped, tag = 'output window, operand 0']
    %30 = vsyncpa [#allocation6], 0
    %31 = vsyncpa [#allocation9], 0
    %32 = vsyncpa [#allocation7], 0
    %s33 = scalar_lea.sflag [#allocation7], 1
    %34 = vsyncpa %s33, 0
    loop: start=0, step=1, limit=6
    $region2: #{tpu_custom_call.1} parent=1 // loop_pre_header
      _
    $region3: #{tpu_custom_call.1} parent=1 // loop_header
      %s36 = sphi 0, %s40
      %p37 = scmp.ge.s32.totalorder %s36, 6
      %s43 = sphi 0, %s55
      %s44 = sphi 0, %s51
      %s45 = sphi 0, %s43
      %s46 = sphi 0, %s44
      %s47 = sphi 0, %s45
      %s48 = sphi 0, %s46
      %s58 = sphi 0, %s60
      %s61 = sphi 0, %s58
      %s62 = sphi 0, %s61
      %s78 = sphi 0, %s62
      %s82 = sphi 0, %s82
      %s84 = sphi 0, %s82
      %s85 = sphi 0, %s84
      %s99 = sphi 0, %s85
      %s103 = sphi 0, %s103
      %s105 = sphi 0, %s103
      %s106 = sphi 0, %s105
      %s120 = sphi 0, %s106
      %s126 = sphi 0, %s128
      %s129 = sphi 0, %s126
      %s130 = sphi 0, %s129
      %s146 = sphi 0, %s130
      %s152 = sphi 0, %s154
      %s155 = sphi 0, %s152
      %s156 = sphi 0, %s155
      %s172 = sphi 0, %s156
      %s178 = sphi 0, %s180
      %s181 = sphi 0, %s178
      %s182 = sphi 0, %s181
      %s198 = sphi 0, %s182
      %s204 = sphi 0, %s206
      %s207 = sphi 0, %s204
      %s208 = sphi 0, %s207
      %s224 = sphi 0, %s208
      %s230 = sphi 0, %s232
      %s233 = sphi 0, %s230
      %s234 = sphi 0, %s233
      %s250 = sphi 0, %s234
      %s256 = sphi 0, %s258
      %s259 = sphi 0, %s256
      %s260 = sphi 0, %s259
      %s276 = sphi 0, %s260
      %s282 = sphi 0, %s284
      %s285 = sphi 0, %s282
      %s286 = sphi 0, %s285
      %s302 = sphi 0, %s286
      %s308 = sphi 0, %s310
      %s311 = sphi 0, %s308
      %s312 = sphi 0, %s311
      %s328 = sphi 0, %s312
      %s334 = sphi 0, %s336
      %s337 = sphi 0, %s334
      %s338 = sphi 0, %s337
      %s354 = sphi 0, %s338
      %s360 = sphi 0, %s362
      %s363 = sphi 0, %s360
      %s364 = sphi 0, %s363
      %s380 = sphi 0, %s364
      %s386 = sphi 0, %s388
      %s389 = sphi 0, %s386
      %s390 = sphi 0, %s389
      %s406 = sphi 0, %s390
      %s412 = sphi 0, %s414
      %s415 = sphi 0, %s412
      %s416 = sphi 0, %s415
      %s432 = sphi 0, %s416
      %s436 = sphi 0, %s436
      %s438 = sphi 0, %s436
      %s439 = sphi 0, %s438
      %s453 = sphi 0, %s439
      %s457 = sphi 0, %s457
      %s459 = sphi 0, %s457
      %s460 = sphi 0, %s459
      %s474 = sphi 0, %s460
      %s478 = sphi 0, %s478
      %s480 = sphi 0, %s478
      %s481 = sphi 0, %s480
      %s495 = sphi 0, %s481
      %s501 = sphi 0, %s503
      %s504 = sphi 0, %s501
      %s505 = sphi 0, %s504
      %s521 = sphi 0, %s505
    $region4: #{tpu_custom_call.1} parent=1 // loop_header_branch
      %39 = sbr.rel (%p37) target = $region8
    $region5: #{tpu_custom_call.1} parent=1 // loop_body
      %s41 = ssub.s32 %s36, 1
      %s42 = ssub.s32 %s36, 2
      %s49 = sadd.s32 1, %s44
      %p50 = scmp.ge.s32.totalorder %s49, 2
      %s51 = scalar_select %p50, 0, %s49
      %s52 = sadd.s32 1, %s43
      %s53 = scalar_select %p50, %s52, %s43
      %p54 = scmp.ge.s32.totalorder %s53, 2
      %s55 = scalar_select %p54, 0, %s53
      %s56 = ssub.s32 %s43, %s55
      %p57 = scmp.eq.s32.totalorder %s56, 0
      %s59 = sadd.s32 %s58, 1
      %s60 = scalar_select %p57, %s58, %s59
      %p63 = pneg %p57
      %p64 = scmp.eq.s32.totalorder %s36, 3
      %p65 = por %p63, %p64
      %p66 = scmp.ne.s32.totalorder %s58, %s61
      %p67 = scmp.eq.s32.totalorder %s36, 0
      %p68 = por %p66, %p67
      %p69 = scmp.ne.s32.totalorder %s58, %s61
      %p70 = scmp.eq.s32.totalorder %s41, 3
      %p71 = por %p69, %p70
      %p72 = scmp.ne.s32.totalorder %s61, %s62
      %p73 = scmp.eq.s32.totalorder %s41, 0
      %p74 = por %p72, %p73
      %p75 = scmp.ne.s32.totalorder %s61, %s62
      %p76 = scmp.eq.s32.totalorder %s42, 3
      %p77 = por %p75, %p76
      %p79 = scmp.ne.s32.totalorder %s62, %s78
      %p80 = scmp.eq.s32.totalorder %s42, 0
      %p81 = por %p79, %p80
      %s83 = sadd.s32 %s82, 1
      %p86 = scmp.eq.s32.totalorder %s36, 3
      %p87 = scmp.ne.s32.totalorder %s82, %s84
      %p88 = scmp.eq.s32.totalorder %s36, 0
      %p89 = por %p87, %p88
      %p90 = scmp.ne.s32.totalorder %s82, %s84
      %p91 = scmp.eq.s32.totalorder %s41, 3
      %p92 = por %p90, %p91
      %p93 = scmp.ne.s32.totalorder %s84, %s85
      %p94 = scmp.eq.s32.totalorder %s41, 0
      %p95 = por %p93, %p94
      %p96 = scmp.ne.s32.totalorder %s84, %s85
      %p97 = scmp.eq.s32.totalorder %s42, 3
      %p98 = por %p96, %p97
      %p100 = scmp.ne.s32.totalorder %s85, %s99
      %p101 = scmp.eq.s32.totalorder %s42, 0
      %p102 = por %p100, %p101
      %s104 = sadd.s32 %s103, 1
      %p107 = scmp.eq.s32.totalorder %s36, 3
      %p108 = scmp.ne.s32.totalorder %s103, %s105
      %p109 = scmp.eq.s32.totalorder %s36, 0
      %p110 = por %p108, %p109
      %p111 = scmp.ne.s32.totalorder %s103, %s105
      %p112 = scmp.eq.s32.totalorder %s41, 3
      %p113 = por %p111, %p112
      %p114 = scmp.ne.s32.totalorder %s105, %s106
      %p115 = scmp.eq.s32.totalorder %s41, 0
      %p116 = por %p114, %p115
      %p117 = scmp.ne.s32.totalorder %s105, %s106
      %p118 = scmp.eq.s32.totalorder %s42, 3
      %p119 = por %p117, %p118
      %p121 = scmp.ne.s32.totalorder %s106, %s120
      %p122 = scmp.eq.s32.totalorder %s42, 0
      %p123 = por %p121, %p122
      %s124 = ssub.s32 %s44, %s51
      %p125 = scmp.eq.s32.totalorder %s124, 0
      %s127 = sadd.s32 %s126, 1
      %s128 = scalar_select %p125, %s126, %s127
      %p131 = pneg %p125
      %p132 = scmp.eq.s32.totalorder %s36, 3
      %p133 = por %p131, %p132
      %p134 = scmp.ne.s32.totalorder %s126, %s129
      %p135 = scmp.eq.s32.totalorder %s36, 0
      %p136 = por %p134, %p135
      %p137 = scmp.ne.s32.totalorder %s126, %s129
      %p138 = scmp.eq.s32.totalorder %s41, 3
      %p139 = por %p137, %p138
      %p140 = scmp.ne.s32.totalorder %s129, %s130
      %p141 = scmp.eq.s32.totalorder %s41, 0
      %p142 = por %p140, %p141
      %p143 = scmp.ne.s32.totalorder %s129, %s130
      %p144 = scmp.eq.s32.totalorder %s42, 3
      %p145 = por %p143, %p144
      %p147 = scmp.ne.s32.totalorder %s130, %s146
      %p148 = scmp.eq.s32.totalorder %s42, 0
      %p149 = por %p147, %p148
      %s150 = ssub.s32 %s44, %s51
      %p151 = scmp.eq.s32.totalorder %s150, 0
      %s153 = sadd.s32 %s152, 1
      %s154 = scalar_select %p151, %s152, %s153
      %p157 = pneg %p151
      %p158 = scmp.eq.s32.totalorder %s36, 3
      %p159 = por %p157, %p158
      %p160 = scmp.ne.s32.totalorder %s152, %s155
      %p161 = scmp.eq.s32.totalorder %s36, 0
      %p162 = por %p160, %p161
      %p163 = scmp.ne.s32.totalorder %s152, %s155
      %p164 = scmp.eq.s32.totalorder %s41, 3
      %p165 = por %p163, %p164
      %p166 = scmp.ne.s32.totalorder %s155, %s156
      %p167 = scmp.eq.s32.totalorder %s41, 0
      %p168 = por %p166, %p167
      %p169 = scmp.ne.s32.totalorder %s155, %s156
      %p170 = scmp.eq.s32.totalorder %s42, 3
      %p171 = por %p169, %p170
      %p173 = scmp.ne.s32.totalorder %s156, %s172
      %p174 = scmp.eq.s32.totalorder %s42, 0
      %p175 = por %p173, %p174
      %s176 = ssub.s32 %s44, %s51
      %p177 = scmp.eq.s32.totalorder %s176, 0
      %s179 = sadd.s32 %s178, 1
      %s180 = scalar_select %p177, %s178, %s179
      %p183 = pneg %p177
      %p184 = scmp.eq.s32.totalorder %s36, 3
      %p185 = por %p183, %p184
      %p186 = scmp.ne.s32.totalorder %s178, %s181
      %p187 = scmp.eq.s32.totalorder %s36, 0
      %p188 = por %p186, %p187
      %p189 = scmp.ne.s32.totalorder %s178, %s181
      %p190 = scmp.eq.s32.totalorder %s41, 3
      %p191 = por %p189, %p190
      %p192 = scmp.ne.s32.totalorder %s181, %s182
      %p193 = scmp.eq.s32.totalorder %s41, 0
      %p194 = por %p192, %p193
      %p195 = scmp.ne.s32.totalorder %s181, %s182
      %p196 = scmp.eq.s32.totalorder %s42, 3
      %p197 = por %p195, %p196
      %p199 = scmp.ne.s32.totalorder %s182, %s198
      %p200 = scmp.eq.s32.totalorder %s42, 0
      %p201 = por %p199, %p200
      %s202 = ssub.s32 %s44, %s51
      %p203 = scmp.eq.s32.totalorder %s202, 0
      %s205 = sadd.s32 %s204, 1
      %s206 = scalar_select %p203, %s204, %s205
      %p209 = pneg %p203
      %p210 = scmp.eq.s32.totalorder %s36, 3
      %p211 = por %p209, %p210
      %p212 = scmp.ne.s32.totalorder %s204, %s207
      %p213 = scmp.eq.s32.totalorder %s36, 0
      %p214 = por %p212, %p213
      %p215 = scmp.ne.s32.totalorder %s204, %s207
      %p216 = scmp.eq.s32.totalorder %s41, 3
      %p217 = por %p215, %p216
      %p218 = scmp.ne.s32.totalorder %s207, %s208
      %p219 = scmp.eq.s32.totalorder %s41, 0
      %p220 = por %p218, %p219
      %p221 = scmp.ne.s32.totalorder %s207, %s208
      %p222 = scmp.eq.s32.totalorder %s42, 3
      %p223 = por %p221, %p222
      %p225 = scmp.ne.s32.totalorder %s208, %s224
      %p226 = scmp.eq.s32.totalorder %s42, 0
      %p227 = por %p225, %p226
      %s228 = ssub.s32 %s44, %s51
      %p229 = scmp.eq.s32.totalorder %s228, 0
      %s231 = sadd.s32 %s230, 1
      %s232 = scalar_select %p229, %s230, %s231
      %p235 = pneg %p229
      %p236 = scmp.eq.s32.totalorder %s36, 3
      %p237 = por %p235, %p236
      %p238 = scmp.ne.s32.totalorder %s230, %s233
      %p239 = scmp.eq.s32.totalorder %s36, 0
      %p240 = por %p238, %p239
      %p241 = scmp.ne.s32.totalorder %s230, %s233
      %p242 = scmp.eq.s32.totalorder %s41, 3
      %p243 = por %p241, %p242
      %p244 = scmp.ne.s32.totalorder %s233, %s234
      %p245 = scmp.eq.s32.totalorder %s41, 0
      %p246 = por %p244, %p245
      %p247 = scmp.ne.s32.totalorder %s233, %s234
      %p248 = scmp.eq.s32.totalorder %s42, 3
      %p249 = por %p247, %p248
      %p251 = scmp.ne.s32.totalorder %s234, %s250
      %p252 = scmp.eq.s32.totalorder %s42, 0
      %p253 = por %p251, %p252
      %s254 = ssub.s32 %s44, %s51
      %p255 = scmp.eq.s32.totalorder %s254, 0
      %s257 = sadd.s32 %s256, 1
      %s258 = scalar_select %p255, %s256, %s257
      %p261 = pneg %p255
      %p262 = scmp.eq.s32.totalorder %s36, 3
      %p263 = por %p261, %p262
      %p264 = scmp.ne.s32.totalorder %s256, %s259
      %p265 = scmp.eq.s32.totalorder %s36, 0
      %p266 = por %p264, %p265
      %p267 = scmp.ne.s32.totalorder %s256, %s259
      %p268 = scmp.eq.s32.totalorder %s41, 3
      %p269 = por %p267, %p268
      %p270 = scmp.ne.s32.totalorder %s259, %s260
      %p271 = scmp.eq.s32.totalorder %s41, 0
      %p272 = por %p270, %p271
      %p273 = scmp.ne.s32.totalorder %s259, %s260
      %p274 = scmp.eq.s32.totalorder %s42, 3
      %p275 = por %p273, %p274
      %p277 = scmp.ne.s32.totalorder %s260, %s276
      %p278 = scmp.eq.s32.totalorder %s42, 0
      %p279 = por %p277, %p278
      %s280 = ssub.s32 %s44, %s51
      %p281 = scmp.eq.s32.totalorder %s280, 0
      %s283 = sadd.s32 %s282, 1
      %s284 = scalar_select %p281, %s282, %s283
      %p287 = pneg %p281
      %p288 = scmp.eq.s32.totalorder %s36, 3
      %p289 = por %p287, %p288
      %p290 = scmp.ne.s32.totalorder %s282, %s285
      %p291 = scmp.eq.s32.totalorder %s36, 0
      %p292 = por %p290, %p291
      %p293 = scmp.ne.s32.totalorder %s282, %s285
      %p294 = scmp.eq.s32.totalorder %s41, 3
      %p295 = por %p293, %p294
      %p296 = scmp.ne.s32.totalorder %s285, %s286
      %p297 = scmp.eq.s32.totalorder %s41, 0
      %p298 = por %p296, %p297
      %p299 = scmp.ne.s32.totalorder %s285, %s286
      %p300 = scmp.eq.s32.totalorder %s42, 3
      %p301 = por %p299, %p300
      %p303 = scmp.ne.s32.totalorder %s286, %s302
      %p304 = scmp.eq.s32.totalorder %s42, 0
      %p305 = por %p303, %p304
      %s306 = ssub.s32 %s44, %s51
      %p307 = scmp.eq.s32.totalorder %s306, 0
      %s309 = sadd.s32 %s308, 1
      %s310 = scalar_select %p307, %s308, %s309
      %p313 = pneg %p307
      %p314 = scmp.eq.s32.totalorder %s36, 3
      %p315 = por %p313, %p314
      %p316 = scmp.ne.s32.totalorder %s308, %s311
      %p317 = scmp.eq.s32.totalorder %s36, 0
      %p318 = por %p316, %p317
      %p319 = scmp.ne.s32.totalorder %s308, %s311
      %p320 = scmp.eq.s32.totalorder %s41, 3
      %p321 = por %p319, %p320
      %p322 = scmp.ne.s32.totalorder %s311, %s312
      %p323 = scmp.eq.s32.totalorder %s41, 0
      %p324 = por %p322, %p323
      %p325 = scmp.ne.s32.totalorder %s311, %s312
      %p326 = scmp.eq.s32.totalorder %s42, 3
      %p327 = por %p325, %p326
      %p329 = scmp.ne.s32.totalorder %s312, %s328
      %p330 = scmp.eq.s32.totalorder %s42, 0
      %p331 = por %p329, %p330
      %s332 = ssub.s32 %s44, %s51
      %p333 = scmp.eq.s32.totalorder %s332, 0
      %s335 = sadd.s32 %s334, 1
      %s336 = scalar_select %p333, %s334, %s335
      %p339 = pneg %p333
      %p340 = scmp.eq.s32.totalorder %s36, 3
      %p341 = por %p339, %p340
      %p342 = scmp.ne.s32.totalorder %s334, %s337
      %p343 = scmp.eq.s32.totalorder %s36, 0
      %p344 = por %p342, %p343
      %p345 = scmp.ne.s32.totalorder %s334, %s337
      %p346 = scmp.eq.s32.totalorder %s41, 3
      %p347 = por %p345, %p346
      %p348 = scmp.ne.s32.totalorder %s337, %s338
      %p349 = scmp.eq.s32.totalorder %s41, 0
      %p350 = por %p348, %p349
      %p351 = scmp.ne.s32.totalorder %s337, %s338
      %p352 = scmp.eq.s32.totalorder %s42, 3
      %p353 = por %p351, %p352
      %p355 = scmp.ne.s32.totalorder %s338, %s354
      %p356 = scmp.eq.s32.totalorder %s42, 0
      %p357 = por %p355, %p356
      %s358 = ssub.s32 %s44, %s51
      %p359 = scmp.eq.s32.totalorder %s358, 0
      %s361 = sadd.s32 %s360, 1
      %s362 = scalar_select %p359, %s360, %s361
      %p365 = pneg %p359
      %p366 = scmp.eq.s32.totalorder %s36, 3
      %p367 = por %p365, %p366
      %p368 = scmp.ne.s32.totalorder %s360, %s363
      %p369 = scmp.eq.s32.totalorder %s36, 0
      %p370 = por %p368, %p369
      %p371 = scmp.ne.s32.totalorder %s360, %s363
      %p372 = scmp.eq.s32.totalorder %s41, 3
      %p373 = por %p371, %p372
      %p374 = scmp.ne.s32.totalorder %s363, %s364
      %p375 = scmp.eq.s32.totalorder %s41, 0
      %p376 = por %p374, %p375
      %p377 = scmp.ne.s32.totalorder %s363, %s364
      %p378 = scmp.eq.s32.totalorder %s42, 3
      %p379 = por %p377, %p378
      %p381 = scmp.ne.s32.totalorder %s364, %s380
      %p382 = scmp.eq.s32.totalorder %s42, 0
      %p383 = por %p381, %p382
      %s384 = ssub.s32 %s44, %s51
      %p385 = scmp.eq.s32.totalorder %s384, 0
      %s387 = sadd.s32 %s386, 1
      %s388 = scalar_select %p385, %s386, %s387
      %p391 = pneg %p385
      %p392 = scmp.eq.s32.totalorder %s36, 3
      %p393 = por %p391, %p392
      %p394 = scmp.ne.s32.totalorder %s386, %s389
      %p395 = scmp.eq.s32.totalorder %s36, 0
      %p396 = por %p394, %p395
      %p397 = scmp.ne.s32.totalorder %s386, %s389
      %p398 = scmp.eq.s32.totalorder %s41, 3
      %p399 = por %p397, %p398
      %p400 = scmp.ne.s32.totalorder %s389, %s390
      %p401 = scmp.eq.s32.totalorder %s41, 0
      %p402 = por %p400, %p401
      %p403 = scmp.ne.s32.totalorder %s389, %s390
      %p404 = scmp.eq.s32.totalorder %s42, 3
      %p405 = por %p403, %p404
      %p407 = scmp.ne.s32.totalorder %s390, %s406
      %p408 = scmp.eq.s32.totalorder %s42, 0
      %p409 = por %p407, %p408
      %s410 = ssub.s32 %s44, %s51
      %p411 = scmp.eq.s32.totalorder %s410, 0
      %s413 = sadd.s32 %s412, 1
      %s414 = scalar_select %p411, %s412, %s413
      %p417 = pneg %p411
      %p418 = scmp.eq.s32.totalorder %s36, 3
      %p419 = por %p417, %p418
      %p420 = scmp.ne.s32.totalorder %s412, %s415
      %p421 = scmp.eq.s32.totalorder %s36, 0
      %p422 = por %p420, %p421
      %p423 = scmp.ne.s32.totalorder %s412, %s415
      %p424 = scmp.eq.s32.totalorder %s41, 3
      %p425 = por %p423, %p424
      %p426 = scmp.ne.s32.totalorder %s415, %s416
      %p427 = scmp.eq.s32.totalorder %s41, 0
      %p428 = por %p426, %p427
      %p429 = scmp.ne.s32.totalorder %s415, %s416
      %p430 = scmp.eq.s32.totalorder %s42, 3
      %p431 = por %p429, %p430
      %p433 = scmp.ne.s32.totalorder %s416, %s432
      %p434 = scmp.eq.s32.totalorder %s42, 0
      %p435 = por %p433, %p434
      %s437 = sadd.s32 %s436, 1
      %p440 = scmp.eq.s32.totalorder %s36, 3
      %p441 = scmp.ne.s32.totalorder %s436, %s438
      %p442 = scmp.eq.s32.totalorder %s36, 0
      %p443 = por %p441, %p442
      %p444 = scmp.ne.s32.totalorder %s436, %s438
      %p445 = scmp.eq.s32.totalorder %s41, 3
      %p446 = por %p444, %p445
      %p447 = scmp.ne.s32.totalorder %s438, %s439
      %p448 = scmp.eq.s32.totalorder %s41, 0
      %p449 = por %p447, %p448
      %p450 = scmp.ne.s32.totalorder %s438, %s439
      %p451 = scmp.eq.s32.totalorder %s42, 3
      %p452 = por %p450, %p451
      %p454 = scmp.ne.s32.totalorder %s439, %s453
      %p455 = scmp.eq.s32.totalorder %s42, 0
      %p456 = por %p454, %p455
      %s458 = sadd.s32 %s457, 1
      %p461 = scmp.eq.s32.totalorder %s36, 3
      %p462 = scmp.ne.s32.totalorder %s457, %s459
      %p463 = scmp.eq.s32.totalorder %s36, 0
      %p464 = por %p462, %p463
      %p465 = scmp.ne.s32.totalorder %s457, %s459
      %p466 = scmp.eq.s32.totalorder %s41, 3
      %p467 = por %p465, %p466
      %p468 = scmp.ne.s32.totalorder %s459, %s460
      %p469 = scmp.eq.s32.totalorder %s41, 0
      %p470 = por %p468, %p469
      %p471 = scmp.ne.s32.totalorder %s459, %s460
      %p472 = scmp.eq.s32.totalorder %s42, 3
      %p473 = por %p471, %p472
      %p475 = scmp.ne.s32.totalorder %s460, %s474
      %p476 = scmp.eq.s32.totalorder %s42, 0
      %p477 = por %p475, %p476
      %s479 = sadd.s32 %s478, 1
      %p482 = scmp.eq.s32.totalorder %s36, 3
      %p483 = scmp.ne.s32.totalorder %s478, %s480
      %p484 = scmp.eq.s32.totalorder %s36, 0
      %p485 = por %p483, %p484
      %p486 = scmp.ne.s32.totalorder %s478, %s480
      %p487 = scmp.eq.s32.totalorder %s41, 3
      %p488 = por %p486, %p487
      %p489 = scmp.ne.s32.totalorder %s480, %s481
      %p490 = scmp.eq.s32.totalorder %s41, 0
      %p491 = por %p489, %p490
      %p492 = scmp.ne.s32.totalorder %s480, %s481
      %p493 = scmp.eq.s32.totalorder %s42, 3
      %p494 = por %p492, %p493
      %p496 = scmp.ne.s32.totalorder %s481, %s495
      %p497 = scmp.eq.s32.totalorder %s42, 0
      %p498 = por %p496, %p497
      %s499 = ssub.s32 %s43, %s55
      %p500 = scmp.eq.s32.totalorder %s499, 0
      %s502 = sadd.s32 %s501, 1
      %s503 = scalar_select %p500, %s501, %s502
      %p506 = pneg %p500
      %p507 = scmp.eq.s32.totalorder %s36, 3
      %p508 = por %p506, %p507
      %p509 = scmp.ne.s32.totalorder %s501, %s504
      %p510 = scmp.eq.s32.totalorder %s36, 0
      %p511 = por %p509, %p510
      %p512 = scmp.ne.s32.totalorder %s501, %s504
      %p513 = scmp.eq.s32.totalorder %s41, 3
      %p514 = por %p512, %p513
      %p515 = scmp.ne.s32.totalorder %s504, %s505
      %p516 = scmp.eq.s32.totalorder %s41, 0
      %p517 = por %p515, %p516
      %p518 = scmp.ne.s32.totalorder %s504, %s505
      %p519 = scmp.eq.s32.totalorder %s42, 3
      %p520 = por %p518, %p519
      %p522 = scmp.ne.s32.totalorder %s505, %s521
      %p523 = scmp.eq.s32.totalorder %s42, 0
      %p524 = por %p522, %p523
      %p525 = scmp.le.s32.totalorder 1, %s36
      %p526 = scmp.lt.s32.totalorder %s36, 5
      %p527 = pnand %p525, %p526
      %p528 = pneg %p527
      // Predicated region
      $region9: #{tpu_custom_call.1} parent=5 // pred_check
        _
      $region10: #{tpu_custom_call.1} parent=5 // pred_check_branch
        %530 = sbr.rel (%p527) target = $region12
      $region11: #{tpu_custom_call.1} parent=5 // pred_region
        %s531 = ssub.s32 %s36, 1
        // Predicated region
        $region13: #{tpu_custom_call.1} parent=11 // pred_check
          %p532 = pneg %p95
        $region14: #{tpu_custom_call.1} parent=11 // pred_check_branch
          %534 = sbr.rel (%p532) target = $region16
        $region15: #{tpu_custom_call.1} parent=11 // pred_region
          %s536 = ssub.s32 128, 128
          %537 = vsyncadd [#allocation6], %s536
          %s539 = sshll.u32 [#allocation5], 4
          %s540 = int_to_ptr.vmem [resolvable:$true] %s539
          %542 = dma.hbm_to_vmem [thread:$0]  %s2, 128, %s540, [#allocation6]
        $region16: #{tpu_custom_call.1} parent=11 // pred_fallthru
          _
        // Predicated region
        $region17: #{tpu_custom_call.1} parent=11 // pred_check
          %p543 = pneg %p116
        $region18: #{tpu_custom_call.1} parent=11 // pred_check_branch
          %545 = sbr.rel (%p543) target = $region20
        $region19: #{tpu_custom_call.1} parent=11 // pred_region
          %s547 = ssub.s32 128, 128
          %548 = vsyncadd [#allocation9], %s547
          %s550 = sshll.u32 [#allocation8], 4
          %s551 = int_to_ptr.vmem [resolvable:$true] %s550
          %553 = dma.hbm_to_vmem [thread:$0]  %s3, 128, %s551, [#allocation9]
        $region20: #{tpu_custom_call.1} parent=11 // pred_fallthru
          _
        // Predicated region
        $region21: #{tpu_custom_call.1} parent=11 // pred_check
          %p554 = pneg %p449
        $region22: #{tpu_custom_call.1} parent=11 // pred_check_branch
          %556 = sbr.rel (%p554) target = $region24
        $region23: #{tpu_custom_call.1} parent=11 // pred_region
          _
        $region24: #{tpu_custom_call.1} parent=11 // pred_fallthru
          _
        // Predicated region
        $region25: #{tpu_custom_call.1} parent=11 // pred_check
          %p557 = pneg %p470
        $region26: #{tpu_custom_call.1} parent=11 // pred_check_branch
          %559 = sbr.rel (%p557) target = $region28
        $region27: #{tpu_custom_call.1} parent=11 // pred_region
          _
        $region28: #{tpu_custom_call.1} parent=11 // pred_fallthru
          _
        // Predicated region
        $region29: #{tpu_custom_call.1} parent=11 // pred_check
          %p560 = pneg %p491
        $region30: #{tpu_custom_call.1} parent=11 // pred_check_branch
          %562 = sbr.rel (%p560) target = $region32
        $region31: #{tpu_custom_call.1} parent=11 // pred_region
          _
        $region32: #{tpu_custom_call.1} parent=11 // pred_fallthru
          _
      $region12: #{tpu_custom_call.1} parent=5 // pred_fallthru
        _
      %p563 = scmp.lt.s32.totalorder %s36, 4
      // Predicated region
      $region33: #{tpu_custom_call.1} parent=5 // pred_check
        %p564 = pneg %p563
      $region34: #{tpu_custom_call.1} parent=5 // pred_check_branch
        %566 = sbr.rel (%p564) target = $region36
      $region35: #{tpu_custom_call.1} parent=5 // pred_region
        // Predicated region
        $region37: #{tpu_custom_call.1} parent=35 // pred_check
          %p567 = pneg %p68
        $region38: #{tpu_custom_call.1} parent=35 // pred_check_branch
          %569 = sbr.rel (%p567) target = $region40
        $region39: #{tpu_custom_call.1} parent=35 // pred_region
          %p570 = scmp.lt.s32.totalorder %s43, 1
          %s571 = scalar_select %p570, %s43, 1
          %s572 = smul.addr %s571, 8
          %s573 = scalar_lea.vmem %s1, %s572
        $region40: #{tpu_custom_call.1} parent=35 // pred_fallthru
          _
        // Predicated region
        $region41: #{tpu_custom_call.1} parent=35 // pred_check
          %p574 = pneg %p136
        $region42: #{tpu_custom_call.1} parent=35 // pred_check_branch
          %576 = sbr.rel (%p574) target = $region44
        $region43: #{tpu_custom_call.1} parent=35 // pred_region
          %p577 = scmp.lt.s32.totalorder %s44, 1
          %s578 = scalar_select %p577, %s44, 1
          %s579 = scalar_lea.vmem %s4, %s578
        $region44: #{tpu_custom_call.1} parent=35 // pred_fallthru
          _
        // Predicated region
        $region45: #{tpu_custom_call.1} parent=35 // pred_check
          %p580 = pneg %p162
        $region46: #{tpu_custom_call.1} parent=35 // pred_check_branch
          %582 = sbr.rel (%p580) target = $region48
        $region47: #{tpu_custom_call.1} parent=35 // pred_region
          %s583 = sand.u32 %s36, 1
          %s584 = scalar_lea.sflag [#allocation6], %s583
          %s585 = sand.u32 %s152, 1
          %s586 = scalar_lea.vmem [#allocation10], %s585
          %s588 = ssub.s32 16, 16
          %589 = vsyncadd %s584, %s588
          %s590 = smul.addr %s44, 16
          %s591 = scalar_lea.hbm %s5, %s590
          %s593 = sshll.u32 %s586, 4
          %s594 = int_to_ptr.vmem [resolvable:$true] %s593
          %596 = dma.hbm_to_vmem [thread:$0]  %s591, 16, %s594, %s584
        $region48: #{tpu_custom_call.1} parent=35 // pred_fallthru
          _
        // Predicated region
        $region49: #{tpu_custom_call.1} parent=35 // pred_check
          %p597 = pneg %p188
        $region50: #{tpu_custom_call.1} parent=35 // pred_check_branch
          %599 = sbr.rel (%p597) target = $region52
        $region51: #{tpu_custom_call.1} parent=35 // pred_region
          %p600 = scmp.lt.s32.totalorder %s44, 1
          %s601 = scalar_select %p600, %s44, 1
          %s602 = smul.addr %s601, 12
          %s603 = smul.addr %s602, 4
          %s604 = scalar_lea.vmem %s6, %s603
        $region52: #{tpu_custom_call.1} parent=35 // pred_fallthru
          _
        // Predicated region
        $region53: #{tpu_custom_call.1} parent=35 // pred_check
          %p605 = pneg %p214
        $region54: #{tpu_custom_call.1} parent=35 // pred_check_branch
          %607 = sbr.rel (%p605) target = $region56
        $region55: #{tpu_custom_call.1} parent=35 // pred_region
          %p608 = scmp.lt.s32.totalorder %s44, 1
          %s609 = scalar_select %p608, %s44, 1
          %s610 = smul.addr %s609, 4
          %s611 = scalar_lea.vmem %s7, %s610
        $region56: #{tpu_custom_call.1} parent=35 // pred_fallthru
          _
        // Predicated region
        $region57: #{tpu_custom_call.1} parent=35 // pred_check
          %p612 = pneg %p240
        $region58: #{tpu_custom_call.1} parent=35 // pred_check_branch
          %614 = sbr.rel (%p612) target = $region60
        $region59: #{tpu_custom_call.1} parent=35 // pred_region
          %p615 = scmp.lt.s32.totalorder %s44, 1
          %s616 = scalar_select %p615, %s44, 1
          %s617 = smul.addr %s616, 4
          %s618 = smul.addr %s617, 4
          %s619 = scalar_lea.vmem %s8, %s618
        $region60: #{tpu_custom_call.1} parent=35 // pred_fallthru
          _
        // Predicated region
        $region61: #{tpu_custom_call.1} parent=35 // pred_check
          %p620 = pneg %p266
        $region62: #{tpu_custom_call.1} parent=35 // pred_check_branch
          %622 = sbr.rel (%p620) target = $region64
        $region63: #{tpu_custom_call.1} parent=35 // pred_region
          %s623 = sand.u32 %s36, 1
          %s624 = scalar_lea.sflag [#allocation6], %s623
          %s625 = sand.u32 %s256, 1
          %s626 = scalar_lea.vmem [#allocation11], %s625
          %s628 = ssub.s32 16, 16
          %629 = vsyncadd %s624, %s628
          %s630 = smul.addr %s44, 16
          %s631 = scalar_lea.hbm %s9, %s630
          %s633 = sshll.u32 %s626, 4
          %s634 = int_to_ptr.vmem [resolvable:$true] %s633
          %636 = dma.hbm_to_vmem [thread:$0]  %s631, 16, %s634, %s624
        $region64: #{tpu_custom_call.1} parent=35 // pred_fallthru
          _
        // Predicated region
        $region65: #{tpu_custom_call.1} parent=35 // pred_check
          %p637 = pneg %p292
        $region66: #{tpu_custom_call.1} parent=35 // pred_check_branch
          %639 = sbr.rel (%p637) target = $region68
        $region67: #{tpu_custom_call.1} parent=35 // pred_region
          %s640 = sand.u32 %s36, 1
          %s641 = scalar_lea.sflag [#allocation6], %s640
          %s642 = sand.u32 %s282, 1
          %s643 = scalar_lea.vmem [#allocation12], %s642
          %s645 = ssub.s32 16, 16
          %646 = vsyncadd %s641, %s645
          %s647 = smul.addr %s44, 16
          %s648 = scalar_lea.hbm %s10, %s647
          %s650 = sshll.u32 %s643, 4
          %s651 = int_to_ptr.vmem [resolvable:$true] %s650
          %653 = dma.hbm_to_vmem [thread:$0]  %s648, 16, %s651, %s641
        $region68: #{tpu_custom_call.1} parent=35 // pred_fallthru
          _
        // Predicated region
        $region69: #{tpu_custom_call.1} parent=35 // pred_check
          %p654 = pneg %p318
        $region70: #{tpu_custom_call.1} parent=35 // pred_check_branch
          %656 = sbr.rel (%p654) target = $region72
        $region71: #{tpu_custom_call.1} parent=35 // pred_region
          %s657 = sand.u32 %s36, 1
          %s658 = scalar_lea.sflag [#allocation6], %s657
          %s659 = sand.u32 %s308, 1
          %s660 = scalar_lea.vmem [#allocation13], %s659
          %s662 = ssub.s32 16, 16
          %663 = vsyncadd %s658, %s662
          %s664 = smul.addr %s44, 16
          %s665 = scalar_lea.hbm %s11, %s664
          %s667 = sshll.u32 %s660, 4
          %s668 = int_to_ptr.vmem [resolvable:$true] %s667
          %670 = dma.hbm_to_vmem [thread:$0]  %s665, 16, %s668, %s658
        $region72: #{tpu_custom_call.1} parent=35 // pred_fallthru
          _
        // Predicated region
        $region73: #{tpu_custom_call.1} parent=35 // pred_check
          %p671 = pneg %p344
        $region74: #{tpu_custom_call.1} parent=35 // pred_check_branch
          %673 = sbr.rel (%p671) target = $region76
        $region75: #{tpu_custom_call.1} parent=35 // pred_region
          %p674 = scmp.lt.s32.totalorder %s44, 1
          %s675 = scalar_select %p674, %s44, 1
          %s676 = smul.addr %s675, 4
          %s677 = smul.addr %s676, 4
          %s678 = scalar_lea.vmem %s12, %s677
        $region76: #{tpu_custom_call.1} parent=35 // pred_fallthru
          _
        // Predicated region
        $region77: #{tpu_custom_call.1} parent=35 // pred_check
          %p679 = pneg %p370
        $region78: #{tpu_custom_call.1} parent=35 // pred_check_branch
          %681 = sbr.rel (%p679) target = $region80
        $region79: #{tpu_custom_call.1} parent=35 // pred_region
          %s682 = sand.u32 %s36, 1
          %s683 = scalar_lea.sflag [#allocation6], %s682
          %s684 = sand.u32 %s360, 1
          %s685 = scalar_lea.vmem [#allocation14], %s684
          %s687 = ssub.s32 16, 16
          %688 = vsyncadd %s683, %s687
          %s689 = smul.addr %s44, 16
          %s690 = scalar_lea.hbm %s13, %s689
          %s692 = sshll.u32 %s685, 4
          %s693 = int_to_ptr.vmem [resolvable:$true] %s692
          %695 = dma.hbm_to_vmem [thread:$0]  %s690, 16, %s693, %s683
        $region80: #{tpu_custom_call.1} parent=35 // pred_fallthru
          _
        // Predicated region
        $region81: #{tpu_custom_call.1} parent=35 // pred_check
          %p696 = pneg %p396
        $region82: #{tpu_custom_call.1} parent=35 // pred_check_branch
          %698 = sbr.rel (%p696) target = $region84
        $region83: #{tpu_custom_call.1} parent=35 // pred_region
          %p699 = scmp.lt.s32.totalorder %s44, 1
          %s700 = scalar_select %p699, %s44, 1
          %s701 = smul.addr %s700, 16
          %s702 = smul.addr %s701, 4
          %s703 = scalar_lea.vmem %s14, %s702
        $region84: #{tpu_custom_call.1} parent=35 // pred_fallthru
          _
        // Predicated region
        $region85: #{tpu_custom_call.1} parent=35 // pred_check
          %p704 = pneg %p422
        $region86: #{tpu_custom_call.1} parent=35 // pred_check_branch
          %706 = sbr.rel (%p704) target = $region88
        $region87: #{tpu_custom_call.1} parent=35 // pred_region
          %p707 = scmp.lt.s32.totalorder %s44, 1
          %s708 = scalar_select %p707, %s44, 1
          %s709 = scalar_lea.vmem %s15, %s708
        $region88: #{tpu_custom_call.1} parent=35 // pred_fallthru
          _
      $region36: #{tpu_custom_call.1} parent=5 // pred_fallthru
        _
      %p710 = scmp.le.s32.totalorder 1, %s36
      %p711 = scmp.lt.s32.totalorder %s36, 5
      %p712 = pnand %p710, %p711
      %p713 = pneg %p712
      // Predicated region
      $region89: #{tpu_custom_call.1} parent=5 // pred_check
        _
      $region90: #{tpu_custom_call.1} parent=5 // pred_check_branch
        %715 = sbr.rel (%p712) target = $region92
      $region91: #{tpu_custom_call.1} parent=5 // pred_region
        %s716 = ssub.s32 %s36, 1
        // Predicated region
        $region93: #{tpu_custom_call.1} parent=91 // pred_check
          %p717 = pneg %p95
        $region94: #{tpu_custom_call.1} parent=91 // pred_check_branch
          %719 = sbr.rel (%p717) target = $region96
        $region95: #{tpu_custom_call.1} parent=91 // pred_region
          %720 = dma.done [#allocation6], 128
        $region96: #{tpu_custom_call.1} parent=91 // pred_fallthru
          _
        // Predicated region
        $region97: #{tpu_custom_call.1} parent=91 // pred_check
          %p721 = pneg %p116
        $region98: #{tpu_custom_call.1} parent=91 // pred_check_branch
          %723 = sbr.rel (%p721) target = $region100
        $region99: #{tpu_custom_call.1} parent=91 // pred_region
          %724 = dma.done [#allocation9], 128
        $region100: #{tpu_custom_call.1} parent=91 // pred_fallthru
          _
        %s725 = sand.u32 %s41, 1
        %s726 = scalar_lea.sflag [#allocation6], %s725
        %s727 = sand.u32 %s155, 1
        %s728 = scalar_lea.vmem [#allocation10], %s727
        // Predicated region
        $region101: #{tpu_custom_call.1} parent=91 // pred_check
          %p729 = pneg %p168
        $region102: #{tpu_custom_call.1} parent=91 // pred_check_branch
          %731 = sbr.rel (%p729) target = $region104
        $region103: #{tpu_custom_call.1} parent=91 // pred_region
          %732 = dma.done %s726, 16
        $region104: #{tpu_custom_call.1} parent=91 // pred_fallthru
          _
        %s733 = sand.u32 %s41, 1
        %s734 = scalar_lea.sflag [#allocation6], %s733
        %s735 = sand.u32 %s259, 1
        %s736 = scalar_lea.vmem [#allocation11], %s735
        // Predicated region
        $region105: #{tpu_custom_call.1} parent=91 // pred_check
          %p737 = pneg %p272
        $region106: #{tpu_custom_call.1} parent=91 // pred_check_branch
          %739 = sbr.rel (%p737) target = $region108
        $region107: #{tpu_custom_call.1} parent=91 // pred_region
          %740 = dma.done %s734, 16
        $region108: #{tpu_custom_call.1} parent=91 // pred_fallthru
          _
        %s741 = sand.u32 %s41, 1
        %s742 = scalar_lea.sflag [#allocation6], %s741
        %s743 = sand.u32 %s285, 1
        %s744 = scalar_lea.vmem [#allocation12], %s743
        // Predicated region
        $region109: #{tpu_custom_call.1} parent=91 // pred_check
          %p745 = pneg %p298
        $region110: #{tpu_custom_call.1} parent=91 // pred_check_branch
          %747 = sbr.rel (%p745) target = $region112
        $region111: #{tpu_custom_call.1} parent=91 // pred_region
          %748 = dma.done %s742, 16
        $region112: #{tpu_custom_call.1} parent=91 // pred_fallthru
          _
        %s749 = sand.u32 %s41, 1
        %s750 = scalar_lea.sflag [#allocation6], %s749
        %s751 = sand.u32 %s311, 1
        %s752 = scalar_lea.vmem [#allocation13], %s751
        // Predicated region
        $region113: #{tpu_custom_call.1} parent=91 // pred_check
          %p753 = pneg %p324
        $region114: #{tpu_custom_call.1} parent=91 // pred_check_branch
          %755 = sbr.rel (%p753) target = $region116
        $region115: #{tpu_custom_call.1} parent=91 // pred_region
          %756 = dma.done %s750, 16
        $region116: #{tpu_custom_call.1} parent=91 // pred_fallthru
          _
        %s757 = sand.u32 %s41, 1
        %s758 = scalar_lea.sflag [#allocation6], %s757
        %s759 = sand.u32 %s363, 1
        %s760 = scalar_lea.vmem [#allocation14], %s759
        // Predicated region
        $region117: #{tpu_custom_call.1} parent=91 // pred_check
          %p761 = pneg %p376
        $region118: #{tpu_custom_call.1} parent=91 // pred_check_branch
          %763 = sbr.rel (%p761) target = $region120
        $region119: #{tpu_custom_call.1} parent=91 // pred_region
          %764 = dma.done %s758, 16
        $region120: #{tpu_custom_call.1} parent=91 // pred_fallthru
          _
        %p765 = scmp.lt.s32.totalorder %s45, 1
        %s766 = scalar_select %p765, %s45, 1
        %s767 = smul.addr %s766, 8
        %s768 = scalar_lea.vmem %s1, %s767
        %p769 = pneg %p74
        %p770 = pneg %p71
        %p771 = pneg %p95
        %p772 = pneg %p92
        %p773 = pneg %p116
        %p774 = pneg %p113
        %p775 = scmp.lt.s32.totalorder %s46, 1
        %s776 = scalar_select %p775, %s46, 1
        %s777 = scalar_lea.vmem %s4, %s776
        %p778 = pneg %p142
        %p779 = pneg %p139
        %s780 = sand.u32 %s41, 1
        %s781 = scalar_lea.sflag [#allocation6], %s780
        %s782 = sand.u32 %s155, 1
        %s783 = scalar_lea.vmem [#allocation10], %s782
        %p784 = pneg %p168
        %p785 = pneg %p165
        %p786 = scmp.lt.s32.totalorder %s46, 1
        %s787 = scalar_select %p786, %s46, 1
        %s788 = smul.addr %s787, 12
        %s789 = smul.addr %s788, 4
        %s790 = scalar_lea.vmem %s6, %s789
        %p791 = pneg %p194
        %p792 = pneg %p191
        %p793 = scmp.lt.s32.totalorder %s46, 1
        %s794 = scalar_select %p793, %s46, 1
        %s795 = smul.addr %s794, 4
        %s796 = scalar_lea.vmem %s7, %s795
        %p797 = pneg %p220
        %p798 = pneg %p217
        %p799 = scmp.lt.s32.totalorder %s46, 1
        %s800 = scalar_select %p799, %s46, 1
        %s801 = smul.addr %s800, 4
        %s802 = smul.addr %s801, 4
        %s803 = scalar_lea.vmem %s8, %s802
        %p804 = pneg %p246
        %p805 = pneg %p243
        %s806 = sand.u32 %s41, 1
        %s807 = scalar_lea.sflag [#allocation6], %s806
        %s808 = sand.u32 %s259, 1
        %s809 = scalar_lea.vmem [#allocation11], %s808
        %p810 = pneg %p272
        %p811 = pneg %p269
        %s812 = sand.u32 %s41, 1
        %s813 = scalar_lea.sflag [#allocation6], %s812
        %s814 = sand.u32 %s285, 1
        %s815 = scalar_lea.vmem [#allocation12], %s814
        %p816 = pneg %p298
        %p817 = pneg %p295
        %s818 = sand.u32 %s41, 1
        %s819 = scalar_lea.sflag [#allocation6], %s818
        %s820 = sand.u32 %s311, 1
        %s821 = scalar_lea.vmem [#allocation13], %s820
        %p822 = pneg %p324
        %p823 = pneg %p321
        %p824 = scmp.lt.s32.totalorder %s46, 1
        %s825 = scalar_select %p824, %s46, 1
        %s826 = smul.addr %s825, 4
        %s827 = smul.addr %s826, 4
        %s828 = scalar_lea.vmem %s12, %s827
        %p829 = pneg %p350
        %p830 = pneg %p347
        %s831 = sand.u32 %s41, 1
        %s832 = scalar_lea.sflag [#allocation6], %s831
        %s833 = sand.u32 %s363, 1
        %s834 = scalar_lea.vmem [#allocation14], %s833
        %p835 = pneg %p376
        %p836 = pneg %p373
        %p837 = scmp.lt.s32.totalorder %s46, 1
        %s838 = scalar_select %p837, %s46, 1
        %s839 = smul.addr %s838, 16
        %s840 = smul.addr %s839, 4
        %s841 = scalar_lea.vmem %s14, %s840
        %p842 = pneg %p402
        %p843 = pneg %p399
        %p844 = scmp.lt.s32.totalorder %s46, 1
        %s845 = scalar_select %p844, %s46, 1
        %s846 = scalar_lea.vmem %s15, %s845
        %p847 = pneg %p428
        %p848 = pneg %p425
        %p849 = pneg %p449
        %p850 = pneg %p446
        %p851 = pneg %p470
        %p852 = pneg %p467
        %p853 = pneg %p491
        %p854 = pneg %p488
        %p855 = pneg %p517
        %p856 = pneg %p514
        %s857 = sand.u32 %s504, 1
        %s858 = scalar_lea.sflag [#allocation7], %s857
        %s859 = sand.u32 %s504, 1
        %s860 = smul.addr %s859, 8
        %s861 = scalar_lea.vmem [#allocation15], %s860
        %p862 = scmp.lt.s32.totalorder %s45, 1
        %s863 = scalar_select %p862, %s45, 1
        %s864 = smul.addr %s863, 8
        %s865 = scalar_lea.vmem %s1, %s864
        %p866 = scmp.lt.s32.totalorder %s46, 1
        %s867 = scalar_select %p866, %s46, 1
        %s868 = scalar_lea.vmem %s4, %s867
        %p869 = scmp.lt.s32.totalorder %s46, 1
        %s870 = scalar_select %p869, %s46, 1
        %s871 = smul.addr %s870, 12
        %s872 = smul.addr %s871, 4
        %s873 = scalar_lea.vmem %s6, %s872
        %p874 = scmp.lt.s32.totalorder %s46, 1
        %s875 = scalar_select %p874, %s46, 1
        %s876 = smul.addr %s875, 4
        %s877 = scalar_lea.vmem %s7, %s876
        %p878 = scmp.lt.s32.totalorder %s46, 1
        %s879 = scalar_select %p878, %s46, 1
        %s880 = smul.addr %s879, 4
        %s881 = smul.addr %s880, 4
        %s882 = scalar_lea.vmem %s8, %s881
        %p883 = scmp.lt.s32.totalorder %s46, 1
        %s884 = scalar_select %p883, %s46, 1
        %s885 = smul.addr %s884, 4
        %s886 = smul.addr %s885, 4
        %s887 = scalar_lea.vmem %s12, %s886
        %p888 = scmp.lt.s32.totalorder %s46, 1
        %s889 = scalar_select %p888, %s46, 1
        %s890 = smul.addr %s889, 16
        %s891 = smul.addr %s890, 4
        %s892 = scalar_lea.vmem %s14, %s891
        %p893 = scmp.lt.s32.totalorder %s46, 1
        %s894 = scalar_select %p893, %s46, 1
        %s895 = scalar_lea.vmem %s15, %s894
        %p897 = scmp.eq.s32.totalorder %s46, 0
        // Predicated region
        $region121: #{tpu_custom_call.1} parent=91 // pred_check
          %p898 = pneg %p897
        $region122: #{tpu_custom_call.1} parent=91 // pred_check_branch
          %900 = sbr.rel (%p898) target = $region124
        $region123: #{tpu_custom_call.1} parent=91 // pred_region
          %v901 = vld [vmem:[%s865] sm:$0xff]
          %v902 = vld [vmem:[#allocation5] sm:$0xff]
          %v903 = vadd.f32 %v901, %v902
          %vm904 = vcmask 261120
          %905 = vst.msk [vmem:[#allocation2] sm:$0xff] %vm904, %v903
        $region124: #{tpu_custom_call.1} parent=91 // pred_fallthru
          _
        %v906 = vld [vmem:[#allocation2] sm:$0xff]
        %v907 = vld [vmem:[%s868] sm:$0x1]
        %v908 = vld [vmem:[%s728] sm:$0x1]
        %vm909 = vcmask 261120
        %v910 = vsel %vm909, %v906, 0.0
        %911 = vadd.xlane.f32.xlu0 %v910
        %v912 = vpop.xlane.xlu0 %911
        %v913 = vrcp.pop 32.0
        %v914 = vmul.f32 %v912, %v913
        %v915 = vsub.f32 %v906, %v914
        %v916 = vmul.f32 %v915, %v915
        %v917 = vsel %vm909, %v916, 0.0
        %918 = vadd.xlane.f32.xlu0 %v917
        %v919 = vpop.xlane.xlu0 %918
        %v920 = vmul.f32 %v919, %v913
        %v921 = vadd.f32 %v920, 1e-05
        %v922 = vrsqrt.pop %v921
        %v923 = vmul.f32 %v915, %v922
        %v925 = vlaneseq
        %v926 = vshrl.u32 %v925, 7
        %v927 = vsub.s32 0, %v926
        %v928 = vrot.slane %v907, %v927
        %v930 = vmul.f32 %v923, %v928
        %v932 = vlaneseq
        %v933 = vshrl.u32 %v932, 7
        %v934 = vsub.s32 0, %v933
        %v935 = vrot.slane %v908, %v934
        %v937 = vadd.f32 %v930, %v935
        %v938 = vpack.c.bf16 %v937, %v937
        %v939 = vld [vmem:[%s873] sm:$0xf]
        %v940 = vld [vmem:[%s873 + $0x4] sm:$0xf]
        %v941 = vld [vmem:[%s873 + $0x8] sm:$0xf]
        %v942 = vld [vmem:[%s873 + $0xc] sm:$0xf]
        %v943 = vld [vmem:[%s877] sm:$0x1]
        %v944 = vlaneseq
        %v945 = vshrl.u32 %v944, 7
        %v946 = vsub.s32 0, %v945
        %v947 = vrot.slane %v943, %v946
        %v952 = vunpack.c.l.b16 %v939
        %v953 = vunpack.c.l.b16 %v940
        %v954 = vunpack.c.l.b16 %v941
        %v955 = vunpack.c.l.b16 %v942
        %v956 = vpack.c.b16 %v953, %v952
        %v957 = vpack.c.b16 %v955, %v954
        %v961 = vsel %vm909, %v938, 0
        %963 = vmatprep.subr.bf16.mxu0 0
        %964 = vmatpush1.bf16.msra.mxu0 %v956
        %965 = vmatprep.subr.bf16.mxu0 0
        %966 = vmatpush1.bf16.msra.mxu0 %v957
        %967 = vmatprep.subr.bf16.mxu0 0
        %968 = vmatpush1.bf16.msra.mxu0 0
        %969 = vmatprep.subr.bf16.mxu0 0
        %970 = vmatpush1.bf16.msra.mxu0 0
        %971 = vmatprep.subr.bf16.mxu0 0
        %972 = vmatpush1.bf16.msra.mxu0 0
        %973 = vmatprep.subr.bf16.mxu0 0
        %974 = vmatpush1.bf16.msra.mxu0 0
        %975 = vmatprep.subr.bf16.mxu0 0
        %976 = vmatpush1.bf16.msra.mxu0 0
        %977 = vmatprep.subr.bf16.mxu0 0
        %978 = vmatpush1.bf16.msra.mxu0 0
        %979 = vmatprep.subr.bf16.mxu0 0
        %980 = vmatpush1.bf16.msra.mxu0 0
        %981 = vmatprep.subr.bf16.mxu0 0
        %982 = vmatpush1.bf16.msra.mxu0 0
        %983 = vmatprep.subr.bf16.mxu0 0
        %984 = vmatpush1.bf16.msra.mxu0 0
        %985 = vmatprep.subr.bf16.mxu0 0
        %986 = vmatpush1.bf16.msra.mxu0 0
        %987 = vmatprep.subr.bf16.mxu0 0
        %988 = vmatpush1.bf16.msra.mxu0 0
        %989 = vmatprep.subr.bf16.mxu0 0
        %990 = vmatpush1.bf16.msra.mxu0 0
        %991 = vmatprep.subr.bf16.mxu0 0
        %992 = vmatpush1.bf16.msra.mxu0 0
        %993 = vmatprep.subr.bf16.mxu0 0
        %994 = vmatpush1.bf16.msra.mxu0 0
        %995 = vmatprep.mubr.bf16.mxu0 0
        %996 = vmatmul.mubr.bf16.gmra.mrb[0].mxu0 %v961
        %v997 = vpop.f32.mrb[0].mxu0
        %v998 = vadd.f32 %v947, %v997
        %v999 = vpop.f32.mrb[0].mxu0
        %v1000 = vpop.f32.mrb[0].mxu0
        %v1001 = vpop.f32.mrb[0].mxu0
        %1002 = vdwg.mxu0
        %s1003 = scalar_lea.vmem %s873, 16
        %v1004 = vld [vmem:[%s1003] sm:$0xf]
        %v1005 = vld [vmem:[%s1003 + $0x4] sm:$0xf]
        %v1006 = vld [vmem:[%s1003 + $0x8] sm:$0xf]
        %v1007 = vld [vmem:[%s1003 + $0xc] sm:$0xf]
        %v1008 = vld [vmem:[%s877 + $0x1] sm:$0x1]
        %v1009 = vlaneseq
        %v1010 = vshrl.u32 %v1009, 7
        %v1011 = vsub.s32 0, %v1010
        %v1012 = vrot.slane %v1008, %v1011
        %v1017 = vunpack.c.l.b16 %v1004
        %v1018 = vunpack.c.l.b16 %v1005
        %v1019 = vunpack.c.l.b16 %v1006
        %v1020 = vunpack.c.l.b16 %v1007
        %v1021 = vpack.c.b16 %v1018, %v1017
        %v1022 = vpack.c.b16 %v1020, %v1019
        %1025 = vmatprep.subr.bf16.mxu0 0
        %1026 = vmatpush1.bf16.msra.mxu0 %v1021
        %1027 = vmatprep.subr.bf16.mxu0 0
        %1028 = vmatpush1.bf16.msra.mxu0 %v1022
        %1029 = vmatprep.subr.bf16.mxu0 0
        %1030 = vmatpush1.bf16.msra.mxu0 0
        %1031 = vmatprep.subr.bf16.mxu0 0
        %1032 = vmatpush1.bf16.msra.mxu0 0
        %1033 = vmatprep.subr.bf16.mxu0 0
        %1034 = vmatpush1.bf16.msra.mxu0 0
        %1035 = vmatprep.subr.bf16.mxu0 0
        %1036 = vmatpush1.bf16.msra.mxu0 0
        %1037 = vmatprep.subr.bf16.mxu0 0
        %1038 = vmatpush1.bf16.msra.mxu0 0
        %1039 = vmatprep.subr.bf16.mxu0 0
        %1040 = vmatpush1.bf16.msra.mxu0 0
        %1041 = vmatprep.subr.bf16.mxu0 0
        %1042 = vmatpush1.bf16.msra.mxu0 0
        %1043 = vmatprep.subr.bf16.mxu0 0
        %1044 = vmatpush1.bf16.msra.mxu0 0
        %1045 = vmatprep.subr.bf16.mxu0 0
        %1046 = vmatpush1.bf16.msra.mxu0 0
        %1047 = vmatprep.subr.bf16.mxu0 0
        %1048 = vmatpush1.bf16.msra.mxu0 0
        %1049 = vmatprep.subr.bf16.mxu0 0
        %1050 = vmatpush1.bf16.msra.mxu0 0
        %1051 = vmatprep.subr.bf16.mxu0 0
        %1052 = vmatpush1.bf16.msra.mxu0 0
        %1053 = vmatprep.subr.bf16.mxu0 0
        %1054 = vmatpush1.bf16.msra.mxu0 0
        %1055 = vmatprep.subr.bf16.mxu0 0
        %1056 = vmatpush1.bf16.msra.mxu0 0
        %1057 = vmatprep.mubr.bf16.mxu0 0
        %1058 = vmatmul.mubr.bf16.gmra.mrb[0].mxu0 %v961
        %v1059 = vpop.f32.mrb[0].mxu0
        %v1060 = vadd.f32 %v1012, %v1059
        %v1061 = vpop.f32.mrb[0].mxu0
        %v1062 = vpop.f32.mrb[0].mxu0
        %v1063 = vpop.f32.mrb[0].mxu0
        %1064 = vdwg.mxu0
        %s1065 = scalar_lea.vmem %s873, 32
        %v1066 = vld [vmem:[%s1065] sm:$0xf]
        %v1067 = vld [vmem:[%s1065 + $0x4] sm:$0xf]
        %v1068 = vld [vmem:[%s1065 + $0x8] sm:$0xf]
        %v1069 = vld [vmem:[%s1065 + $0xc] sm:$0xf]
        %v1070 = vld [vmem:[%s877 + $0x2] sm:$0x1]
        %v1071 = vlaneseq
        %v1072 = vshrl.u32 %v1071, 7
        %v1073 = vsub.s32 0, %v1072
        %v1074 = vrot.slane %v1070, %v1073
        %v1079 = vunpack.c.l.b16 %v1066
        %v1080 = vunpack.c.l.b16 %v1067
        %v1081 = vunpack.c.l.b16 %v1068
        %v1082 = vunpack.c.l.b16 %v1069
        %v1083 = vpack.c.b16 %v1080, %v1079
        %v1084 = vpack.c.b16 %v1082, %v1081
        %1087 = vmatprep.subr.bf16.mxu0 0
        %1088 = vmatpush1.bf16.msra.mxu0 %v1083
        %1089 = vmatprep.subr.bf16.mxu0 0
        %1090 = vmatpush1.bf16.msra.mxu0 %v1084
        %1091 = vmatprep.subr.bf16.mxu0 0
        %1092 = vmatpush1.bf16.msra.mxu0 0
        %1093 = vmatprep.subr.bf16.mxu0 0
        %1094 = vmatpush1.bf16.msra.mxu0 0
        %1095 = vmatprep.subr.bf16.mxu0 0
        %1096 = vmatpush1.bf16.msra.mxu0 0
        %1097 = vmatprep.subr.bf16.mxu0 0
        %1098 = vmatpush1.bf16.msra.mxu0 0
        %1099 = vmatprep.subr.bf16.mxu0 0
        %1100 = vmatpush1.bf16.msra.mxu0 0
        %1101 = vmatprep.subr.bf16.mxu0 0
        %1102 = vmatpush1.bf16.msra.mxu0 0
        %1103 = vmatprep.subr.bf16.mxu0 0
        %1104 = vmatpush1.bf16.msra.mxu0 0
        %1105 = vmatprep.subr.bf16.mxu0 0
        %1106 = vmatpush1.bf16.msra.mxu0 0
        %1107 = vmatprep.subr.bf16.mxu0 0
        %1108 = vmatpush1.bf16.msra.mxu0 0
        %1109 = vmatprep.subr.bf16.mxu0 0
        %1110 = vmatpush1.bf16.msra.mxu0 0
        %1111 = vmatprep.subr.bf16.mxu0 0
        %1112 = vmatpush1.bf16.msra.mxu0 0
        %1113 = vmatprep.subr.bf16.mxu0 0
        %1114 = vmatpush1.bf16.msra.mxu0 0
        %1115 = vmatprep.subr.bf16.mxu0 0
        %1116 = vmatpush1.bf16.msra.mxu0 0
        %1117 = vmatprep.subr.bf16.mxu0 0
        %1118 = vmatpush1.bf16.msra.mxu0 0
        %1119 = vmatprep.mubr.bf16.mxu0 0
        %1120 = vmatmul.mubr.bf16.gmra.mrb[0].mxu0 %v961
        %v1121 = vpop.f32.mrb[0].mxu0
        %v1122 = vadd.f32 %v1074, %v1121
        %v1123 = vpop.f32.mrb[0].mxu0
        %v1124 = vpop.f32.mrb[0].mxu0
        %v1125 = vpop.f32.mrb[0].mxu0
        %1126 = vdwg.mxu0
        %1128 = vrot.lane.b32.xlu0 %v998, 120
        %v1129 = vpop.permute.xlu0 %1128
        %1131 = vrot.lane.b32.xlu0 %v998, 112
        %v1132 = vpop.permute.xlu0 %1131
        %1134 = vrot.lane.b32.xlu0 %v998, 104
        %v1135 = vpop.permute.xlu0 %1134
        %v1137 = vcombine.low %v998, %v1132
        %v1138 = vcombine.high %v998, %v1132
        %v1140 = vunpack.c.l.s4 1983009808
        %v1141 = vunpack.c.0.s8 %v1140
        %v1142 = vlaneseq
        %v1143 = vshrl.u32 %v1142, 7
        %v1144 = vsub.s32 %v1141, %v1143
        %v1145 = vrot.slane %v1137, %v1144
        %v1147 = vunpack.c.l.s4 1983009808
        %v1148 = vunpack.c.0.s8 %v1147
        %v1149 = vlaneseq
        %v1150 = vshrl.u32 %v1149, 7
        %v1151 = vsub.s32 %v1148, %v1150
        %v1152 = vrot.slane %v1138, %v1151
        %v1153 = vcombine.low %v1129, %v1135
        %v1154 = vcombine.high %v1129, %v1135
        %v1156 = vunpack.c.l.s4 1983009808
        %v1157 = vunpack.c.0.s8 %v1156
        %v1158 = vlaneseq
        %v1159 = vshrl.u32 %v1158, 7
        %v1160 = vsub.s32 %v1157, %v1159
        %v1161 = vrot.slane %v1153, %v1160
        %v1163 = vunpack.c.l.s4 1983009808
        %v1164 = vunpack.c.0.s8 %v1163
        %v1165 = vlaneseq
        %v1166 = vshrl.u32 %v1165, 7
        %v1167 = vsub.s32 %v1164, %v1166
        %v1168 = vrot.slane %v1154, %v1167
        %v1169 = vcombine.low %v1145, %v1161
        %v1170 = vcombine.high %v1145, %v1161
        %v1172 = vunpack.c.l.s4 1934713408
        %v1173 = vunpack.c.0.s8 %v1172
        %v1174 = vlaneseq
        %v1175 = vshrl.u32 %v1174, 7
        %v1176 = vsub.s32 %v1173, %v1175
        %v1177 = vrot.slane %v1169, %v1176
        %v1179 = vunpack.c.l.s4 1934713408
        %v1180 = vunpack.c.0.s8 %v1179
        %v1181 = vlaneseq
        %v1182 = vshrl.u32 %v1181, 7
        %v1183 = vsub.s32 %v1180, %v1182
        %v1184 = vrot.slane %v1170, %v1183
        %v1185 = vcombine.low %v1152, %v1168
        %v1186 = vcombine.high %v1152, %v1168
        %v1188 = vunpack.c.l.s4 1934713408
        %v1189 = vunpack.c.0.s8 %v1188
        %v1190 = vlaneseq
        %v1191 = vshrl.u32 %v1190, 7
        %v1192 = vsub.s32 %v1189, %v1191
        %v1193 = vrot.slane %v1185, %v1192
        %v1195 = vunpack.c.l.s4 1934713408
        %v1196 = vunpack.c.0.s8 %v1195
        %v1197 = vlaneseq
        %v1198 = vshrl.u32 %v1197, 7
        %v1199 = vsub.s32 %v1196, %v1198
        %v1200 = vrot.slane %v1186, %v1199
        %v1201 = vcombine.high %v1177, 0.0
        %v1202 = vcombine.high %v1184, 0.0
        %v1203 = vcombine.high %v1193, 0.0
        %v1204 = vcombine.high %v1200, 0.0
        %v1205 = vpack.c.bf16 %v1177, %v1177
        %v1206 = vpack.c.bf16 %v1201, %v1201
        %v1207 = vpack.c.bf16 %v1184, %v1184
        %v1208 = vpack.c.bf16 %v1202, %v1202
        %v1209 = vpack.c.bf16 %v1193, %v1193
        %v1210 = vpack.c.bf16 %v1203, %v1203
        %v1211 = vpack.c.bf16 %v1200, %v1200
        %v1212 = vpack.c.bf16 %v1204, %v1204
        %1214 = vrot.lane.b32.xlu0 %v1060, 120
        %v1215 = vpop.permute.xlu0 %1214
        %1217 = vrot.lane.b32.xlu0 %v1060, 112
        %v1218 = vpop.permute.xlu0 %1217
        %1220 = vrot.lane.b32.xlu0 %v1060, 104
        %v1221 = vpop.permute.xlu0 %1220
        %v1223 = vcombine.low %v1060, %v1218
        %v1224 = vcombine.high %v1060, %v1218
        %v1226 = vunpack.c.l.s4 1983009808
        %v1227 = vunpack.c.0.s8 %v1226
        %v1228 = vlaneseq
        %v1229 = vshrl.u32 %v1228, 7
        %v1230 = vsub.s32 %v1227, %v1229
        %v1231 = vrot.slane %v1223, %v1230
        %v1233 = vunpack.c.l.s4 1983009808
        %v1234 = vunpack.c.0.s8 %v1233
        %v1235 = vlaneseq
        %v1236 = vshrl.u32 %v1235, 7
        %v1237 = vsub.s32 %v1234, %v1236
        %v1238 = vrot.slane %v1224, %v1237
        %v1239 = vcombine.low %v1215, %v1221
        %v1240 = vcombine.high %v1215, %v1221
        %v1242 = vunpack.c.l.s4 1983009808
        %v1243 = vunpack.c.0.s8 %v1242
        %v1244 = vlaneseq
        %v1245 = vshrl.u32 %v1244, 7
        %v1246 = vsub.s32 %v1243, %v1245
        %v1247 = vrot.slane %v1239, %v1246
        %v1249 = vunpack.c.l.s4 1983009808
        %v1250 = vunpack.c.0.s8 %v1249
        %v1251 = vlaneseq
        %v1252 = vshrl.u32 %v1251, 7
        %v1253 = vsub.s32 %v1250, %v1252
        %v1254 = vrot.slane %v1240, %v1253
        %v1255 = vcombine.low %v1231, %v1247
        %v1256 = vcombine.high %v1231, %v1247
        %v1258 = vunpack.c.l.s4 1934713408
        %v1259 = vunpack.c.0.s8 %v1258
        %v1260 = vlaneseq
        %v1261 = vshrl.u32 %v1260, 7
        %v1262 = vsub.s32 %v1259, %v1261
        %v1263 = vrot.slane %v1255, %v1262
        %v1265 = vunpack.c.l.s4 1934713408
        %v1266 = vunpack.c.0.s8 %v1265
        %v1267 = vlaneseq
        %v1268 = vshrl.u32 %v1267, 7
        %v1269 = vsub.s32 %v1266, %v1268
        %v1270 = vrot.slane %v1256, %v1269
        %v1271 = vcombine.low %v1238, %v1254
        %v1272 = vcombine.high %v1238, %v1254
        %v1274 = vunpack.c.l.s4 1934713408
        %v1275 = vunpack.c.0.s8 %v1274
        %v1276 = vlaneseq
        %v1277 = vshrl.u32 %v1276, 7
        %v1278 = vsub.s32 %v1275, %v1277
        %v1279 = vrot.slane %v1271, %v1278
        %v1281 = vunpack.c.l.s4 1934713408
        %v1282 = vunpack.c.0.s8 %v1281
        %v1283 = vlaneseq
        %v1284 = vshrl.u32 %v1283, 7
        %v1285 = vsub.s32 %v1282, %v1284
        %v1286 = vrot.slane %v1272, %v1285
        %v1287 = vcombine.high %v1263, 0.0
        %v1288 = vcombine.high %v1270, 0.0
        %v1289 = vcombine.high %v1279, 0.0
        %v1290 = vcombine.high %v1286, 0.0
        %v1291 = vpack.c.bf16 %v1263, %v1263
        %v1292 = vpack.c.bf16 %v1287, %v1287
        %v1293 = vpack.c.bf16 %v1270, %v1270
        %v1294 = vpack.c.bf16 %v1288, %v1288
        %v1295 = vpack.c.bf16 %v1279, %v1279
        %v1296 = vpack.c.bf16 %v1289, %v1289
        %v1297 = vpack.c.bf16 %v1286, %v1286
        %v1298 = vpack.c.bf16 %v1290, %v1290
        %1300 = vrot.lane.b32.xlu0 %v1122, 120
        %v1301 = vpop.permute.xlu0 %1300
        %1303 = vrot.lane.b32.xlu0 %v1122, 112
        %v1304 = vpop.permute.xlu0 %1303
        %1306 = vrot.lane.b32.xlu0 %v1122, 104
        %v1307 = vpop.permute.xlu0 %1306
        %v1309 = vcombine.low %v1122, %v1304
        %v1310 = vcombine.high %v1122, %v1304
        %v1312 = vunpack.c.l.s4 1983009808
        %v1313 = vunpack.c.0.s8 %v1312
        %v1314 = vlaneseq
        %v1315 = vshrl.u32 %v1314, 7
        %v1316 = vsub.s32 %v1313, %v1315
        %v1317 = vrot.slane %v1309, %v1316
        %v1319 = vunpack.c.l.s4 1983009808
        %v1320 = vunpack.c.0.s8 %v1319
        %v1321 = vlaneseq
        %v1322 = vshrl.u32 %v1321, 7
        %v1323 = vsub.s32 %v1320, %v1322
        %v1324 = vrot.slane %v1310, %v1323
        %v1325 = vcombine.low %v1301, %v1307
        %v1326 = vcombine.high %v1301, %v1307
        %v1328 = vunpack.c.l.s4 1983009808
        %v1329 = vunpack.c.0.s8 %v1328
        %v1330 = vlaneseq
        %v1331 = vshrl.u32 %v1330, 7
        %v1332 = vsub.s32 %v1329, %v1331
        %v1333 = vrot.slane %v1325, %v1332
        %v1335 = vunpack.c.l.s4 1983009808
        %v1336 = vunpack.c.0.s8 %v1335
        %v1337 = vlaneseq
        %v1338 = vshrl.u32 %v1337, 7
        %v1339 = vsub.s32 %v1336, %v1338
        %v1340 = vrot.slane %v1326, %v1339
        %v1341 = vcombine.low %v1317, %v1333
        %v1342 = vcombine.high %v1317, %v1333
        %v1344 = vunpack.c.l.s4 1934713408
        %v1345 = vunpack.c.0.s8 %v1344
        %v1346 = vlaneseq
        %v1347 = vshrl.u32 %v1346, 7
        %v1348 = vsub.s32 %v1345, %v1347
        %v1349 = vrot.slane %v1341, %v1348
        %v1351 = vunpack.c.l.s4 1934713408
        %v1352 = vunpack.c.0.s8 %v1351
        %v1353 = vlaneseq
        %v1354 = vshrl.u32 %v1353, 7
        %v1355 = vsub.s32 %v1352, %v1354
        %v1356 = vrot.slane %v1342, %v1355
        %v1357 = vcombine.low %v1324, %v1340
        %v1358 = vcombine.high %v1324, %v1340
        %v1360 = vunpack.c.l.s4 1934713408
        %v1361 = vunpack.c.0.s8 %v1360
        %v1362 = vlaneseq
        %v1363 = vshrl.u32 %v1362, 7
        %v1364 = vsub.s32 %v1361, %v1363
        %v1365 = vrot.slane %v1357, %v1364
        %v1367 = vunpack.c.l.s4 1934713408
        %v1368 = vunpack.c.0.s8 %v1367
        %v1369 = vlaneseq
        %v1370 = vshrl.u32 %v1369, 7
        %v1371 = vsub.s32 %v1368, %v1370
        %v1372 = vrot.slane %v1358, %v1371
        %v1373 = vcombine.high %v1349, 0.0
        %v1374 = vcombine.high %v1356, 0.0
        %v1375 = vcombine.high %v1365, 0.0
        %v1376 = vcombine.high %v1372, 0.0
        %v1377 = vpack.c.bf16 %v1349, %v1349
        %v1378 = vpack.c.bf16 %v1373, %v1373
        %v1379 = vpack.c.bf16 %v1356, %v1356
        %v1380 = vpack.c.bf16 %v1374, %v1374
        %v1381 = vpack.c.bf16 %v1365, %v1365
        %v1382 = vpack.c.bf16 %v1375, %v1375
        %v1383 = vpack.c.bf16 %v1372, %v1372
        %v1384 = vpack.c.bf16 %v1376, %v1376
        %v1385 = vld [vmem:[#allocation8] sm:$0xff]
        %v1386 = vcombine.low %v1205, %v1209
        %v1388 = vunpack.c.l.s4 1983009808
        %v1389 = vunpack.c.0.s8 %v1388
        %v1390 = vlaneseq
        %v1391 = vshrl.u32 %v1390, 7
        %v1392 = vsub.s32 %v1389, %v1391
        %v1393 = vrot.slane %v1386, %v1392
        %v1394 = vcombine.low %v1207, %v1211
        %v1396 = vunpack.c.l.s4 1983009808
        %v1397 = vunpack.c.0.s8 %v1396
        %v1398 = vlaneseq
        %v1399 = vshrl.u32 %v1398, 7
        %v1400 = vsub.s32 %v1397, %v1399
        %v1401 = vrot.slane %v1394, %v1400
        %v1402 = vcombine.low %v1393, %v1401
        %v1404 = vunpack.c.l.s4 1934713408
        %v1405 = vunpack.c.0.s8 %v1404
        %v1406 = vlaneseq
        %v1407 = vshrl.u32 %v1406, 7
        %v1408 = vsub.s32 %v1405, %v1407
        %v1409 = vrot.slane %v1402, %v1408
        %v1410 = vcombine.high %v1409, 0
        %v1411 = vcombine.low %v1206, %v1210
        %v1413 = vunpack.c.l.s4 1983009808
        %v1414 = vunpack.c.0.s8 %v1413
        %v1415 = vlaneseq
        %v1416 = vshrl.u32 %v1415, 7
        %v1417 = vsub.s32 %v1414, %v1416
        %v1418 = vrot.slane %v1411, %v1417
        %v1419 = vcombine.low %v1208, %v1212
        %v1421 = vunpack.c.l.s4 1983009808
        %v1422 = vunpack.c.0.s8 %v1421
        %v1423 = vlaneseq
        %v1424 = vshrl.u32 %v1423, 7
        %v1425 = vsub.s32 %v1422, %v1424
        %v1426 = vrot.slane %v1419, %v1425
        %v1427 = vcombine.low %v1418, %v1426
        %v1429 = vunpack.c.l.s4 1934713408
        %v1430 = vunpack.c.0.s8 %v1429
        %v1431 = vlaneseq
        %v1432 = vshrl.u32 %v1431, 7
        %v1433 = vsub.s32 %v1430, %v1432
        %v1434 = vrot.slane %v1427, %v1433
        %v1435 = vcombine.high %v1434, 0
        %v1438 = vpack.i.b16 %v1434, %v1409
        %v1439 = vshrl.u32 %v1409, 16
        %v1440 = vshrl.u32 %v1434, 16
        %v1441 = vpack.i.b16 %v1440, %v1439
        %v1444 = vpack.i.b16 %v1435, %v1410
        %v1445 = vshrl.u32 %v1410, 16
        %v1446 = vshrl.u32 %v1435, 16
        %v1447 = vpack.i.b16 %v1446, %v1445
        %1448 = vxpose.xlu0.c.b16.start [1/8] %v1291, 128
        %1449 = vxpose.xlu0.c.b16.cont [2/8] 0, 128
        %1450 = vxpose.xlu0.c.b16.cont [3/8] 0, 128
        %1451 = vxpose.xlu0.c.b16.cont [4/8] 0, 128
        %1452 = vxpose.xlu0.c.b16.cont [5/8] 0, 128
        %1453 = vxpose.xlu0.c.b16.cont [6/8] 0, 128
        %1454 = vxpose.xlu0.c.b16.cont [7/8] 0, 128
        %1455 = vxpose.xlu0.c.b16.end [8/8] 0, 128
        %v1456 = vpop.trf.xlu0
        %v1457 = vpop.trf.xlu0
        %v1458 = vpop.trf.xlu0
        %v1459 = vpop.trf.xlu0
        %v1460 = vpop.trf.xlu0
        %v1461 = vpop.trf.xlu0
        %v1462 = vpop.trf.xlu0
        %v1463 = vpop.trf.xlu0
        %1464 = vxpose.xlu0.c.b16.start [1/8] %v1292, 128
        %1465 = vxpose.xlu0.c.b16.cont [2/8] 0, 128
        %1466 = vxpose.xlu0.c.b16.cont [3/8] 0, 128
        %1467 = vxpose.xlu0.c.b16.cont [4/8] 0, 128
        %1468 = vxpose.xlu0.c.b16.cont [5/8] 0, 128
        %1469 = vxpose.xlu0.c.b16.cont [6/8] 0, 128
        %1470 = vxpose.xlu0.c.b16.cont [7/8] 0, 128
        %1471 = vxpose.xlu0.c.b16.end [8/8] 0, 128
        %v1472 = vpop.trf.xlu0
        %v1473 = vpop.trf.xlu0
        %v1474 = vpop.trf.xlu0
        %v1475 = vpop.trf.xlu0
        %v1476 = vpop.trf.xlu0
        %v1477 = vpop.trf.xlu0
        %v1478 = vpop.trf.xlu0
        %v1479 = vpop.trf.xlu0
        %1480 = vxpose.xlu0.c.b16.start [1/8] %v1293, 128
        %1481 = vxpose.xlu0.c.b16.cont [2/8] 0, 128
        %1482 = vxpose.xlu0.c.b16.cont [3/8] 0, 128
        %1483 = vxpose.xlu0.c.b16.cont [4/8] 0, 128
        %1484 = vxpose.xlu0.c.b16.cont [5/8] 0, 128
        %1485 = vxpose.xlu0.c.b16.cont [6/8] 0, 128
        %1486 = vxpose.xlu0.c.b16.cont [7/8] 0, 128
        %1487 = vxpose.xlu0.c.b16.end [8/8] 0, 128
        %v1488 = vpop.trf.xlu0
        %v1489 = vpop.trf.xlu0
        %v1490 = vpop.trf.xlu0
        %v1491 = vpop.trf.xlu0
        %v1492 = vpop.trf.xlu0
        %v1493 = vpop.trf.xlu0
        %v1494 = vpop.trf.xlu0
        %v1495 = vpop.trf.xlu0
        %1496 = vxpose.xlu0.c.b16.start [1/8] %v1294, 128
        %1497 = vxpose.xlu0.c.b16.cont [2/8] 0, 128
        %1498 = vxpose.xlu0.c.b16.cont [3/8] 0, 128
        %1499 = vxpose.xlu0.c.b16.cont [4/8] 0, 128
        %1500 = vxpose.xlu0.c.b16.cont [5/8] 0, 128
        %1501 = vxpose.xlu0.c.b16.cont [6/8] 0, 128
        %1502 = vxpose.xlu0.c.b16.cont [7/8] 0, 128
        %1503 = vxpose.xlu0.c.b16.end [8/8] 0, 128
        %v1504 = vpop.trf.xlu0
        %v1505 = vpop.trf.xlu0
        %v1506 = vpop.trf.xlu0
        %v1507 = vpop.trf.xlu0
        %v1508 = vpop.trf.xlu0
        %v1509 = vpop.trf.xlu0
        %v1510 = vpop.trf.xlu0
        %v1511 = vpop.trf.xlu0
        %1512 = vxpose.xlu0.c.b16.start [1/8] %v1295, 128
        %1513 = vxpose.xlu0.c.b16.cont [2/8] 0, 128
        %1514 = vxpose.xlu0.c.b16.cont [3/8] 0, 128
        %1515 = vxpose.xlu0.c.b16.cont [4/8] 0, 128
        %1516 = vxpose.xlu0.c.b16.cont [5/8] 0, 128
        %1517 = vxpose.xlu0.c.b16.cont [6/8] 0, 128
        %1518 = vxpose.xlu0.c.b16.cont [7/8] 0, 128
        %1519 = vxpose.xlu0.c.b16.end [8/8] 0, 128
        %v1520 = vpop.trf.xlu0
        %v1521 = vpop.trf.xlu0
        %v1522 = vpop.trf.xlu0
        %v1523 = vpop.trf.xlu0
        %v1524 = vpop.trf.xlu0
        %v1525 = vpop.trf.xlu0
        %v1526 = vpop.trf.xlu0
        %v1527 = vpop.trf.xlu0
        %1528 = vxpose.xlu0.c.b16.start [1/8] %v1296, 128
        %1529 = vxpose.xlu0.c.b16.cont [2/8] 0, 128
        %1530 = vxpose.xlu0.c.b16.cont [3/8] 0, 128
        %1531 = vxpose.xlu0.c.b16.cont [4/8] 0, 128
        %1532 = vxpose.xlu0.c.b16.cont [5/8] 0, 128
        %1533 = vxpose.xlu0.c.b16.cont [6/8] 0, 128
        %1534 = vxpose.xlu0.c.b16.cont [7/8] 0, 128
        %1535 = vxpose.xlu0.c.b16.end [8/8] 0, 128
        %v1536 = vpop.trf.xlu0
        %v1537 = vpop.trf.xlu0
        %v1538 = vpop.trf.xlu0
        %v1539 = vpop.trf.xlu0
        %v1540 = vpop.trf.xlu0
        %v1541 = vpop.trf.xlu0
        %v1542 = vpop.trf.xlu0
        %v1543 = vpop.trf.xlu0
        %1544 = vxpose.xlu0.c.b16.start [1/8] %v1297, 128
        %1545 = vxpose.xlu0.c.b16.cont [2/8] 0, 128
        %1546 = vxpose.xlu0.c.b16.cont [3/8] 0, 128
        %1547 = vxpose.xlu0.c.b16.cont [4/8] 0, 128
        %1548 = vxpose.xlu0.c.b16.cont [5/8] 0, 128
        %1549 = vxpose.xlu0.c.b16.cont [6/8] 0, 128
        %1550 = vxpose.xlu0.c.b16.cont [7/8] 0, 128
        %1551 = vxpose.xlu0.c.b16.end [8/8] 0, 128
        %v1552 = vpop.trf.xlu0
        %v1553 = vpop.trf.xlu0
        %v1554 = vpop.trf.xlu0
        %v1555 = vpop.trf.xlu0
        %v1556 = vpop.trf.xlu0
        %v1557 = vpop.trf.xlu0
        %v1558 = vpop.trf.xlu0
        %v1559 = vpop.trf.xlu0
        %1560 = vxpose.xlu0.c.b16.start [1/8] %v1298, 128
        %1561 = vxpose.xlu0.c.b16.cont [2/8] 0, 128
        %1562 = vxpose.xlu0.c.b16.cont [3/8] 0, 128
        %1563 = vxpose.xlu0.c.b16.cont [4/8] 0, 128
        %1564 = vxpose.xlu0.c.b16.cont [5/8] 0, 128
        %1565 = vxpose.xlu0.c.b16.cont [6/8] 0, 128
        %1566 = vxpose.xlu0.c.b16.cont [7/8] 0, 128
        %1567 = vxpose.xlu0.c.b16.end [8/8] 0, 128
        %v1568 = vpop.trf.xlu0
        %v1569 = vpop.trf.xlu0
        %v1570 = vpop.trf.xlu0
        %v1571 = vpop.trf.xlu0
        %v1572 = vpop.trf.xlu0
        %v1573 = vpop.trf.xlu0
        %v1574 = vpop.trf.xlu0
        %v1575 = vpop.trf.xlu0
        %v1576 = vcombine.low %v1456, %v1520
        %v1578 = vunpack.c.l.s4 1983009808
        %v1579 = vunpack.c.0.s8 %v1578
        %v1580 = vlaneseq
        %v1581 = vshrl.u32 %v1580, 7
        %v1582 = vsub.s32 %v1579, %v1581
        %v1583 = vrot.slane %v1576, %v1582
        %v1584 = vcombine.low %v1488, %v1552
        %v1586 = vunpack.c.l.s4 1983009808
        %v1587 = vunpack.c.0.s8 %v1586
        %v1588 = vlaneseq
        %v1589 = vshrl.u32 %v1588, 7
        %v1590 = vsub.s32 %v1587, %v1589
        %v1591 = vrot.slane %v1584, %v1590
        %v1592 = vcombine.low %v1583, %v1591
        %v1593 = vcombine.high %v1583, %v1591
        %v1595 = vunpack.c.l.s4 1934713408
        %v1596 = vunpack.c.0.s8 %v1595
        %v1597 = vlaneseq
        %v1598 = vshrl.u32 %v1597, 7
        %v1599 = vsub.s32 %v1596, %v1598
        %v1600 = vrot.slane %v1592, %v1599
        %v1602 = vunpack.c.l.s4 1934713408
        %v1603 = vunpack.c.0.s8 %v1602
        %v1604 = vlaneseq
        %v1605 = vshrl.u32 %v1604, 7
        %v1606 = vsub.s32 %v1603, %v1605
        %v1607 = vrot.slane %v1593, %v1606
        %v1608 = vcombine.high %v1600, 0
        %v1609 = vcombine.high %v1607, 0
        %v1610 = vcombine.low %v1472, %v1536
        %v1612 = vunpack.c.l.s4 1983009808
        %v1613 = vunpack.c.0.s8 %v1612
        %v1614 = vlaneseq
        %v1615 = vshrl.u32 %v1614, 7
        %v1616 = vsub.s32 %v1613, %v1615
        %v1617 = vrot.slane %v1610, %v1616
        %v1618 = vcombine.low %v1504, %v1568
        %v1620 = vunpack.c.l.s4 1983009808
        %v1621 = vunpack.c.0.s8 %v1620
        %v1622 = vlaneseq
        %v1623 = vshrl.u32 %v1622, 7
        %v1624 = vsub.s32 %v1621, %v1623
        %v1625 = vrot.slane %v1618, %v1624
        %v1626 = vcombine.low %v1617, %v1625
        %v1627 = vcombine.high %v1617, %v1625
        %v1629 = vunpack.c.l.s4 1934713408
        %v1630 = vunpack.c.0.s8 %v1629
        %v1631 = vlaneseq
        %v1632 = vshrl.u32 %v1631, 7
        %v1633 = vsub.s32 %v1630, %v1632
        %v1634 = vrot.slane %v1626, %v1633
        %v1636 = vunpack.c.l.s4 1934713408
        %v1637 = vunpack.c.0.s8 %v1636
        %v1638 = vlaneseq
        %v1639 = vshrl.u32 %v1638, 7
        %v1640 = vsub.s32 %v1637, %v1639
        %v1641 = vrot.slane %v1627, %v1640
        %v1642 = vcombine.high %v1634, 0
        %v1643 = vcombine.high %v1641, 0
        %v1646 = vpack.i.b16 %v1634, %v1600
        %v1648 = vshrl.u32 %v1600, 16
        %v1649 = vshrl.u32 %v1634, 16
        %v1650 = vpack.i.b16 %v1649, %v1648
        %v1654 = vpack.i.b16 %v1642, %v1608
        %v1656 = vshrl.u32 %v1608, 16
        %v1657 = vshrl.u32 %v1642, 16
        %v1658 = vpack.i.b16 %v1657, %v1656
        %v1662 = vpack.i.b16 %v1641, %v1607
        %v1664 = vshrl.u32 %v1607, 16
        %v1665 = vshrl.u32 %v1641, 16
        %v1666 = vpack.i.b16 %v1665, %v1664
        %v1670 = vpack.i.b16 %v1643, %v1609
        %v1672 = vshrl.u32 %v1609, 16
        %v1673 = vshrl.u32 %v1643, 16
        %v1674 = vpack.i.b16 %v1673, %v1672
        %1676 = vxpose.xlu0.c.b16.start [1/8] %v1646, 128
        %1677 = vxpose.xlu0.c.b16.cont [2/8] 0, 128
        %1678 = vxpose.xlu0.c.b16.cont [3/8] 0, 128
        %1679 = vxpose.xlu0.c.b16.cont [4/8] 0, 128
        %1680 = vxpose.xlu0.c.b16.cont [5/8] 0, 128
        %1681 = vxpose.xlu0.c.b16.cont [6/8] 0, 128
        %1682 = vxpose.xlu0.c.b16.cont [7/8] 0, 128
        %1683 = vxpose.xlu0.c.b16.end [8/8] 0, 128
        %v1684 = vpop.trf.xlu0
        %v1685 = vpop.trf.xlu0
        %v1686 = vpop.trf.xlu0
        %v1687 = vpop.trf.xlu0
        %v1688 = vpop.trf.xlu0
        %v1689 = vpop.trf.xlu0
        %v1690 = vpop.trf.xlu0
        %v1691 = vpop.trf.xlu0
        %1692 = vxpose.xlu0.c.b16.start [1/8] %v1650, 128
        %1693 = vxpose.xlu0.c.b16.cont [2/8] 0, 128
        %1694 = vxpose.xlu0.c.b16.cont [3/8] 0, 128
        %1695 = vxpose.xlu0.c.b16.cont [4/8] 0, 128
        %1696 = vxpose.xlu0.c.b16.cont [5/8] 0, 128
        %1697 = vxpose.xlu0.c.b16.cont [6/8] 0, 128
        %1698 = vxpose.xlu0.c.b16.cont [7/8] 0, 128
        %1699 = vxpose.xlu0.c.b16.end [8/8] 0, 128
        %v1700 = vpop.trf.xlu0
        %v1701 = vpop.trf.xlu0
        %v1702 = vpop.trf.xlu0
        %v1703 = vpop.trf.xlu0
        %v1704 = vpop.trf.xlu0
        %v1705 = vpop.trf.xlu0
        %v1706 = vpop.trf.xlu0
        %v1707 = vpop.trf.xlu0
        %1708 = vxpose.xlu0.c.b16.start [1/8] %v1654, 128
        %1709 = vxpose.xlu0.c.b16.cont [2/8] 0, 128
        %1710 = vxpose.xlu0.c.b16.cont [3/8] 0, 128
        %1711 = vxpose.xlu0.c.b16.cont [4/8] 0, 128
        %1712 = vxpose.xlu0.c.b16.cont [5/8] 0, 128
        %1713 = vxpose.xlu0.c.b16.cont [6/8] 0, 128
        %1714 = vxpose.xlu0.c.b16.cont [7/8] 0, 128
        %1715 = vxpose.xlu0.c.b16.end [8/8] 0, 128
        %v1716 = vpop.trf.xlu0
        %v1717 = vpop.trf.xlu0
        %v1718 = vpop.trf.xlu0
        %v1719 = vpop.trf.xlu0
        %v1720 = vpop.trf.xlu0
        %v1721 = vpop.trf.xlu0
        %v1722 = vpop.trf.xlu0
        %v1723 = vpop.trf.xlu0
        %1724 = vxpose.xlu0.c.b16.start [1/8] %v1658, 128
        %1725 = vxpose.xlu0.c.b16.cont [2/8] 0, 128
        %1726 = vxpose.xlu0.c.b16.cont [3/8] 0, 128
        %1727 = vxpose.xlu0.c.b16.cont [4/8] 0, 128
        %1728 = vxpose.xlu0.c.b16.cont [5/8] 0, 128
        %1729 = vxpose.xlu0.c.b16.cont [6/8] 0, 128
        %1730 = vxpose.xlu0.c.b16.cont [7/8] 0, 128
        %1731 = vxpose.xlu0.c.b16.end [8/8] 0, 128
        %v1732 = vpop.trf.xlu0
        %v1733 = vpop.trf.xlu0
        %v1734 = vpop.trf.xlu0
        %v1735 = vpop.trf.xlu0
        %v1736 = vpop.trf.xlu0
        %v1737 = vpop.trf.xlu0
        %v1738 = vpop.trf.xlu0
        %v1739 = vpop.trf.xlu0
        %1740 = vxpose.xlu0.c.b16.start [1/8] %v1662, 128
        %1741 = vxpose.xlu0.c.b16.cont [2/8] 0, 128
        %1742 = vxpose.xlu0.c.b16.cont [3/8] 0, 128
        %1743 = vxpose.xlu0.c.b16.cont [4/8] 0, 128
        %1744 = vxpose.xlu0.c.b16.cont [5/8] 0, 128
        %1745 = vxpose.xlu0.c.b16.cont [6/8] 0, 128
        %1746 = vxpose.xlu0.c.b16.cont [7/8] 0, 128
        %1747 = vxpose.xlu0.c.b16.end [8/8] 0, 128
        %v1748 = vpop.trf.xlu0
        %v1749 = vpop.trf.xlu0
        %v1750 = vpop.trf.xlu0
        %v1751 = vpop.trf.xlu0
        %v1752 = vpop.trf.xlu0
        %v1753 = vpop.trf.xlu0
        %v1754 = vpop.trf.xlu0
        %v1755 = vpop.trf.xlu0
        %1756 = vxpose.xlu0.c.b16.start [1/8] %v1666, 128
        %1757 = vxpose.xlu0.c.b16.cont [2/8] 0, 128
        %1758 = vxpose.xlu0.c.b16.cont [3/8] 0, 128
        %1759 = vxpose.xlu0.c.b16.cont [4/8] 0, 128
        %1760 = vxpose.xlu0.c.b16.cont [5/8] 0, 128
        %1761 = vxpose.xlu0.c.b16.cont [6/8] 0, 128
        %1762 = vxpose.xlu0.c.b16.cont [7/8] 0, 128
        %1763 = vxpose.xlu0.c.b16.end [8/8] 0, 128
        %v1764 = vpop.trf.xlu0
        %v1765 = vpop.trf.xlu0
        %v1766 = vpop.trf.xlu0
        %v1767 = vpop.trf.xlu0
        %v1768 = vpop.trf.xlu0
        %v1769 = vpop.trf.xlu0
        %v1770 = vpop.trf.xlu0
        %v1771 = vpop.trf.xlu0
        %1772 = vxpose.xlu0.c.b16.start [1/8] %v1670, 128
        %1773 = vxpose.xlu0.c.b16.cont [2/8] 0, 128
        %1774 = vxpose.xlu0.c.b16.cont [3/8] 0, 128
        %1775 = vxpose.xlu0.c.b16.cont [4/8] 0, 128
        %1776 = vxpose.xlu0.c.b16.cont [5/8] 0, 128
        %1777 = vxpose.xlu0.c.b16.cont [6/8] 0, 128
        %1778 = vxpose.xlu0.c.b16.cont [7/8] 0, 128
        %1779 = vxpose.xlu0.c.b16.end [8/8] 0, 128
        %v1780 = vpop.trf.xlu0
        %v1781 = vpop.trf.xlu0
        %v1782 = vpop.trf.xlu0
        %v1783 = vpop.trf.xlu0
        %v1784 = vpop.trf.xlu0
        %v1785 = vpop.trf.xlu0
        %v1786 = vpop.trf.xlu0
        %v1787 = vpop.trf.xlu0
        %1788 = vxpose.xlu0.c.b16.start [1/8] %v1674, 128
        %1789 = vxpose.xlu0.c.b16.cont [2/8] 0, 128
        %1790 = vxpose.xlu0.c.b16.cont [3/8] 0, 128
        %1791 = vxpose.xlu0.c.b16.cont [4/8] 0, 128
        %1792 = vxpose.xlu0.c.b16.cont [5/8] 0, 128
        %1793 = vxpose.xlu0.c.b16.cont [6/8] 0, 128
        %1794 = vxpose.xlu0.c.b16.cont [7/8] 0, 128
        %1795 = vxpose.xlu0.c.b16.end [8/8] 0, 128
        %v1796 = vpop.trf.xlu0
        %v1797 = vpop.trf.xlu0
        %v1798 = vpop.trf.xlu0
        %v1799 = vpop.trf.xlu0
        %v1800 = vpop.trf.xlu0
        %v1801 = vpop.trf.xlu0
        %v1802 = vpop.trf.xlu0
        %v1803 = vpop.trf.xlu0
        %v1804 = vcombine.low %v1684, %v1748
        %v1806 = vunpack.c.l.s4 1983009808
        %v1807 = vunpack.c.0.s8 %v1806
        %v1808 = vlaneseq
        %v1809 = vshrl.u32 %v1808, 7
        %v1810 = vsub.s32 %v1807, %v1809
        %v1811 = vrot.slane %v1804, %v1810
        %v1812 = vcombine.low %v1716, %v1780
        %v1814 = vunpack.c.l.s4 1983009808
        %v1815 = vunpack.c.0.s8 %v1814
        %v1816 = vlaneseq
        %v1817 = vshrl.u32 %v1816, 7
        %v1818 = vsub.s32 %v1815, %v1817
        %v1819 = vrot.slane %v1812, %v1818
        %v1820 = vcombine.low %v1811, %v1819
        %v1822 = vunpack.c.l.s4 1934713408
        %v1823 = vunpack.c.0.s8 %v1822
        %v1824 = vlaneseq
        %v1825 = vshrl.u32 %v1824, 7
        %v1826 = vsub.s32 %v1823, %v1825
        %v1827 = vrot.slane %v1820, %v1826
        %v1828 = vcombine.high %v1827, 0
        %v1829 = vcombine.low %v1700, %v1764
        %v1831 = vunpack.c.l.s4 1983009808
        %v1832 = vunpack.c.0.s8 %v1831
        %v1833 = vlaneseq
        %v1834 = vshrl.u32 %v1833, 7
        %v1835 = vsub.s32 %v1832, %v1834
        %v1836 = vrot.slane %v1829, %v1835
        %v1837 = vcombine.low %v1732, %v1796
        %v1839 = vunpack.c.l.s4 1983009808
        %v1840 = vunpack.c.0.s8 %v1839
        %v1841 = vlaneseq
        %v1842 = vshrl.u32 %v1841, 7
        %v1843 = vsub.s32 %v1840, %v1842
        %v1844 = vrot.slane %v1837, %v1843
        %v1845 = vcombine.low %v1836, %v1844
        %v1847 = vunpack.c.l.s4 1934713408
        %v1848 = vunpack.c.0.s8 %v1847
        %v1849 = vlaneseq
        %v1850 = vshrl.u32 %v1849, 7
        %v1851 = vsub.s32 %v1848, %v1850
        %v1852 = vrot.slane %v1845, %v1851
        %v1853 = vcombine.high %v1852, 0
        %v1856 = vpack.i.b16 %v1852, %v1827
        %v1857 = vshrl.u32 %v1827, 16
        %v1858 = vshrl.u32 %v1852, 16
        %v1859 = vpack.i.b16 %v1858, %v1857
        %v1862 = vpack.i.b16 %v1853, %v1828
        %v1863 = vshrl.u32 %v1828, 16
        %v1864 = vshrl.u32 %v1853, 16
        %v1865 = vpack.i.b16 %v1864, %v1863
        %vm1866 = vcmask 64512
        %v1868 = vsel %vm1866, %v1438, 0
        %vm1870 = vcmask 1043456
        %v1872 = vsel %vm1870, %v1856, 0
        %1874 = vmatprep.subr.bf16.mxu0 0
        %1875 = vmatpush1.bf16.msra.mxu0 %v1872
        %1876 = vmatprep.subr.bf16.mxu0 0
        %1877 = vmatpush1.bf16.msra.mxu0 0
        %1878 = vmatprep.subr.bf16.mxu0 0
        %1879 = vmatpush1.bf16.msra.mxu0 0
        %1880 = vmatprep.subr.bf16.mxu0 0
        %1881 = vmatpush1.bf16.msra.mxu0 0
        %1882 = vmatprep.subr.bf16.mxu0 0
        %1883 = vmatpush1.bf16.msra.mxu0 0
        %1884 = vmatprep.subr.bf16.mxu0 0
        %1885 = vmatpush1.bf16.msra.mxu0 0
        %1886 = vmatprep.subr.bf16.mxu0 0
        %1887 = vmatpush1.bf16.msra.mxu0 0
        %1888 = vmatprep.subr.bf16.mxu0 0
        %1889 = vmatpush1.bf16.msra.mxu0 0
        %1890 = vmatprep.subr.bf16.mxu0 0
        %1891 = vmatpush1.bf16.msra.mxu0 0
        %1892 = vmatprep.subr.bf16.mxu0 0
        %1893 = vmatpush1.bf16.msra.mxu0 0
        %1894 = vmatprep.subr.bf16.mxu0 0
        %1895 = vmatpush1.bf16.msra.mxu0 0
        %1896 = vmatprep.subr.bf16.mxu0 0
        %1897 = vmatpush1.bf16.msra.mxu0 0
        %1898 = vmatprep.subr.bf16.mxu0 0
        %1899 = vmatpush1.bf16.msra.mxu0 0
        %1900 = vmatprep.subr.bf16.mxu0 0
        %1901 = vmatpush1.bf16.msra.mxu0 0
        %1902 = vmatprep.subr.bf16.mxu0 0
        %1903 = vmatpush1.bf16.msra.mxu0 0
        %1904 = vmatprep.subr.bf16.mxu0 0
        %1905 = vmatpush1.bf16.msra.mxu0 0
        %1906 = vmatprep.mubr.bf16.mxu0 0
        %1907 = vmatmul.mubr.bf16.gmra.mrb[0].mxu0 %v1868
        %v1908 = vpop.f32.mrb[0].mxu0
        %v1909 = vadd.f32 %v1385, %v1908
        %v1910 = vpop.f32.mrb[0].mxu0
        %v1911 = vpop.f32.mrb[0].mxu0
        %v1912 = vpop.f32.mrb[0].mxu0
        %1913 = vdwg.mxu0
        %v1915 = vsel %vm1866, %v1441, 0
        %v1918 = vsel %vm1870, %v1859, 0
        %1920 = vmatprep.subr.bf16.mxu0 0
        %1921 = vmatpush1.bf16.msra.mxu0 %v1918
        %1922 = vmatprep.subr.bf16.mxu0 0
        %1923 = vmatpush1.bf16.msra.mxu0 0
        %1924 = vmatprep.subr.bf16.mxu0 0
        %1925 = vmatpush1.bf16.msra.mxu0 0
        %1926 = vmatprep.subr.bf16.mxu0 0
        %1927 = vmatpush1.bf16.msra.mxu0 0
        %1928 = vmatprep.subr.bf16.mxu0 0
        %1929 = vmatpush1.bf16.msra.mxu0 0
        %1930 = vmatprep.subr.bf16.mxu0 0
        %1931 = vmatpush1.bf16.msra.mxu0 0
        %1932 = vmatprep.subr.bf16.mxu0 0
        %1933 = vmatpush1.bf16.msra.mxu0 0
        %1934 = vmatprep.subr.bf16.mxu0 0
        %1935 = vmatpush1.bf16.msra.mxu0 0
        %1936 = vmatprep.subr.bf16.mxu0 0
        %1937 = vmatpush1.bf16.msra.mxu0 0
        %1938 = vmatprep.subr.bf16.mxu0 0
        %1939 = vmatpush1.bf16.msra.mxu0 0
        %1940 = vmatprep.subr.bf16.mxu0 0
        %1941 = vmatpush1.bf16.msra.mxu0 0
        %1942 = vmatprep.subr.bf16.mxu0 0
        %1943 = vmatpush1.bf16.msra.mxu0 0
        %1944 = vmatprep.subr.bf16.mxu0 0
        %1945 = vmatpush1.bf16.msra.mxu0 0
        %1946 = vmatprep.subr.bf16.mxu0 0
        %1947 = vmatpush1.bf16.msra.mxu0 0
        %1948 = vmatprep.subr.bf16.mxu0 0
        %1949 = vmatpush1.bf16.msra.mxu0 0
        %1950 = vmatprep.subr.bf16.mxu0 0
        %1951 = vmatpush1.bf16.msra.mxu0 0
        %1952 = vmatprep.mubr.bf16.mxu0 0
        %1953 = vmatmul.mubr.bf16.gmra.mrb[0].mxu0 %v1915
        %v1954 = vpop.f32.mrb[0].mxu0
        %v1955 = vadd.f32 %v1385, %v1954
        %v1956 = vpop.f32.mrb[0].mxu0
        %v1957 = vpop.f32.mrb[0].mxu0
        %v1958 = vpop.f32.mrb[0].mxu0
        %1959 = vdwg.mxu0
        %v1961 = vsel %vm1866, %v1444, 0
        %v1964 = vsel %vm1870, %v1862, 0
        %1966 = vmatprep.subr.bf16.mxu0 0
        %1967 = vmatpush1.bf16.msra.mxu0 %v1964
        %1968 = vmatprep.subr.bf16.mxu0 0
        %1969 = vmatpush1.bf16.msra.mxu0 0
        %1970 = vmatprep.subr.bf16.mxu0 0
        %1971 = vmatpush1.bf16.msra.mxu0 0
        %1972 = vmatprep.subr.bf16.mxu0 0
        %1973 = vmatpush1.bf16.msra.mxu0 0
        %1974 = vmatprep.subr.bf16.mxu0 0
        %1975 = vmatpush1.bf16.msra.mxu0 0
        %1976 = vmatprep.subr.bf16.mxu0 0
        %1977 = vmatpush1.bf16.msra.mxu0 0
        %1978 = vmatprep.subr.bf16.mxu0 0
        %1979 = vmatpush1.bf16.msra.mxu0 0
        %1980 = vmatprep.subr.bf16.mxu0 0
        %1981 = vmatpush1.bf16.msra.mxu0 0
        %1982 = vmatprep.subr.bf16.mxu0 0
        %1983 = vmatpush1.bf16.msra.mxu0 0
        %1984 = vmatprep.subr.bf16.mxu0 0
        %1985 = vmatpush1.bf16.msra.mxu0 0
        %1986 = vmatprep.subr.bf16.mxu0 0
        %1987 = vmatpush1.bf16.msra.mxu0 0
        %1988 = vmatprep.subr.bf16.mxu0 0
        %1989 = vmatpush1.bf16.msra.mxu0 0
        %1990 = vmatprep.subr.bf16.mxu0 0
        %1991 = vmatpush1.bf16.msra.mxu0 0
        %1992 = vmatprep.subr.bf16.mxu0 0
        %1993 = vmatpush1.bf16.msra.mxu0 0
        %1994 = vmatprep.subr.bf16.mxu0 0
        %1995 = vmatpush1.bf16.msra.mxu0 0
        %1996 = vmatprep.subr.bf16.mxu0 0
        %1997 = vmatpush1.bf16.msra.mxu0 0
        %1998 = vmatprep.mubr.bf16.mxu0 0
        %1999 = vmatmul.mubr.bf16.gmra.mrb[0].mxu0 %v1961
        %v2000 = vpop.f32.mrb[0].mxu0
        %v2001 = vadd.f32 %v1385, %v2000
        %v2002 = vpop.f32.mrb[0].mxu0
        %v2003 = vpop.f32.mrb[0].mxu0
        %v2004 = vpop.f32.mrb[0].mxu0
        %2005 = vdwg.mxu0
        %v2007 = vsel %vm1866, %v1447, 0
        %v2010 = vsel %vm1870, %v1865, 0
        %2012 = vmatprep.subr.bf16.mxu0 0
        %2013 = vmatpush1.bf16.msra.mxu0 %v2010
        %2014 = vmatprep.subr.bf16.mxu0 0
        %2015 = vmatpush1.bf16.msra.mxu0 0
        %2016 = vmatprep.subr.bf16.mxu0 0
        %2017 = vmatpush1.bf16.msra.mxu0 0
        %2018 = vmatprep.subr.bf16.mxu0 0
        %2019 = vmatpush1.bf16.msra.mxu0 0
        %2020 = vmatprep.subr.bf16.mxu0 0
        %2021 = vmatpush1.bf16.msra.mxu0 0
        %2022 = vmatprep.subr.bf16.mxu0 0
        %2023 = vmatpush1.bf16.msra.mxu0 0
        %2024 = vmatprep.subr.bf16.mxu0 0
        %2025 = vmatpush1.bf16.msra.mxu0 0
        %2026 = vmatprep.subr.bf16.mxu0 0
        %2027 = vmatpush1.bf16.msra.mxu0 0
        %2028 = vmatprep.subr.bf16.mxu0 0
        %2029 = vmatpush1.bf16.msra.mxu0 0
        %2030 = vmatprep.subr.bf16.mxu0 0
        %2031 = vmatpush1.bf16.msra.mxu0 0
        %2032 = vmatprep.subr.bf16.mxu0 0
        %2033 = vmatpush1.bf16.msra.mxu0 0
        %2034 = vmatprep.subr.bf16.mxu0 0
        %2035 = vmatpush1.bf16.msra.mxu0 0
        %2036 = vmatprep.subr.bf16.mxu0 0
        %2037 = vmatpush1.bf16.msra.mxu0 0
        %2038 = vmatprep.subr.bf16.mxu0 0
        %2039 = vmatpush1.bf16.msra.mxu0 0
        %2040 = vmatprep.subr.bf16.mxu0 0
        %2041 = vmatpush1.bf16.msra.mxu0 0
        %2042 = vmatprep.subr.bf16.mxu0 0
        %2043 = vmatpush1.bf16.msra.mxu0 0
        %2044 = vmatprep.mubr.bf16.mxu0 0
        %2045 = vmatmul.mubr.bf16.gmra.mrb[0].mxu0 %v2007
        %v2046 = vpop.f32.mrb[0].mxu0
        %v2047 = vadd.f32 %v1385, %v2046
        %v2048 = vpop.f32.mrb[0].mxu0
        %v2049 = vpop.f32.mrb[0].mxu0
        %v2050 = vpop.f32.mrb[0].mxu0
        %2051 = vdwg.mxu0
        %v2052 = vsel %vm1866, %v1909, -inf
        %2053 = vmax.xlane.f32.xlu0 %v2052
        %v2054 = vpop.xlane.xlu0 %2053
        %v2055 = vsel %vm1866, %v1955, -inf
        %2056 = vmax.xlane.f32.xlu0 %v2055
        %v2057 = vpop.xlane.xlu0 %2056
        %v2058 = vsel %vm1866, %v2001, -inf
        %2059 = vmax.xlane.f32.xlu0 %v2058
        %v2060 = vpop.xlane.xlu0 %2059
        %v2061 = vsel %vm1866, %v2047, -inf
        %2062 = vmax.xlane.f32.xlu0 %v2061
        %v2063 = vpop.xlane.xlu0 %2062
        %v2064 = vsub.f32 %v1909, %v2054
        %v2065 = vsub.f32 %v1955, %v2057
        %v2066 = vsub.f32 %v2001, %v2060
        %v2067 = vsub.f32 %v2047, %v2063
        %v2068 = vmul.f32 %v2064, 1.442695
        %v2069 = vpow.pop %v2068
        %v2070 = vmul.f32 %v2065, 1.442695
        %v2071 = vpow.pop %v2070
        %v2072 = vmul.f32 %v2066, 1.442695
        %v2073 = vpow.pop %v2072
        %v2074 = vmul.f32 %v2067, 1.442695
        %v2075 = vpow.pop %v2074
        %v2076 = vsel %vm1866, %v2069, 0.0
        %2077 = vadd.xlane.f32.xlu0 %v2076
        %v2078 = vpop.xlane.xlu0 %2077
        %v2079 = vsel %vm1866, %v2071, 0.0
        %2080 = vadd.xlane.f32.xlu0 %v2079
        %v2081 = vpop.xlane.xlu0 %2080
        %v2082 = vsel %vm1866, %v2073, 0.0
        %2083 = vadd.xlane.f32.xlu0 %v2082
        %v2084 = vpop.xlane.xlu0 %2083
        %v2085 = vsel %vm1866, %v2075, 0.0
        %2086 = vadd.xlane.f32.xlu0 %v2085
        %v2087 = vpop.xlane.xlu0 %2086
        %v2088 = vrcp.pop %v2078
        %v2089 = vmul.f32 %v2069, %v2088
        %v2090 = vrcp.pop %v2081
        %v2091 = vmul.f32 %v2071, %v2090
        %v2092 = vrcp.pop %v2084
        %v2093 = vmul.f32 %v2073, %v2092
        %v2094 = vrcp.pop %v2087
        %v2095 = vmul.f32 %v2075, %v2094
        %v2096 = vpack.c.bf16 %v2089, %v2089
        %v2097 = vpack.c.bf16 %v2091, %v2091
        %v2098 = vpack.c.bf16 %v2093, %v2093
        %v2099 = vpack.c.bf16 %v2095, %v2095
        %2100 = vxpose.xlu0.c.b16.start [1/8] %v1377, 128
        %2101 = vxpose.xlu0.c.b16.cont [2/8] 0, 128
        %2102 = vxpose.xlu0.c.b16.cont [3/8] 0, 128
        %2103 = vxpose.xlu0.c.b16.cont [4/8] 0, 128
        %2104 = vxpose.xlu0.c.b16.cont [5/8] 0, 128
        %2105 = vxpose.xlu0.c.b16.cont [6/8] 0, 128
        %2106 = vxpose.xlu0.c.b16.cont [7/8] 0, 128
        %2107 = vxpose.xlu0.c.b16.end [8/8] 0, 128
        %v2108 = vpop.trf.xlu0
        %v2109 = vpop.trf.xlu0
        %v2110 = vpop.trf.xlu0
        %v2111 = vpop.trf.xlu0
        %v2112 = vpop.trf.xlu0
        %v2113 = vpop.trf.xlu0
        %v2114 = vpop.trf.xlu0
        %v2115 = vpop.trf.xlu0
        %2116 = vxpose.xlu0.c.b16.start [1/8] %v1378, 128
        %2117 = vxpose.xlu0.c.b16.cont [2/8] 0, 128
        %2118 = vxpose.xlu0.c.b16.cont [3/8] 0, 128
        %2119 = vxpose.xlu0.c.b16.cont [4/8] 0, 128
        %2120 = vxpose.xlu0.c.b16.cont [5/8] 0, 128
        %2121 = vxpose.xlu0.c.b16.cont [6/8] 0, 128
        %2122 = vxpose.xlu0.c.b16.cont [7/8] 0, 128
        %2123 = vxpose.xlu0.c.b16.end [8/8] 0, 128
        %v2124 = vpop.trf.xlu0
        %v2125 = vpop.trf.xlu0
        %v2126 = vpop.trf.xlu0
        %v2127 = vpop.trf.xlu0
        %v2128 = vpop.trf.xlu0
        %v2129 = vpop.trf.xlu0
        %v2130 = vpop.trf.xlu0
        %v2131 = vpop.trf.xlu0
        %2132 = vxpose.xlu0.c.b16.start [1/8] %v1379, 128
        %2133 = vxpose.xlu0.c.b16.cont [2/8] 0, 128
        %2134 = vxpose.xlu0.c.b16.cont [3/8] 0, 128
        %2135 = vxpose.xlu0.c.b16.cont [4/8] 0, 128
        %2136 = vxpose.xlu0.c.b16.cont [5/8] 0, 128
        %2137 = vxpose.xlu0.c.b16.cont [6/8] 0, 128
        %2138 = vxpose.xlu0.c.b16.cont [7/8] 0, 128
        %2139 = vxpose.xlu0.c.b16.end [8/8] 0, 128
        %v2140 = vpop.trf.xlu0
        %v2141 = vpop.trf.xlu0
        %v2142 = vpop.trf.xlu0
        %v2143 = vpop.trf.xlu0
        %v2144 = vpop.trf.xlu0
        %v2145 = vpop.trf.xlu0
        %v2146 = vpop.trf.xlu0
        %v2147 = vpop.trf.xlu0
        %2148 = vxpose.xlu0.c.b16.start [1/8] %v1380, 128
        %2149 = vxpose.xlu0.c.b16.cont [2/8] 0, 128
        %2150 = vxpose.xlu0.c.b16.cont [3/8] 0, 128
        %2151 = vxpose.xlu0.c.b16.cont [4/8] 0, 128
        %2152 = vxpose.xlu0.c.b16.cont [5/8] 0, 128
        %2153 = vxpose.xlu0.c.b16.cont [6/8] 0, 128
        %2154 = vxpose.xlu0.c.b16.cont [7/8] 0, 128
        %2155 = vxpose.xlu0.c.b16.end [8/8] 0, 128
        %v2156 = vpop.trf.xlu0
        %v2157 = vpop.trf.xlu0
        %v2158 = vpop.trf.xlu0
        %v2159 = vpop.trf.xlu0
        %v2160 = vpop.trf.xlu0
        %v2161 = vpop.trf.xlu0
        %v2162 = vpop.trf.xlu0
        %v2163 = vpop.trf.xlu0
        %2164 = vxpose.xlu0.c.b16.start [1/8] %v1381, 128
        %2165 = vxpose.xlu0.c.b16.cont [2/8] 0, 128
        %2166 = vxpose.xlu0.c.b16.cont [3/8] 0, 128
        %2167 = vxpose.xlu0.c.b16.cont [4/8] 0, 128
        %2168 = vxpose.xlu0.c.b16.cont [5/8] 0, 128
        %2169 = vxpose.xlu0.c.b16.cont [6/8] 0, 128
        %2170 = vxpose.xlu0.c.b16.cont [7/8] 0, 128
        %2171 = vxpose.xlu0.c.b16.end [8/8] 0, 128
        %v2172 = vpop.trf.xlu0
        %v2173 = vpop.trf.xlu0
        %v2174 = vpop.trf.xlu0
        %v2175 = vpop.trf.xlu0
        %v2176 = vpop.trf.xlu0
        %v2177 = vpop.trf.xlu0
        %v2178 = vpop.trf.xlu0
        %v2179 = vpop.trf.xlu0
        %2180 = vxpose.xlu0.c.b16.start [1/8] %v1382, 128
        %2181 = vxpose.xlu0.c.b16.cont [2/8] 0, 128
        %2182 = vxpose.xlu0.c.b16.cont [3/8] 0, 128
        %2183 = vxpose.xlu0.c.b16.cont [4/8] 0, 128
        %2184 = vxpose.xlu0.c.b16.cont [5/8] 0, 128
        %2185 = vxpose.xlu0.c.b16.cont [6/8] 0, 128
        %2186 = vxpose.xlu0.c.b16.cont [7/8] 0, 128
        %2187 = vxpose.xlu0.c.b16.end [8/8] 0, 128
        %v2188 = vpop.trf.xlu0
        %v2189 = vpop.trf.xlu0
        %v2190 = vpop.trf.xlu0
        %v2191 = vpop.trf.xlu0
        %v2192 = vpop.trf.xlu0
        %v2193 = vpop.trf.xlu0
        %v2194 = vpop.trf.xlu0
        %v2195 = vpop.trf.xlu0
        %2196 = vxpose.xlu0.c.b16.start [1/8] %v1383, 128
        %2197 = vxpose.xlu0.c.b16.cont [2/8] 0, 128
        %2198 = vxpose.xlu0.c.b16.cont [3/8] 0, 128
        %2199 = vxpose.xlu0.c.b16.cont [4/8] 0, 128
        %2200 = vxpose.xlu0.c.b16.cont [5/8] 0, 128
        %2201 = vxpose.xlu0.c.b16.cont [6/8] 0, 128
        %2202 = vxpose.xlu0.c.b16.cont [7/8] 0, 128
        %2203 = vxpose.xlu0.c.b16.end [8/8] 0, 128
        %v2204 = vpop.trf.xlu0
        %v2205 = vpop.trf.xlu0
        %v2206 = vpop.trf.xlu0
        %v2207 = vpop.trf.xlu0
        %v2208 = vpop.trf.xlu0
        %v2209 = vpop.trf.xlu0
        %v2210 = vpop.trf.xlu0
        %v2211 = vpop.trf.xlu0
        %2212 = vxpose.xlu0.c.b16.start [1/8] %v1384, 128
        %2213 = vxpose.xlu0.c.b16.cont [2/8] 0, 128
        %2214 = vxpose.xlu0.c.b16.cont [3/8] 0, 128
        %2215 = vxpose.xlu0.c.b16.cont [4/8] 0, 128
        %2216 = vxpose.xlu0.c.b16.cont [5/8] 0, 128
        %2217 = vxpose.xlu0.c.b16.cont [6/8] 0, 128
        %2218 = vxpose.xlu0.c.b16.cont [7/8] 0, 128
        %2219 = vxpose.xlu0.c.b16.end [8/8] 0, 128
        %v2220 = vpop.trf.xlu0
        %v2221 = vpop.trf.xlu0
        %v2222 = vpop.trf.xlu0
        %v2223 = vpop.trf.xlu0
        %v2224 = vpop.trf.xlu0
        %v2225 = vpop.trf.xlu0
        %v2226 = vpop.trf.xlu0
        %v2227 = vpop.trf.xlu0
        %v2228 = vcombine.low %v2108, %v2172
        %v2230 = vunpack.c.l.s4 1983009808
        %v2231 = vunpack.c.0.s8 %v2230
        %v2232 = vlaneseq
        %v2233 = vshrl.u32 %v2232, 7
        %v2234 = vsub.s32 %v2231, %v2233
        %v2235 = vrot.slane %v2228, %v2234
        %v2236 = vcombine.low %v2140, %v2204
        %v2238 = vunpack.c.l.s4 1983009808
        %v2239 = vunpack.c.0.s8 %v2238
        %v2240 = vlaneseq
        %v2241 = vshrl.u32 %v2240, 7
        %v2242 = vsub.s32 %v2239, %v2241
        %v2243 = vrot.slane %v2236, %v2242
        %v2244 = vcombine.low %v2235, %v2243
        %v2245 = vcombine.high %v2235, %v2243
        %v2247 = vunpack.c.l.s4 1934713408
        %v2248 = vunpack.c.0.s8 %v2247
        %v2249 = vlaneseq
        %v2250 = vshrl.u32 %v2249, 7
        %v2251 = vsub.s32 %v2248, %v2250
        %v2252 = vrot.slane %v2244, %v2251
        %v2254 = vunpack.c.l.s4 1934713408
        %v2255 = vunpack.c.0.s8 %v2254
        %v2256 = vlaneseq
        %v2257 = vshrl.u32 %v2256, 7
        %v2258 = vsub.s32 %v2255, %v2257
        %v2259 = vrot.slane %v2245, %v2258
        %v2260 = vcombine.high %v2252, 0
        %v2261 = vcombine.high %v2259, 0
        %v2262 = vcombine.low %v2124, %v2188
        %v2264 = vunpack.c.l.s4 1983009808
        %v2265 = vunpack.c.0.s8 %v2264
        %v2266 = vlaneseq
        %v2267 = vshrl.u32 %v2266, 7
        %v2268 = vsub.s32 %v2265, %v2267
        %v2269 = vrot.slane %v2262, %v2268
        %v2270 = vcombine.low %v2156, %v2220
        %v2272 = vunpack.c.l.s4 1983009808
        %v2273 = vunpack.c.0.s8 %v2272
        %v2274 = vlaneseq
        %v2275 = vshrl.u32 %v2274, 7
        %v2276 = vsub.s32 %v2273, %v2275
        %v2277 = vrot.slane %v2270, %v2276
        %v2278 = vcombine.low %v2269, %v2277
        %v2279 = vcombine.high %v2269, %v2277
        %v2281 = vunpack.c.l.s4 1934713408
        %v2282 = vunpack.c.0.s8 %v2281
        %v2283 = vlaneseq
        %v2284 = vshrl.u32 %v2283, 7
        %v2285 = vsub.s32 %v2282, %v2284
        %v2286 = vrot.slane %v2278, %v2285
        %v2288 = vunpack.c.l.s4 1934713408
        %v2289 = vunpack.c.0.s8 %v2288
        %v2290 = vlaneseq
        %v2291 = vshrl.u32 %v2290, 7
        %v2292 = vsub.s32 %v2289, %v2291
        %v2293 = vrot.slane %v2279, %v2292
        %v2294 = vcombine.high %v2286, 0
        %v2295 = vcombine.high %v2293, 0
        %v2298 = vpack.i.b16 %v2286, %v2252
        %v2300 = vshrl.u32 %v2252, 16
        %v2301 = vshrl.u32 %v2286, 16
        %v2302 = vpack.i.b16 %v2301, %v2300
        %v2306 = vpack.i.b16 %v2294, %v2260
        %v2308 = vshrl.u32 %v2260, 16
        %v2309 = vshrl.u32 %v2294, 16
        %v2310 = vpack.i.b16 %v2309, %v2308
        %v2314 = vpack.i.b16 %v2293, %v2259
        %v2316 = vshrl.u32 %v2259, 16
        %v2317 = vshrl.u32 %v2293, 16
        %v2318 = vpack.i.b16 %v2317, %v2316
        %v2322 = vpack.i.b16 %v2295, %v2261
        %v2324 = vshrl.u32 %v2261, 16
        %v2325 = vshrl.u32 %v2295, 16
        %v2326 = vpack.i.b16 %v2325, %v2324
        %2328 = vxpose.xlu0.c.b16.start [1/8] %v2298, 128
        %2329 = vxpose.xlu0.c.b16.cont [2/8] 0, 128
        %2330 = vxpose.xlu0.c.b16.cont [3/8] 0, 128
        %2331 = vxpose.xlu0.c.b16.cont [4/8] 0, 128
        %2332 = vxpose.xlu0.c.b16.cont [5/8] 0, 128
        %2333 = vxpose.xlu0.c.b16.cont [6/8] 0, 128
        %2334 = vxpose.xlu0.c.b16.cont [7/8] 0, 128
        %2335 = vxpose.xlu0.c.b16.end [8/8] 0, 128
        %v2336 = vpop.trf.xlu0
        %v2337 = vpop.trf.xlu0
        %v2338 = vpop.trf.xlu0
        %v2339 = vpop.trf.xlu0
        %v2340 = vpop.trf.xlu0
        %v2341 = vpop.trf.xlu0
        %v2342 = vpop.trf.xlu0
        %v2343 = vpop.trf.xlu0
        %2344 = vxpose.xlu0.c.b16.start [1/8] %v2302, 128
        %2345 = vxpose.xlu0.c.b16.cont [2/8] 0, 128
        %2346 = vxpose.xlu0.c.b16.cont [3/8] 0, 128
        %2347 = vxpose.xlu0.c.b16.cont [4/8] 0, 128
        %2348 = vxpose.xlu0.c.b16.cont [5/8] 0, 128
        %2349 = vxpose.xlu0.c.b16.cont [6/8] 0, 128
        %2350 = vxpose.xlu0.c.b16.cont [7/8] 0, 128
        %2351 = vxpose.xlu0.c.b16.end [8/8] 0, 128
        %v2352 = vpop.trf.xlu0
        %v2353 = vpop.trf.xlu0
        %v2354 = vpop.trf.xlu0
        %v2355 = vpop.trf.xlu0
        %v2356 = vpop.trf.xlu0
        %v2357 = vpop.trf.xlu0
        %v2358 = vpop.trf.xlu0
        %v2359 = vpop.trf.xlu0
        %2360 = vxpose.xlu0.c.b16.start [1/8] %v2306, 128
        %2361 = vxpose.xlu0.c.b16.cont [2/8] 0, 128
        %2362 = vxpose.xlu0.c.b16.cont [3/8] 0, 128
        %2363 = vxpose.xlu0.c.b16.cont [4/8] 0, 128
        %2364 = vxpose.xlu0.c.b16.cont [5/8] 0, 128
        %2365 = vxpose.xlu0.c.b16.cont [6/8] 0, 128
        %2366 = vxpose.xlu0.c.b16.cont [7/8] 0, 128
        %2367 = vxpose.xlu0.c.b16.end [8/8] 0, 128
        %v2368 = vpop.trf.xlu0
        %v2369 = vpop.trf.xlu0
        %v2370 = vpop.trf.xlu0
        %v2371 = vpop.trf.xlu0
        %v2372 = vpop.trf.xlu0
        %v2373 = vpop.trf.xlu0
        %v2374 = vpop.trf.xlu0
        %v2375 = vpop.trf.xlu0
        %2376 = vxpose.xlu0.c.b16.start [1/8] %v2310, 128
        %2377 = vxpose.xlu0.c.b16.cont [2/8] 0, 128
        %2378 = vxpose.xlu0.c.b16.cont [3/8] 0, 128
        %2379 = vxpose.xlu0.c.b16.cont [4/8] 0, 128
        %2380 = vxpose.xlu0.c.b16.cont [5/8] 0, 128
        %2381 = vxpose.xlu0.c.b16.cont [6/8] 0, 128
        %2382 = vxpose.xlu0.c.b16.cont [7/8] 0, 128
        %2383 = vxpose.xlu0.c.b16.end [8/8] 0, 128
        %v2384 = vpop.trf.xlu0
        %v2385 = vpop.trf.xlu0
        %v2386 = vpop.trf.xlu0
        %v2387 = vpop.trf.xlu0
        %v2388 = vpop.trf.xlu0
        %v2389 = vpop.trf.xlu0
        %v2390 = vpop.trf.xlu0
        %v2391 = vpop.trf.xlu0
        %2392 = vxpose.xlu0.c.b16.start [1/8] %v2314, 128
        %2393 = vxpose.xlu0.c.b16.cont [2/8] 0, 128
        %2394 = vxpose.xlu0.c.b16.cont [3/8] 0, 128
        %2395 = vxpose.xlu0.c.b16.cont [4/8] 0, 128
        %2396 = vxpose.xlu0.c.b16.cont [5/8] 0, 128
        %2397 = vxpose.xlu0.c.b16.cont [6/8] 0, 128
        %2398 = vxpose.xlu0.c.b16.cont [7/8] 0, 128
        %2399 = vxpose.xlu0.c.b16.end [8/8] 0, 128
        %v2400 = vpop.trf.xlu0
        %v2401 = vpop.trf.xlu0
        %v2402 = vpop.trf.xlu0
        %v2403 = vpop.trf.xlu0
        %v2404 = vpop.trf.xlu0
        %v2405 = vpop.trf.xlu0
        %v2406 = vpop.trf.xlu0
        %v2407 = vpop.trf.xlu0
        %2408 = vxpose.xlu0.c.b16.start [1/8] %v2318, 128
        %2409 = vxpose.xlu0.c.b16.cont [2/8] 0, 128
        %2410 = vxpose.xlu0.c.b16.cont [3/8] 0, 128
        %2411 = vxpose.xlu0.c.b16.cont [4/8] 0, 128
        %2412 = vxpose.xlu0.c.b16.cont [5/8] 0, 128
        %2413 = vxpose.xlu0.c.b16.cont [6/8] 0, 128
        %2414 = vxpose.xlu0.c.b16.cont [7/8] 0, 128
        %2415 = vxpose.xlu0.c.b16.end [8/8] 0, 128
        %v2416 = vpop.trf.xlu0
        %v2417 = vpop.trf.xlu0
        %v2418 = vpop.trf.xlu0
        %v2419 = vpop.trf.xlu0
        %v2420 = vpop.trf.xlu0
        %v2421 = vpop.trf.xlu0
        %v2422 = vpop.trf.xlu0
        %v2423 = vpop.trf.xlu0
        %2424 = vxpose.xlu0.c.b16.start [1/8] %v2322, 128
        %2425 = vxpose.xlu0.c.b16.cont [2/8] 0, 128
        %2426 = vxpose.xlu0.c.b16.cont [3/8] 0, 128
        %2427 = vxpose.xlu0.c.b16.cont [4/8] 0, 128
        %2428 = vxpose.xlu0.c.b16.cont [5/8] 0, 128
        %2429 = vxpose.xlu0.c.b16.cont [6/8] 0, 128
        %2430 = vxpose.xlu0.c.b16.cont [7/8] 0, 128
        %2431 = vxpose.xlu0.c.b16.end [8/8] 0, 128
        %v2432 = vpop.trf.xlu0
        %v2433 = vpop.trf.xlu0
        %v2434 = vpop.trf.xlu0
        %v2435 = vpop.trf.xlu0
        %v2436 = vpop.trf.xlu0
        %v2437 = vpop.trf.xlu0
        %v2438 = vpop.trf.xlu0
        %v2439 = vpop.trf.xlu0
        %2440 = vxpose.xlu0.c.b16.start [1/8] %v2326, 128
        %2441 = vxpose.xlu0.c.b16.cont [2/8] 0, 128
        %2442 = vxpose.xlu0.c.b16.cont [3/8] 0, 128
        %2443 = vxpose.xlu0.c.b16.cont [4/8] 0, 128
        %2444 = vxpose.xlu0.c.b16.cont [5/8] 0, 128
        %2445 = vxpose.xlu0.c.b16.cont [6/8] 0, 128
        %2446 = vxpose.xlu0.c.b16.cont [7/8] 0, 128
        %2447 = vxpose.xlu0.c.b16.end [8/8] 0, 128
        %v2448 = vpop.trf.xlu0
        %v2449 = vpop.trf.xlu0
        %v2450 = vpop.trf.xlu0
        %v2451 = vpop.trf.xlu0
        %v2452 = vpop.trf.xlu0
        %v2453 = vpop.trf.xlu0
        %v2454 = vpop.trf.xlu0
        %v2455 = vpop.trf.xlu0
        %v2456 = vcombine.low %v2336, %v2400
        %v2458 = vunpack.c.l.s4 1983009808
        %v2459 = vunpack.c.0.s8 %v2458
        %v2460 = vlaneseq
        %v2461 = vshrl.u32 %v2460, 7
        %v2462 = vsub.s32 %v2459, %v2461
        %v2463 = vrot.slane %v2456, %v2462
        %v2464 = vcombine.low %v2368, %v2432
        %v2466 = vunpack.c.l.s4 1983009808
        %v2467 = vunpack.c.0.s8 %v2466
        %v2468 = vlaneseq
        %v2469 = vshrl.u32 %v2468, 7
        %v2470 = vsub.s32 %v2467, %v2469
        %v2471 = vrot.slane %v2464, %v2470
        %v2472 = vcombine.low %v2463, %v2471
        %v2474 = vunpack.c.l.s4 1934713408
        %v2475 = vunpack.c.0.s8 %v2474
        %v2476 = vlaneseq
        %v2477 = vshrl.u32 %v2476, 7
        %v2478 = vsub.s32 %v2475, %v2477
        %v2479 = vrot.slane %v2472, %v2478
        %v2480 = vcombine.high %v2479, 0
        %v2481 = vcombine.low %v2352, %v2416
        %v2483 = vunpack.c.l.s4 1983009808
        %v2484 = vunpack.c.0.s8 %v2483
        %v2485 = vlaneseq
        %v2486 = vshrl.u32 %v2485, 7
        %v2487 = vsub.s32 %v2484, %v2486
        %v2488 = vrot.slane %v2481, %v2487
        %v2489 = vcombine.low %v2384, %v2448
        %v2491 = vunpack.c.l.s4 1983009808
        %v2492 = vunpack.c.0.s8 %v2491
        %v2493 = vlaneseq
        %v2494 = vshrl.u32 %v2493, 7
        %v2495 = vsub.s32 %v2492, %v2494
        %v2496 = vrot.slane %v2489, %v2495
        %v2497 = vcombine.low %v2488, %v2496
        %v2499 = vunpack.c.l.s4 1934713408
        %v2500 = vunpack.c.0.s8 %v2499
        %v2501 = vlaneseq
        %v2502 = vshrl.u32 %v2501, 7
        %v2503 = vsub.s32 %v2500, %v2502
        %v2504 = vrot.slane %v2497, %v2503
        %v2505 = vcombine.high %v2504, 0
        %v2508 = vpack.i.b16 %v2504, %v2479
        %v2509 = vshrl.u32 %v2479, 16
        %v2510 = vshrl.u32 %v2504, 16
        %v2511 = vpack.i.b16 %v2510, %v2509
        %v2514 = vpack.i.b16 %v2505, %v2480
        %v2515 = vshrl.u32 %v2480, 16
        %v2516 = vshrl.u32 %v2505, 16
        %v2517 = vpack.i.b16 %v2516, %v2515
        %v2519 = vsel %vm1866, %v2508, 0
        %v2522 = vsel %vm1866, %v2096, 0
        %2524 = vmatprep.subr.bf16.mxu0 0
        %2525 = vmatpush1.bf16.xpose.msra.mxu0 %v2522
        %2526 = vmatprep.subr.bf16.mxu0 0
        %2527 = vmatpush1.bf16.xpose.msra.mxu0 0
        %2528 = vmatprep.subr.bf16.mxu0 0
        %2529 = vmatpush1.bf16.xpose.msra.mxu0 0
        %2530 = vmatprep.subr.bf16.mxu0 0
        %2531 = vmatpush1.bf16.xpose.msra.mxu0 0
        %2532 = vmatprep.subr.bf16.mxu0 0
        %2533 = vmatpush1.bf16.xpose.msra.mxu0 0
        %2534 = vmatprep.subr.bf16.mxu0 0
        %2535 = vmatpush1.bf16.xpose.msra.mxu0 0
        %2536 = vmatprep.subr.bf16.mxu0 0
        %2537 = vmatpush1.bf16.xpose.msra.mxu0 0
        %2538 = vmatprep.subr.bf16.mxu0 0
        %2539 = vmatpush1.bf16.xpose.msra.mxu0 0
        %2540 = vmatprep.subr.bf16.mxu0 0
        %2541 = vmatpush1.bf16.xpose.msra.mxu0 0
        %2542 = vmatprep.subr.bf16.mxu0 0
        %2543 = vmatpush1.bf16.xpose.msra.mxu0 0
        %2544 = vmatprep.subr.bf16.mxu0 0
        %2545 = vmatpush1.bf16.xpose.msra.mxu0 0
        %2546 = vmatprep.subr.bf16.mxu0 0
        %2547 = vmatpush1.bf16.xpose.msra.mxu0 0
        %2548 = vmatprep.subr.bf16.mxu0 0
        %2549 = vmatpush1.bf16.xpose.msra.mxu0 0
        %2550 = vmatprep.subr.bf16.mxu0 0
        %2551 = vmatpush1.bf16.xpose.msra.mxu0 0
        %2552 = vmatprep.subr.bf16.mxu0 0
        %2553 = vmatpush1.bf16.xpose.msra.mxu0 0
        %2554 = vmatprep.subr.bf16.mxu0 0
        %2555 = vmatpush1.bf16.xpose.msra.mxu0 0
        %2556 = vmatprep.mubr.bf16.mxu0 0
        %2557 = vmatmul.mubr.bf16.gmra.mrb[0].mxu0 %v2519
        %v2558 = vpop.f32.mrb[0].mxu0
        %v2559 = vadd.f32 0.0, %v2558
        %v2560 = vpop.f32.mrb[0].mxu0
        %v2561 = vpop.f32.mrb[0].mxu0
        %v2562 = vpop.f32.mrb[0].mxu0
        %2563 = vdwg.mxu0
        %v2565 = vsel %vm1866, %v2511, 0
        %v2568 = vsel %vm1866, %v2097, 0
        %2570 = vmatprep.subr.bf16.mxu0 0
        %2571 = vmatpush1.bf16.xpose.msra.mxu0 %v2568
        %2572 = vmatprep.subr.bf16.mxu0 0
        %2573 = vmatpush1.bf16.xpose.msra.mxu0 0
        %2574 = vmatprep.subr.bf16.mxu0 0
        %2575 = vmatpush1.bf16.xpose.msra.mxu0 0
        %2576 = vmatprep.subr.bf16.mxu0 0
        %2577 = vmatpush1.bf16.xpose.msra.mxu0 0
        %2578 = vmatprep.subr.bf16.mxu0 0
        %2579 = vmatpush1.bf16.xpose.msra.mxu0 0
        %2580 = vmatprep.subr.bf16.mxu0 0
        %2581 = vmatpush1.bf16.xpose.msra.mxu0 0
        %2582 = vmatprep.subr.bf16.mxu0 0
        %2583 = vmatpush1.bf16.xpose.msra.mxu0 0
        %2584 = vmatprep.subr.bf16.mxu0 0
        %2585 = vmatpush1.bf16.xpose.msra.mxu0 0
        %2586 = vmatprep.subr.bf16.mxu0 0
        %2587 = vmatpush1.bf16.xpose.msra.mxu0 0
        %2588 = vmatprep.subr.bf16.mxu0 0
        %2589 = vmatpush1.bf16.xpose.msra.mxu0 0
        %2590 = vmatprep.subr.bf16.mxu0 0
        %2591 = vmatpush1.bf16.xpose.msra.mxu0 0
        %2592 = vmatprep.subr.bf16.mxu0 0
        %2593 = vmatpush1.bf16.xpose.msra.mxu0 0
        %2594 = vmatprep.subr.bf16.mxu0 0
        %2595 = vmatpush1.bf16.xpose.msra.mxu0 0
        %2596 = vmatprep.subr.bf16.mxu0 0
        %2597 = vmatpush1.bf16.xpose.msra.mxu0 0
        %2598 = vmatprep.subr.bf16.mxu0 0
        %2599 = vmatpush1.bf16.xpose.msra.mxu0 0
        %2600 = vmatprep.subr.bf16.mxu0 0
        %2601 = vmatpush1.bf16.xpose.msra.mxu0 0
        %2602 = vmatprep.mubr.bf16.mxu0 0
        %2603 = vmatmul.mubr.bf16.gmra.mrb[0].mxu0 %v2565
        %v2604 = vpop.f32.mrb[0].mxu0
        %v2605 = vadd.f32 0.0, %v2604
        %v2606 = vpop.f32.mrb[0].mxu0
        %v2607 = vpop.f32.mrb[0].mxu0
        %v2608 = vpop.f32.mrb[0].mxu0
        %2609 = vdwg.mxu0
        %v2611 = vsel %vm1866, %v2514, 0
        %v2614 = vsel %vm1866, %v2098, 0
        %2616 = vmatprep.subr.bf16.mxu0 0
        %2617 = vmatpush1.bf16.xpose.msra.mxu0 %v2614
        %2618 = vmatprep.subr.bf16.mxu0 0
        %2619 = vmatpush1.bf16.xpose.msra.mxu0 0
        %2620 = vmatprep.subr.bf16.mxu0 0
        %2621 = vmatpush1.bf16.xpose.msra.mxu0 0
        %2622 = vmatprep.subr.bf16.mxu0 0
        %2623 = vmatpush1.bf16.xpose.msra.mxu0 0
        %2624 = vmatprep.subr.bf16.mxu0 0
        %2625 = vmatpush1.bf16.xpose.msra.mxu0 0
        %2626 = vmatprep.subr.bf16.mxu0 0
        %2627 = vmatpush1.bf16.xpose.msra.mxu0 0
        %2628 = vmatprep.subr.bf16.mxu0 0
        %2629 = vmatpush1.bf16.xpose.msra.mxu0 0
        %2630 = vmatprep.subr.bf16.mxu0 0
        %2631 = vmatpush1.bf16.xpose.msra.mxu0 0
        %2632 = vmatprep.subr.bf16.mxu0 0
        %2633 = vmatpush1.bf16.xpose.msra.mxu0 0
        %2634 = vmatprep.subr.bf16.mxu0 0
        %2635 = vmatpush1.bf16.xpose.msra.mxu0 0
        %2636 = vmatprep.subr.bf16.mxu0 0
        %2637 = vmatpush1.bf16.xpose.msra.mxu0 0
        %2638 = vmatprep.subr.bf16.mxu0 0
        %2639 = vmatpush1.bf16.xpose.msra.mxu0 0
        %2640 = vmatprep.subr.bf16.mxu0 0
        %2641 = vmatpush1.bf16.xpose.msra.mxu0 0
        %2642 = vmatprep.subr.bf16.mxu0 0
        %2643 = vmatpush1.bf16.xpose.msra.mxu0 0
        %2644 = vmatprep.subr.bf16.mxu0 0
        %2645 = vmatpush1.bf16.xpose.msra.mxu0 0
        %2646 = vmatprep.subr.bf16.mxu0 0
        %2647 = vmatpush1.bf16.xpose.msra.mxu0 0
        %2648 = vmatprep.mubr.bf16.mxu0 0
        %2649 = vmatmul.mubr.bf16.gmra.mrb[0].mxu0 %v2611
        %v2650 = vpop.f32.mrb[0].mxu0
        %v2651 = vadd.f32 0.0, %v2650
        %v2652 = vpop.f32.mrb[0].mxu0
        %v2653 = vpop.f32.mrb[0].mxu0
        %v2654 = vpop.f32.mrb[0].mxu0
        %2655 = vdwg.mxu0
        %v2657 = vsel %vm1866, %v2517, 0
        %v2660 = vsel %vm1866, %v2099, 0
        %2662 = vmatprep.subr.bf16.mxu0 0
        %2663 = vmatpush1.bf16.xpose.msra.mxu0 %v2660
        %2664 = vmatprep.subr.bf16.mxu0 0
        %2665 = vmatpush1.bf16.xpose.msra.mxu0 0
        %2666 = vmatprep.subr.bf16.mxu0 0
        %2667 = vmatpush1.bf16.xpose.msra.mxu0 0
        %2668 = vmatprep.subr.bf16.mxu0 0
        %2669 = vmatpush1.bf16.xpose.msra.mxu0 0
        %2670 = vmatprep.subr.bf16.mxu0 0
        %2671 = vmatpush1.bf16.xpose.msra.mxu0 0
        %2672 = vmatprep.subr.bf16.mxu0 0
        %2673 = vmatpush1.bf16.xpose.msra.mxu0 0
        %2674 = vmatprep.subr.bf16.mxu0 0
        %2675 = vmatpush1.bf16.xpose.msra.mxu0 0
        %2676 = vmatprep.subr.bf16.mxu0 0
        %2677 = vmatpush1.bf16.xpose.msra.mxu0 0
        %2678 = vmatprep.subr.bf16.mxu0 0
        %2679 = vmatpush1.bf16.xpose.msra.mxu0 0
        %2680 = vmatprep.subr.bf16.mxu0 0
        %2681 = vmatpush1.bf16.xpose.msra.mxu0 0
        %2682 = vmatprep.subr.bf16.mxu0 0
        %2683 = vmatpush1.bf16.xpose.msra.mxu0 0
        %2684 = vmatprep.subr.bf16.mxu0 0
        %2685 = vmatpush1.bf16.xpose.msra.mxu0 0
        %2686 = vmatprep.subr.bf16.mxu0 0
        %2687 = vmatpush1.bf16.xpose.msra.mxu0 0
        %2688 = vmatprep.subr.bf16.mxu0 0
        %2689 = vmatpush1.bf16.xpose.msra.mxu0 0
        %2690 = vmatprep.subr.bf16.mxu0 0
        %2691 = vmatpush1.bf16.xpose.msra.mxu0 0
        %2692 = vmatprep.subr.bf16.mxu0 0
        %2693 = vmatpush1.bf16.xpose.msra.mxu0 0
        %2694 = vmatprep.mubr.bf16.mxu0 0
        %2695 = vmatmul.mubr.bf16.gmra.mrb[0].mxu0 %v2657
        %v2696 = vpop.f32.mrb[0].mxu0
        %v2697 = vadd.f32 0.0, %v2696
        %v2698 = vpop.f32.mrb[0].mxu0
        %v2699 = vpop.f32.mrb[0].mxu0
        %v2700 = vpop.f32.mrb[0].mxu0
        %2701 = vdwg.mxu0
        %2702 = vxpose.xlu0.b32.start [1/16] %v2559, 128
        %2703 = vxpose.xlu0.b32.cont [2/16] 0.0, 128
        %2704 = vxpose.xlu0.b32.cont [3/16] 0.0, 128
        %2705 = vxpose.xlu0.b32.cont [4/16] 0.0, 128
        %2706 = vxpose.xlu0.b32.cont [5/16] 0.0, 128
        %2707 = vxpose.xlu0.b32.cont [6/16] 0.0, 128
        %2708 = vxpose.xlu0.b32.cont [7/16] 0.0, 128
        %2709 = vxpose.xlu0.b32.cont [8/16] 0.0, 128
        %2710 = vxpose.xlu0.b32.cont [9/16] 0.0, 128
        %2711 = vxpose.xlu0.b32.cont [10/16] 0.0, 128
        %2712 = vxpose.xlu0.b32.cont [11/16] 0.0, 128
        %2713 = vxpose.xlu0.b32.cont [12/16] 0.0, 128
        %2714 = vxpose.xlu0.b32.cont [13/16] 0.0, 128
        %2715 = vxpose.xlu0.b32.cont [14/16] 0.0, 128
        %2716 = vxpose.xlu0.b32.cont [15/16] 0.0, 128
        %2717 = vxpose.xlu0.b32.end [16/16] 0.0, 128
        %v2718 = vpop.trf.xlu0
        %v2719 = vpop.trf.xlu0
        %v2720 = vpop.trf.xlu0
        %v2721 = vpop.trf.xlu0
        %v2722 = vpop.trf.xlu0
        %v2723 = vpop.trf.xlu0
        %v2724 = vpop.trf.xlu0
        %v2725 = vpop.trf.xlu0
        %v2726 = vpop.trf.xlu0
        %v2727 = vpop.trf.xlu0
        %v2728 = vpop.trf.xlu0
        %v2729 = vpop.trf.xlu0
        %v2730 = vpop.trf.xlu0
        %v2731 = vpop.trf.xlu0
        %v2732 = vpop.trf.xlu0
        %v2733 = vpop.trf.xlu0
        %2734 = vxpose.xlu0.b32.start [1/16] %v2605, 128
        %2735 = vxpose.xlu0.b32.cont [2/16] 0.0, 128
        %2736 = vxpose.xlu0.b32.cont [3/16] 0.0, 128
        %2737 = vxpose.xlu0.b32.cont [4/16] 0.0, 128
        %2738 = vxpose.xlu0.b32.cont [5/16] 0.0, 128
        %2739 = vxpose.xlu0.b32.cont [6/16] 0.0, 128
        %2740 = vxpose.xlu0.b32.cont [7/16] 0.0, 128
        %2741 = vxpose.xlu0.b32.cont [8/16] 0.0, 128
        %2742 = vxpose.xlu0.b32.cont [9/16] 0.0, 128
        %2743 = vxpose.xlu0.b32.cont [10/16] 0.0, 128
        %2744 = vxpose.xlu0.b32.cont [11/16] 0.0, 128
        %2745 = vxpose.xlu0.b32.cont [12/16] 0.0, 128
        %2746 = vxpose.xlu0.b32.cont [13/16] 0.0, 128
        %2747 = vxpose.xlu0.b32.cont [14/16] 0.0, 128
        %2748 = vxpose.xlu0.b32.cont [15/16] 0.0, 128
        %2749 = vxpose.xlu0.b32.end [16/16] 0.0, 128
        %v2750 = vpop.trf.xlu0
        %v2751 = vpop.trf.xlu0
        %v2752 = vpop.trf.xlu0
        %v2753 = vpop.trf.xlu0
        %v2754 = vpop.trf.xlu0
        %v2755 = vpop.trf.xlu0
        %v2756 = vpop.trf.xlu0
        %v2757 = vpop.trf.xlu0
        %v2758 = vpop.trf.xlu0
        %v2759 = vpop.trf.xlu0
        %v2760 = vpop.trf.xlu0
        %v2761 = vpop.trf.xlu0
        %v2762 = vpop.trf.xlu0
        %v2763 = vpop.trf.xlu0
        %v2764 = vpop.trf.xlu0
        %v2765 = vpop.trf.xlu0
        %2766 = vxpose.xlu0.b32.start [1/16] %v2651, 128
        %2767 = vxpose.xlu0.b32.cont [2/16] 0.0, 128
        %2768 = vxpose.xlu0.b32.cont [3/16] 0.0, 128
        %2769 = vxpose.xlu0.b32.cont [4/16] 0.0, 128
        %2770 = vxpose.xlu0.b32.cont [5/16] 0.0, 128
        %2771 = vxpose.xlu0.b32.cont [6/16] 0.0, 128
        %2772 = vxpose.xlu0.b32.cont [7/16] 0.0, 128
        %2773 = vxpose.xlu0.b32.cont [8/16] 0.0, 128
        %2774 = vxpose.xlu0.b32.cont [9/16] 0.0, 128
        %2775 = vxpose.xlu0.b32.cont [10/16] 0.0, 128
        %2776 = vxpose.xlu0.b32.cont [11/16] 0.0, 128
        %2777 = vxpose.xlu0.b32.cont [12/16] 0.0, 128
        %2778 = vxpose.xlu0.b32.cont [13/16] 0.0, 128
        %2779 = vxpose.xlu0.b32.cont [14/16] 0.0, 128
        %2780 = vxpose.xlu0.b32.cont [15/16] 0.0, 128
        %2781 = vxpose.xlu0.b32.end [16/16] 0.0, 128
        %v2782 = vpop.trf.xlu0
        %v2783 = vpop.trf.xlu0
        %v2784 = vpop.trf.xlu0
        %v2785 = vpop.trf.xlu0
        %v2786 = vpop.trf.xlu0
        %v2787 = vpop.trf.xlu0
        %v2788 = vpop.trf.xlu0
        %v2789 = vpop.trf.xlu0
        %v2790 = vpop.trf.xlu0
        %v2791 = vpop.trf.xlu0
        %v2792 = vpop.trf.xlu0
        %v2793 = vpop.trf.xlu0
        %v2794 = vpop.trf.xlu0
        %v2795 = vpop.trf.xlu0
        %v2796 = vpop.trf.xlu0
        %v2797 = vpop.trf.xlu0
        %2798 = vxpose.xlu0.b32.start [1/16] %v2697, 128
        %2799 = vxpose.xlu0.b32.cont [2/16] 0.0, 128
        %2800 = vxpose.xlu0.b32.cont [3/16] 0.0, 128
        %2801 = vxpose.xlu0.b32.cont [4/16] 0.0, 128
        %2802 = vxpose.xlu0.b32.cont [5/16] 0.0, 128
        %2803 = vxpose.xlu0.b32.cont [6/16] 0.0, 128
        %2804 = vxpose.xlu0.b32.cont [7/16] 0.0, 128
        %2805 = vxpose.xlu0.b32.cont [8/16] 0.0, 128
        %2806 = vxpose.xlu0.b32.cont [9/16] 0.0, 128
        %2807 = vxpose.xlu0.b32.cont [10/16] 0.0, 128
        %2808 = vxpose.xlu0.b32.cont [11/16] 0.0, 128
        %2809 = vxpose.xlu0.b32.cont [12/16] 0.0, 128
        %2810 = vxpose.xlu0.b32.cont [13/16] 0.0, 128
        %2811 = vxpose.xlu0.b32.cont [14/16] 0.0, 128
        %2812 = vxpose.xlu0.b32.cont [15/16] 0.0, 128
        %2813 = vxpose.xlu0.b32.end [16/16] 0.0, 128
        %v2814 = vpop.trf.xlu0
        %v2815 = vpop.trf.xlu0
        %v2816 = vpop.trf.xlu0
        %v2817 = vpop.trf.xlu0
        %v2818 = vpop.trf.xlu0
        %v2819 = vpop.trf.xlu0
        %v2820 = vpop.trf.xlu0
        %v2821 = vpop.trf.xlu0
        %v2822 = vpop.trf.xlu0
        %v2823 = vpop.trf.xlu0
        %v2824 = vpop.trf.xlu0
        %v2825 = vpop.trf.xlu0
        %v2826 = vpop.trf.xlu0
        %v2827 = vpop.trf.xlu0
        %v2828 = vpop.trf.xlu0
        %v2829 = vpop.trf.xlu0
        %v2830 = vcombine.low %v2718, %v2782
        %v2831 = vcombine.high %v2718, %v2782
        %v2833 = vunpack.c.l.s4 1983009808
        %v2834 = vunpack.c.0.s8 %v2833
        %v2835 = vlaneseq
        %v2836 = vshrl.u32 %v2835, 7
        %v2837 = vsub.s32 %v2834, %v2836
        %v2838 = vrot.slane %v2830, %v2837
        %v2840 = vunpack.c.l.s4 1983009808
        %v2841 = vunpack.c.0.s8 %v2840
        %v2842 = vlaneseq
        %v2843 = vshrl.u32 %v2842, 7
        %v2844 = vsub.s32 %v2841, %v2843
        %v2845 = vrot.slane %v2831, %v2844
        %v2846 = vcombine.low %v2750, %v2814
        %v2847 = vcombine.high %v2750, %v2814
        %v2849 = vunpack.c.l.s4 1983009808
        %v2850 = vunpack.c.0.s8 %v2849
        %v2851 = vlaneseq
        %v2852 = vshrl.u32 %v2851, 7
        %v2853 = vsub.s32 %v2850, %v2852
        %v2854 = vrot.slane %v2846, %v2853
        %v2856 = vunpack.c.l.s4 1983009808
        %v2857 = vunpack.c.0.s8 %v2856
        %v2858 = vlaneseq
        %v2859 = vshrl.u32 %v2858, 7
        %v2860 = vsub.s32 %v2857, %v2859
        %v2861 = vrot.slane %v2847, %v2860
        %v2862 = vcombine.low %v2838, %v2854
        %v2863 = vcombine.high %v2838, %v2854
        %v2865 = vunpack.c.l.s4 1934713408
        %v2866 = vunpack.c.0.s8 %v2865
        %v2867 = vlaneseq
        %v2868 = vshrl.u32 %v2867, 7
        %v2869 = vsub.s32 %v2866, %v2868
        %v2870 = vrot.slane %v2862, %v2869
        %v2872 = vunpack.c.l.s4 1934713408
        %v2873 = vunpack.c.0.s8 %v2872
        %v2874 = vlaneseq
        %v2875 = vshrl.u32 %v2874, 7
        %v2876 = vsub.s32 %v2873, %v2875
        %v2877 = vrot.slane %v2863, %v2876
        %v2878 = vcombine.low %v2845, %v2861
        %v2879 = vcombine.high %v2845, %v2861
        %v2881 = vunpack.c.l.s4 1934713408
        %v2882 = vunpack.c.0.s8 %v2881
        %v2883 = vlaneseq
        %v2884 = vshrl.u32 %v2883, 7
        %v2885 = vsub.s32 %v2882, %v2884
        %v2886 = vrot.slane %v2878, %v2885
        %v2888 = vunpack.c.l.s4 1934713408
        %v2889 = vunpack.c.0.s8 %v2888
        %v2890 = vlaneseq
        %v2891 = vshrl.u32 %v2890, 7
        %v2892 = vsub.s32 %v2889, %v2891
        %v2893 = vrot.slane %v2879, %v2892
        %v2894 = vcombine.high %v2870, 0.0
        %v2895 = vcombine.high %v2877, 0.0
        %v2896 = vcombine.high %v2886, 0.0
        %v2897 = vcombine.high %v2893, 0.0
        %v2898 = vcombine.low %v2870, %v2877
        %v2900 = vunpack.c.l.s4 1983009808
        %v2901 = vunpack.c.0.s8 %v2900
        %v2902 = vlaneseq
        %v2903 = vshrl.u32 %v2902, 7
        %v2904 = vsub.s32 %v2901, %v2903
        %v2905 = vrot.slane %v2898, %v2904
        %v2906 = vcombine.low %v2894, %v2895
        %v2908 = vunpack.c.l.s4 1983009808
        %v2909 = vunpack.c.0.s8 %v2908
        %v2910 = vlaneseq
        %v2911 = vshrl.u32 %v2910, 7
        %v2912 = vsub.s32 %v2909, %v2911
        %v2913 = vrot.slane %v2906, %v2912
        %v2914 = vcombine.low %v2886, %v2893
        %v2916 = vunpack.c.l.s4 1983009808
        %v2917 = vunpack.c.0.s8 %v2916
        %v2918 = vlaneseq
        %v2919 = vshrl.u32 %v2918, 7
        %v2920 = vsub.s32 %v2917, %v2919
        %v2921 = vrot.slane %v2914, %v2920
        %v2922 = vcombine.low %v2896, %v2897
        %v2924 = vunpack.c.l.s4 1983009808
        %v2925 = vunpack.c.0.s8 %v2924
        %v2926 = vlaneseq
        %v2927 = vshrl.u32 %v2926, 7
        %v2928 = vsub.s32 %v2925, %v2927
        %v2929 = vrot.slane %v2922, %v2928
        %v2930 = vcombine.low %v2905, %v2913
        %v2931 = vcombine.high %v2905, %v2913
        %v2933 = vunpack.c.l.s4 1934713408
        %v2934 = vunpack.c.0.s8 %v2933
        %v2935 = vlaneseq
        %v2936 = vshrl.u32 %v2935, 7
        %v2937 = vsub.s32 %v2934, %v2936
        %v2938 = vrot.slane %v2930, %v2937
        %v2940 = vunpack.c.l.s4 1934713408
        %v2941 = vunpack.c.0.s8 %v2940
        %v2942 = vlaneseq
        %v2943 = vshrl.u32 %v2942, 7
        %v2944 = vsub.s32 %v2941, %v2943
        %v2945 = vrot.slane %v2931, %v2944
        %v2946 = vcombine.low %v2921, %v2929
        %v2947 = vcombine.high %v2921, %v2929
        %v2949 = vunpack.c.l.s4 1934713408
        %v2950 = vunpack.c.0.s8 %v2949
        %v2951 = vlaneseq
        %v2952 = vshrl.u32 %v2951, 7
        %v2953 = vsub.s32 %v2950, %v2952
        %v2954 = vrot.slane %v2946, %v2953
        %v2956 = vunpack.c.l.s4 1934713408
        %v2957 = vunpack.c.0.s8 %v2956
        %v2958 = vlaneseq
        %v2959 = vshrl.u32 %v2958, 7
        %v2960 = vsub.s32 %v2957, %v2959
        %v2961 = vrot.slane %v2947, %v2960
        %v2962 = vcombine.low %v2938, %v2954
        %v2963 = vcombine.high %v2938, %v2954
        %v2964 = vcombine.low %v2945, %v2961
        %v2965 = vcombine.high %v2945, %v2961
        %2967 = vrot.lane.b32.xlu0 %v2963, 8
        %v2968 = vpop.permute.xlu0 %2967
        %2971 = vrot.lane.b32.xlu0 %v2964, 16
        %v2972 = vpop.permute.xlu0 %2971
        %2975 = vrot.lane.b32.xlu0 %v2965, 24
        %v2976 = vpop.permute.xlu0 %2975
        %v2978 = vsel %vm1866, %v2962, %v2968
        %vm2979 = vcmask 130048
        %v2980 = vsel %vm2979, %v2978, %v2972
        %vm2981 = vcmask 195584
        %v2982 = vsel %vm2981, %v2980, %v2976
        %v2983 = vpack.c.bf16 %v2982, %v2982
        %v2984 = vld [vmem:[%s882] sm:$0xf]
        %v2985 = vld [vmem:[%s882 + $0x4] sm:$0xf]
        %v2986 = vld [vmem:[%s882 + $0x8] sm:$0xf]
        %v2987 = vld [vmem:[%s882 + $0xc] sm:$0xf]
        %v2988 = vld [vmem:[%s736] sm:$0x1]
        %v2990 = vlaneseq
        %v2991 = vshrl.u32 %v2990, 7
        %v2992 = vsub.s32 0, %v2991
        %v2993 = vrot.slane %v2988, %v2992
        %v2999 = vunpack.c.l.b16 %v2984
        %v3000 = vunpack.c.l.b16 %v2985
        %v3001 = vunpack.c.l.b16 %v2986
        %v3002 = vunpack.c.l.b16 %v2987
        %v3003 = vpack.c.b16 %v3000, %v2999
        %v3004 = vpack.c.b16 %v3002, %v3001
        %v3008 = vsel %vm909, %v2983, 0
        %3010 = vmatprep.subr.bf16.mxu0 0
        %3011 = vmatpush1.bf16.msra.mxu0 %v3003
        %3012 = vmatprep.subr.bf16.mxu0 0
        %3013 = vmatpush1.bf16.msra.mxu0 %v3004
        %3014 = vmatprep.subr.bf16.mxu0 0
        %3015 = vmatpush1.bf16.msra.mxu0 0
        %3016 = vmatprep.subr.bf16.mxu0 0
        %3017 = vmatpush1.bf16.msra.mxu0 0
        %3018 = vmatprep.subr.bf16.mxu0 0
        %3019 = vmatpush1.bf16.msra.mxu0 0
        %3020 = vmatprep.subr.bf16.mxu0 0
        %3021 = vmatpush1.bf16.msra.mxu0 0
        %3022 = vmatprep.subr.bf16.mxu0 0
        %3023 = vmatpush1.bf16.msra.mxu0 0
        %3024 = vmatprep.subr.bf16.mxu0 0
        %3025 = vmatpush1.bf16.msra.mxu0 0
        %3026 = vmatprep.subr.bf16.mxu0 0
        %3027 = vmatpush1.bf16.msra.mxu0 0
        %3028 = vmatprep.subr.bf16.mxu0 0
        %3029 = vmatpush1.bf16.msra.mxu0 0
        %3030 = vmatprep.subr.bf16.mxu0 0
        %3031 = vmatpush1.bf16.msra.mxu0 0
        %3032 = vmatprep.subr.bf16.mxu0 0
        %3033 = vmatpush1.bf16.msra.mxu0 0
        %3034 = vmatprep.subr.bf16.mxu0 0
        %3035 = vmatpush1.bf16.msra.mxu0 0
        %3036 = vmatprep.subr.bf16.mxu0 0
        %3037 = vmatpush1.bf16.msra.mxu0 0
        %3038 = vmatprep.subr.bf16.mxu0 0
        %3039 = vmatpush1.bf16.msra.mxu0 0
        %3040 = vmatprep.subr.bf16.mxu0 0
        %3041 = vmatpush1.bf16.msra.mxu0 0
        %3042 = vmatprep.mubr.bf16.mxu0 0
        %3043 = vmatmul.mubr.bf16.gmra.mrb[0].mxu0 %v3008
        %v3044 = vpop.f32.mrb[0].mxu0
        %v3045 = vadd.f32 %v2993, %v3044
        %v3046 = vpop.f32.mrb[0].mxu0
        %v3047 = vpop.f32.mrb[0].mxu0
        %v3048 = vpop.f32.mrb[0].mxu0
        %3049 = vdwg.mxu0
        %v3050 = vadd.f32 %v906, %v3045
        %v3051 = vld [vmem:[%s744] sm:$0x1]
        %v3052 = vld [vmem:[%s752] sm:$0x1]
        %v3053 = vsel %vm909, %v3050, 0.0
        %3054 = vadd.xlane.f32.xlu0 %v3053
        %v3055 = vpop.xlane.xlu0 %3054
        %v3056 = vmul.f32 %v3055, %v913
        %v3057 = vsub.f32 %v3050, %v3056
        %v3058 = vmul.f32 %v3057, %v3057
        %v3059 = vsel %vm909, %v3058, 0.0
        %3060 = vadd.xlane.f32.xlu0 %v3059
        %v3061 = vpop.xlane.xlu0 %3060
        %v3062 = vmul.f32 %v3061, %v913
        %v3063 = vadd.f32 %v3062, 1e-05
        %v3064 = vrsqrt.pop %v3063
        %v3065 = vmul.f32 %v3057, %v3064
        %v3067 = vlaneseq
        %v3068 = vshrl.u32 %v3067, 7
        %v3069 = vsub.s32 0, %v3068
        %v3070 = vrot.slane %v3051, %v3069
        %v3072 = vmul.f32 %v3065, %v3070
        %v3074 = vlaneseq
        %v3075 = vshrl.u32 %v3074, 7
        %v3076 = vsub.s32 0, %v3075
        %v3077 = vrot.slane %v3052, %v3076
        %v3079 = vadd.f32 %v3072, %v3077
        %v3080 = vpack.c.bf16 %v3079, %v3079
        %v3081 = vld [vmem:[%s887] sm:$0xf]
        %v3082 = vld [vmem:[%s887 + $0x4] sm:$0xf]
        %v3083 = vld [vmem:[%s887 + $0x8] sm:$0xf]
        %v3084 = vld [vmem:[%s887 + $0xc] sm:$0xf]
        %v3085 = vld [vmem:[%s760] sm:$0x1]
        %v3087 = vlaneseq
        %v3088 = vshrl.u32 %v3087, 7
        %v3089 = vsub.s32 0, %v3088
        %v3090 = vrot.slane %v3085, %v3089
        %v3096 = vunpack.c.l.b16 %v3081
        %v3097 = vunpack.c.l.b16 %v3082
        %v3098 = vunpack.c.l.b16 %v3083
        %v3099 = vunpack.c.l.b16 %v3084
        %v3100 = vpack.c.b16 %v3097, %v3096
        %v3101 = vpack.c.b16 %v3099, %v3098
        %v3105 = vsel %vm909, %v3080, 0
        %3107 = vmatprep.subr.bf16.mxu0 0
        %3108 = vmatpush1.bf16.msra.mxu0 %v3100
        %3109 = vmatprep.subr.bf16.mxu0 0
        %3110 = vmatpush1.bf16.msra.mxu0 %v3101
        %3111 = vmatprep.subr.bf16.mxu0 0
        %3112 = vmatpush1.bf16.msra.mxu0 0
        %3113 = vmatprep.subr.bf16.mxu0 0
        %3114 = vmatpush1.bf16.msra.mxu0 0
        %3115 = vmatprep.subr.bf16.mxu0 0
        %3116 = vmatpush1.bf16.msra.mxu0 0
        %3117 = vmatprep.subr.bf16.mxu0 0
        %3118 = vmatpush1.bf16.msra.mxu0 0
        %3119 = vmatprep.subr.bf16.mxu0 0
        %3120 = vmatpush1.bf16.msra.mxu0 0
        %3121 = vmatprep.subr.bf16.mxu0 0
        %3122 = vmatpush1.bf16.msra.mxu0 0
        %3123 = vmatprep.subr.bf16.mxu0 0
        %3124 = vmatpush1.bf16.msra.mxu0 0
        %3125 = vmatprep.subr.bf16.mxu0 0
        %3126 = vmatpush1.bf16.msra.mxu0 0
        %3127 = vmatprep.subr.bf16.mxu0 0
        %3128 = vmatpush1.bf16.msra.mxu0 0
        %3129 = vmatprep.subr.bf16.mxu0 0
        %3130 = vmatpush1.bf16.msra.mxu0 0
        %3131 = vmatprep.subr.bf16.mxu0 0
        %3132 = vmatpush1.bf16.msra.mxu0 0
        %3133 = vmatprep.subr.bf16.mxu0 0
        %3134 = vmatpush1.bf16.msra.mxu0 0
        %3135 = vmatprep.subr.bf16.mxu0 0
        %3136 = vmatpush1.bf16.msra.mxu0 0
        %3137 = vmatprep.subr.bf16.mxu0 0
        %3138 = vmatpush1.bf16.msra.mxu0 0
        %3139 = vmatprep.mubr.bf16.mxu0 0
        %3140 = vmatmul.mubr.bf16.gmra.mrb[0].mxu0 %v3105
        %v3141 = vpop.f32.mrb[0].mxu0
        %v3142 = vadd.f32 %v3090, %v3141
        %v3143 = vpop.f32.mrb[0].mxu0
        %v3144 = vpop.f32.mrb[0].mxu0
        %v3145 = vpop.f32.mrb[0].mxu0
        %3146 = vdwg.mxu0
        %v3147 = vmul.f32 %v3142, 1.702
        %v3148 = vxor.u32 %v3147, 2147483648
        %v3149 = vmul.f32 %v3148, 1.442695
        %v3150 = vpow.pop %v3149
        %v3151 = vadd.f32 %v3150, 1.0
        %v3152 = vrcp.pop %v3151
        %v3153 = vmul.f32 1.0, %v3152
        %v3154 = vmul.f32 %v3142, %v3153
        %v3155 = vpack.c.bf16 %v3154, %v3154
        %v3156 = vld [vmem:[%s892] sm:$0xf]
        %v3157 = vld [vmem:[%s892 + $0x4] sm:$0xf]
        %v3158 = vld [vmem:[%s892 + $0x8] sm:$0xf]
        %v3159 = vld [vmem:[%s892 + $0xc] sm:$0xf]
        %v3160 = vld [vmem:[%s892 + $0x10] sm:$0xf]
        %v3161 = vld [vmem:[%s892 + $0x14] sm:$0xf]
        %v3162 = vld [vmem:[%s892 + $0x18] sm:$0xf]
        %v3163 = vld [vmem:[%s892 + $0x1c] sm:$0xf]
        %v3164 = vld [vmem:[%s892 + $0x20] sm:$0xf]
        %v3165 = vld [vmem:[%s892 + $0x24] sm:$0xf]
        %v3166 = vld [vmem:[%s892 + $0x28] sm:$0xf]
        %v3167 = vld [vmem:[%s892 + $0x2c] sm:$0xf]
        %v3168 = vld [vmem:[%s892 + $0x30] sm:$0xf]
        %v3169 = vld [vmem:[%s892 + $0x34] sm:$0xf]
        %v3170 = vld [vmem:[%s892 + $0x38] sm:$0xf]
        %v3171 = vld [vmem:[%s892 + $0x3c] sm:$0xf]
        %v3172 = vld [vmem:[%s895] sm:$0x1]
        %v3174 = vlaneseq
        %v3175 = vshrl.u32 %v3174, 7
        %v3176 = vsub.s32 0, %v3175
        %v3177 = vrot.slane %v3172, %v3176
        %v3195 = vunpack.c.l.b16 %v3156
        %v3196 = vunpack.c.l.b16 %v3157
        %v3197 = vunpack.c.l.b16 %v3158
        %v3198 = vunpack.c.l.b16 %v3159
        %v3199 = vunpack.c.l.b16 %v3160
        %v3200 = vunpack.c.l.b16 %v3161
        %v3201 = vunpack.c.l.b16 %v3162
        %v3202 = vunpack.c.l.b16 %v3163
        %v3203 = vunpack.c.l.b16 %v3164
        %v3204 = vunpack.c.l.b16 %v3165
        %v3205 = vunpack.c.l.b16 %v3166
        %v3206 = vunpack.c.l.b16 %v3167
        %v3207 = vunpack.c.l.b16 %v3168
        %v3208 = vunpack.c.l.b16 %v3169
        %v3209 = vunpack.c.l.b16 %v3170
        %v3210 = vunpack.c.l.b16 %v3171
        %v3211 = vpack.c.b16 %v3196, %v3195
        %v3212 = vpack.c.b16 %v3198, %v3197
        %v3213 = vpack.c.b16 %v3200, %v3199
        %v3214 = vpack.c.b16 %v3202, %v3201
        %v3215 = vpack.c.b16 %v3204, %v3203
        %v3216 = vpack.c.b16 %v3206, %v3205
        %v3217 = vpack.c.b16 %v3208, %v3207
        %v3218 = vpack.c.b16 %v3210, %v3209
        %3227 = vmatprep.subr.bf16.mxu0 0
        %3228 = vmatpush1.bf16.msra.mxu0 %v3211
        %3229 = vmatprep.subr.bf16.mxu0 0
        %3230 = vmatpush1.bf16.msra.mxu0 %v3212
        %3231 = vmatprep.subr.bf16.mxu0 0
        %3232 = vmatpush1.bf16.msra.mxu0 %v3213
        %3233 = vmatprep.subr.bf16.mxu0 0
        %3234 = vmatpush1.bf16.msra.mxu0 %v3214
        %3235 = vmatprep.subr.bf16.mxu0 0
        %3236 = vmatpush1.bf16.msra.mxu0 %v3215
        %3237 = vmatprep.subr.bf16.mxu0 0
        %3238 = vmatpush1.bf16.msra.mxu0 %v3216
        %3239 = vmatprep.subr.bf16.mxu0 0
        %3240 = vmatpush1.bf16.msra.mxu0 %v3217
        %3241 = vmatprep.subr.bf16.mxu0 0
        %3242 = vmatpush1.bf16.msra.mxu0 %v3218
        %3243 = vmatprep.subr.bf16.mxu0 0
        %3244 = vmatpush1.bf16.msra.mxu0 0
        %3245 = vmatprep.subr.bf16.mxu0 0
        %3246 = vmatpush1.bf16.msra.mxu0 0
        %3247 = vmatprep.subr.bf16.mxu0 0
        %3248 = vmatpush1.bf16.msra.mxu0 0
        %3249 = vmatprep.subr.bf16.mxu0 0
        %3250 = vmatpush1.bf16.msra.mxu0 0
        %3251 = vmatprep.subr.bf16.mxu0 0
        %3252 = vmatpush1.bf16.msra.mxu0 0
        %3253 = vmatprep.subr.bf16.mxu0 0
        %3254 = vmatpush1.bf16.msra.mxu0 0
        %3255 = vmatprep.subr.bf16.mxu0 0
        %3256 = vmatpush1.bf16.msra.mxu0 0
        %3257 = vmatprep.subr.bf16.mxu0 0
        %3258 = vmatpush1.bf16.msra.mxu0 0
        %3259 = vmatprep.mubr.bf16.mxu0 0
        %3260 = vmatmul.mubr.bf16.gmra.mrb[0].mxu0 %v3155
        %v3261 = vpop.f32.mrb[0].mxu0
        %v3262 = vadd.f32 %v3177, %v3261
        %v3263 = vpop.f32.mrb[0].mxu0
        %v3264 = vpop.f32.mrb[0].mxu0
        %v3265 = vpop.f32.mrb[0].mxu0
        %3266 = vdwg.mxu0
        %v3267 = vadd.f32 %v3050, %v3262
        %3268 = vst.msk [vmem:[#allocation2] sm:$0xff] %vm909, %v3267
        %p3269 = scmp.eq.s32.totalorder %s46, 1
        // Predicated region
        $region125: #{tpu_custom_call.1} parent=91 // pred_check
          %p3270 = pneg %p3269
        $region126: #{tpu_custom_call.1} parent=91 // pred_check_branch
          %3272 = sbr.rel (%p3270) target = $region128
        $region127: #{tpu_custom_call.1} parent=91 // pred_region
          %v3273 = vld [vmem:[%s16] sm:$0x1]
          %v3274 = vld [vmem:[%s17] sm:$0x1]
          %v3275 = vsel %vm909, %v3267, 0.0
          %3276 = vadd.xlane.f32.xlu0 %v3275
          %v3277 = vpop.xlane.xlu0 %3276
          %v3278 = vmul.f32 %v3277, %v913
          %v3279 = vsub.f32 %v3267, %v3278
          %v3280 = vmul.f32 %v3279, %v3279
          %v3281 = vsel %vm909, %v3280, 0.0
          %3282 = vadd.xlane.f32.xlu0 %v3281
          %v3283 = vpop.xlane.xlu0 %3282
          %v3284 = vmul.f32 %v3283, %v913
          %v3285 = vadd.f32 %v3284, 1e-05
          %v3286 = vrsqrt.pop %v3285
          %v3287 = vmul.f32 %v3279, %v3286
          %v3289 = vlaneseq
          %v3290 = vshrl.u32 %v3289, 7
          %v3291 = vsub.s32 0, %v3290
          %v3292 = vrot.slane %v3273, %v3291
          %v3294 = vmul.f32 %v3287, %v3292
          %v3296 = vlaneseq
          %v3297 = vshrl.u32 %v3296, 7
          %v3298 = vsub.s32 0, %v3297
          %v3299 = vrot.slane %v3274, %v3298
          %v3301 = vadd.f32 %v3294, %v3299
          %v3302 = vlaneseq
          %v3303 = vand.u32 %v3302, 127
          %s3304 = sld [smem:[#allocation4 + %s45]]
          %v3305 = vstv %s3304
          %vm3306 = vcmp.eq.s32.totalorder %v3303, %v3305
          %v3307 = vsel %vm3306, 1, 0
          %v3308 = vcvt.s32.f32 %v3307
          %v3310 = vsel %vm1866, %v3308, 0
          %3312 = vmatprep.subr.mxu0 0.0
          %3313 = vmatpush1.msra.mxu0 %v3301
          %3314 = vmatprep.subr.mxu0 0.0
          %3315 = vmatpush1.msra.mxu0 0.0
          %3316 = vmatprep.subr.mxu0 0.0
          %3317 = vmatpush1.msra.mxu0 0.0
          %3318 = vmatprep.subr.mxu0 0.0
          %3319 = vmatpush1.msra.mxu0 0.0
          %3320 = vmatprep.subr.mxu0 0.0
          %3321 = vmatpush1.msra.mxu0 0.0
          %3322 = vmatprep.subr.mxu0 0.0
          %3323 = vmatpush1.msra.mxu0 0.0
          %3324 = vmatprep.subr.mxu0 0.0
          %3325 = vmatpush1.msra.mxu0 0.0
          %3326 = vmatprep.subr.mxu0 0.0
          %3327 = vmatpush1.msra.mxu0 0.0
          %3328 = vmatprep.subr.mxu0 0.0
          %3329 = vmatpush1.msra.mxu0 0.0
          %3330 = vmatprep.subr.mxu0 0.0
          %3331 = vmatpush1.msra.mxu0 0.0
          %3332 = vmatprep.subr.mxu0 0.0
          %3333 = vmatpush1.msra.mxu0 0.0
          %3334 = vmatprep.subr.mxu0 0.0
          %3335 = vmatpush1.msra.mxu0 0.0
          %3336 = vmatprep.subr.mxu0 0.0
          %3337 = vmatpush1.msra.mxu0 0.0
          %3338 = vmatprep.subr.mxu0 0.0
          %3339 = vmatpush1.msra.mxu0 0.0
          %3340 = vmatprep.subr.mxu0 0.0
          %3341 = vmatpush1.msra.mxu0 0.0
          %3342 = vmatprep.subr.mxu0 0.0
          %3343 = vmatpush1.msra.mxu0 0.0
          %3344 = vmatprep.subr.mxu0 0.0
          %3345 = vmatpush1.msra.mxu0 0.0
          %3346 = vmatprep.subr.mxu0 0.0
          %3347 = vmatpush1.msra.mxu0 0.0
          %3348 = vmatprep.subr.mxu0 0.0
          %3349 = vmatpush1.msra.mxu0 0.0
          %3350 = vmatprep.subr.mxu0 0.0
          %3351 = vmatpush1.msra.mxu0 0.0
          %3352 = vmatprep.subr.mxu0 0.0
          %3353 = vmatpush1.msra.mxu0 0.0
          %3354 = vmatprep.subr.mxu0 0.0
          %3355 = vmatpush1.msra.mxu0 0.0
          %3356 = vmatprep.subr.mxu0 0.0
          %3357 = vmatpush1.msra.mxu0 0.0
          %3358 = vmatprep.subr.mxu0 0.0
          %3359 = vmatpush1.msra.mxu0 0.0
          %3360 = vmatprep.subr.mxu0 0.0
          %3361 = vmatpush1.msra.mxu0 0.0
          %3362 = vmatprep.subr.mxu0 0.0
          %3363 = vmatpush1.msra.mxu0 0.0
          %3364 = vmatprep.subr.mxu0 0.0
          %3365 = vmatpush1.msra.mxu0 0.0
          %3366 = vmatprep.subr.mxu0 0.0
          %3367 = vmatpush1.msra.mxu0 0.0
          %3368 = vmatprep.subr.mxu0 0.0
          %3369 = vmatpush1.msra.mxu0 0.0
          %3370 = vmatprep.subr.mxu0 0.0
          %3371 = vmatpush1.msra.mxu0 0.0
          %3372 = vmatprep.subr.mxu0 0.0
          %3373 = vmatpush1.msra.mxu0 0.0
          %3374 = vmatprep.subr.mxu0 0.0
          %3375 = vmatpush1.msra.mxu0 0.0
          %3376 = vmatprep.mubr.f32.mxu0 0.0
          %3377 = vmatmul.mubr.f32.gmra.mrb[0].mxu0 %v3310
          %v3378 = vpop.f32.mrb[0].mxu0
          %v3379 = vadd.f32 0.0, %v3378
          %v3380 = vpop.f32.mrb[0].mxu0
          %3381 = vdwg.mxu0
          %v3382 = vpack.c.bf16 %v3379, %v3379
          %v3383 = vld [vmem:[%s18] sm:$0xf]
          %v3384 = vld [vmem:[%s18 + $0x4] sm:$0xf]
          %v3385 = vld [vmem:[%s18 + $0x8] sm:$0xf]
          %v3386 = vld [vmem:[%s18 + $0xc] sm:$0xf]
          %v3391 = vunpack.c.l.b16 %v3383
          %v3392 = vunpack.c.l.b16 %v3384
          %v3393 = vunpack.c.l.b16 %v3385
          %v3394 = vunpack.c.l.b16 %v3386
          %v3395 = vpack.c.b16 %v3392, %v3391
          %v3396 = vpack.c.b16 %v3394, %v3393
          %v3400 = vsel %vm909, %v3382, 0
          %3402 = vmatprep.subr.bf16.mxu0 0
          %3403 = vmatpush1.bf16.msra.mxu0 %v3395
          %3404 = vmatprep.subr.bf16.mxu0 0
          %3405 = vmatpush1.bf16.msra.mxu0 %v3396
          %3406 = vmatprep.subr.bf16.mxu0 0
          %3407 = vmatpush1.bf16.msra.mxu0 0
          %3408 = vmatprep.subr.bf16.mxu0 0
          %3409 = vmatpush1.bf16.msra.mxu0 0
          %3410 = vmatprep.subr.bf16.mxu0 0
          %3411 = vmatpush1.bf16.msra.mxu0 0
          %3412 = vmatprep.subr.bf16.mxu0 0
          %3413 = vmatpush1.bf16.msra.mxu0 0
          %3414 = vmatprep.subr.bf16.mxu0 0
          %3415 = vmatpush1.bf16.msra.mxu0 0
          %3416 = vmatprep.subr.bf16.mxu0 0
          %3417 = vmatpush1.bf16.msra.mxu0 0
          %3418 = vmatprep.subr.bf16.mxu0 0
          %3419 = vmatpush1.bf16.msra.mxu0 0
          %3420 = vmatprep.subr.bf16.mxu0 0
          %3421 = vmatpush1.bf16.msra.mxu0 0
          %3422 = vmatprep.subr.bf16.mxu0 0
          %3423 = vmatpush1.bf16.msra.mxu0 0
          %3424 = vmatprep.subr.bf16.mxu0 0
          %3425 = vmatpush1.bf16.msra.mxu0 0
          %3426 = vmatprep.subr.bf16.mxu0 0
          %3427 = vmatpush1.bf16.msra.mxu0 0
          %3428 = vmatprep.subr.bf16.mxu0 0
          %3429 = vmatpush1.bf16.msra.mxu0 0
          %3430 = vmatprep.subr.bf16.mxu0 0
          %3431 = vmatpush1.bf16.msra.mxu0 0
          %3432 = vmatprep.subr.bf16.mxu0 0
          %3433 = vmatpush1.bf16.msra.mxu0 0
          %3434 = vmatprep.mubr.bf16.mxu0 0
          %3435 = vmatmul.mubr.bf16.gmra.mrb[0].mxu0 %v3400
          %v3436 = vpop.f32.mrb[0].mxu0
          %v3437 = vadd.f32 0.0, %v3436
          %v3438 = vpop.f32.mrb[0].mxu0
          %v3439 = vpop.f32.mrb[0].mxu0
          %v3440 = vpop.f32.mrb[0].mxu0
          %3441 = vdwg.mxu0
          %v3442 = vlaneseq
          %v3443 = vshrl.u32 %v3442, 7
          %v3444 = vsub.s32 0, %v3443
          %v3445 = vrot.slane %v3437, %v3444
          %3446 = vst [vmem:[%s861] sm:$0xff] %v3445
        $region128: #{tpu_custom_call.1} parent=91 // pred_fallthru
          _
        %s3447 = sand.u32 %s504, 1
        %s3448 = scalar_lea.sflag [#allocation7], %s3447
        %s3449 = sand.u32 %s504, 1
        %s3450 = smul.addr %s3449, 8
        %s3451 = scalar_lea.vmem [#allocation15], %s3450
        // Predicated region
        $region129: #{tpu_custom_call.1} parent=91 // pred_check
          %p3452 = pneg %p514
        $region130: #{tpu_custom_call.1} parent=91 // pred_check_branch
          %3454 = sbr.rel (%p3452) target = $region132
        $region131: #{tpu_custom_call.1} parent=91 // pred_region
          %s3456 = ssub.s32 128, 128
          %3457 = vsyncadd %s3448, %s3456
          %s3458 = smul.addr %s45, 128
          %s3459 = scalar_lea.hbm %s19, %s3458
          %s3461 = sshll.u32 %s3451, 4
          %s3462 = int_to_ptr.vmem [resolvable:$true] %s3461
          %3464 = dma.vmem_to_hbm [thread:$0]  %s3462, 128, %s3459, %s3448
        $region132: #{tpu_custom_call.1} parent=91 // pred_fallthru
          _
      $region92: #{tpu_custom_call.1} parent=5 // pred_fallthru
        _
      %p3465 = scmp.le.s32.totalorder 2, %s36
      // Predicated region
      $region133: #{tpu_custom_call.1} parent=5 // pred_check
        %p3466 = pneg %p3465
      $region134: #{tpu_custom_call.1} parent=5 // pred_check_branch
        %3468 = sbr.rel (%p3466) target = $region136
      $region135: #{tpu_custom_call.1} parent=5 // pred_region
        %s3469 = ssub.s32 %s36, 2
        // Predicated region
        $region137: #{tpu_custom_call.1} parent=135 // pred_check
          %p3470 = pneg %p520
        $region138: #{tpu_custom_call.1} parent=135 // pred_check_branch
          %3472 = sbr.rel (%p3470) target = $region140
        $region139: #{tpu_custom_call.1} parent=135 // pred_region
          %s3473 = sand.u32 %s505, 1
          %s3474 = scalar_lea.sflag [#allocation7], %s3473
          %s3475 = sand.u32 %s505, 1
          %s3476 = smul.addr %s3475, 8
          %s3477 = scalar_lea.vmem [#allocation15], %s3476
          %3478 = dma.done %s3474, 128
        $region140: #{tpu_custom_call.1} parent=135 // pred_fallthru
          _
      $region136: #{tpu_custom_call.1} parent=5 // pred_fallthru
        _
    $region6: #{tpu_custom_call.1} parent=1 // loop_footer
      %s40 = sadd.s32 1, %s36
    $region7: #{tpu_custom_call.1} parent=1 // loop_footer_branch
      %35 = sbr.rel target = $region3
    $region8: #{tpu_custom_call.1} parent=1 // loop_exit
      _
    %3479 = vsyncpa [#allocation6], 1
    %s3480 = scalar_lea.sflag [#allocation6], 1
    %3481 = vsyncpa %s3480, 1
    %3482 = vsyncpa [#allocation9], 1
    %3483 = vsyncpa [#allocation7], 1
    %s3484 = scalar_lea.sflag [#allocation7], 1
    %3485 = vsyncpa %s3484, 1

</llo_original>
